<compile_context>
chip_gen: v5e
topology: v5e:2x2
jax: 0.10.0
libtpu: 0.0.40
codegen_flags: <defaults>
</compile_context>

<pallas_src>
import functools

import jax
import jax.numpy as jnp
from jax.experimental import pallas as pl
from jax.experimental.pallas import tpu as pltpu


# ----------------------------------------------------------------------------
# Sizing helpers
# ----------------------------------------------------------------------------
def _vmem_budget():
    """(per-step working-set budget, compiler vmem limit), generation aware."""
    cap = 64 * 1024 * 1024  # conservative default = v7x per-TensorCore VMEM
    try:
        info = pltpu.get_tpu_info()
        cap = int(getattr(info, "vmem_capacity_bytes", cap)) or cap
    except Exception:
        pass
    return int(cap * 0.45), int(cap * 0.90)


def _pick_channel_tile(C, ps, H, W, p1, p2, itemsize, use_scratch, budget, batch):
    """Largest channel tile that (a) divides C, (b) keeps the output block lane
    legal (ct*ps*ps % 128 == 0, or ct == C so the block equals the full lane
    dim), and (c) fits the real per-step footprint: 2x input block (double
    buffered) + 2x output block + padded scratch."""
    L1 = ps * ps
    legal = [d for d in range(1, C + 1)
             if C % d == 0 and ((d * L1) % 128 == 0 or d == C)]

    def footprint(d):
        in_blk = d * H * W * itemsize
        out_blk = p1 * p2 * d * L1 * itemsize
        scr = d * (p1 * ps) * (p2 * ps) * itemsize if use_scratch else 0
        return 2 * in_blk + 2 * out_blk + scr

    fitting = [d for d in legal if footprint(d) <= budget]
    ct = fitting[-1] if fitting else legal[0]
    # v7x megacore: both TensorCores only get work if the parallel grid extent
    # is >= 2; shrink ct (best effort) when the batch alone does not provide it.
    if batch * (C // ct) < 2:
        smaller = [d for d in (fitting or legal) if C // d >= 2]
        if smaller:
            ct = smaller[-1]
    return ct


# ----------------------------------------------------------------------------
# Kernel
# ----------------------------------------------------------------------------
def _unfold_kernel(x_ref, o_ref, *scratch, ps, p1, p2, ct, H, W, pads, mode):
    # x_ref : (1, ct, H, W)             raw (unpadded) channels of this tile
    # o_ref : (1, p1*p2, ct*ps*ps)      all flattened patches of this plane
    # scratch (optional): (ct, p1*ps, p2*ps) zero-padded plane in VMEM
    wl, wr, ht, hb = pads
    del wr, hb  # right/bottom pad is pure zero fill / dropped remainder
    L1 = ps * ps
    rows_used, cols_used = p1 * ps, p2 * ps
    use_scratch = len(scratch) > 0

    if use_scratch:
        pad_ref = scratch[0]
        # Build the zero-padded plane once per grid step (== once per plane).
        # Halo-only zeroing: no full-plane memset.
        r0, r1 = min(ht, rows_used), min(ht + H, rows_used)
        c0, c1 = min(wl, cols_used), min(wl + W, cols_used)
        if r1 <= r0 or c1 <= c0:
            pad_ref[...] = jnp.zeros_like(pad_ref)
        else:
            if r0 > 0:
                pad_ref[:, 0:r0, :] = jnp.zeros((ct, r0, cols_used), pad_ref.dtype)
            if r1 < rows_used:
                pad_ref[:, r1:rows_used, :] = jnp.zeros(
                    (ct, rows_used - r1, cols_used), pad_ref.dtype)
            if c0 > 0:
                pad_ref[:, r0:r1, 0:c0] = jnp.zeros((ct, r1 - r0, c0), pad_ref.dtype)
            if c1 < cols_used:
                pad_ref[:, r0:r1, c1:cols_used] = jnp.zeros(
                    (ct, r1 - r0, cols_used - c1), pad_ref.dtype)
            # Interior copy, one channel at a time (bounded transient size).
            # TODO(synk): DMA the raw plane straight into the scratch interior
            # (memory_space=pl.ANY + make_async_copy) to skip this VPU pass.
            for c in range(ct):
                pad_ref[c, r0:r1, c0:c1] = x_ref[0, c, 0:r1 - r0, 0:c1 - c0]

    def read_rows(c, h):
        # (p1, p2*ps) slab = padded rows {t*ps + h, t in [0, p1)} of channel c.
        if use_scratch:
            return pad_ref[c, pl.ds(h, p1, stride=ps), :]
        return x_ref[0, c, pl.ds(h, p1, stride=ps), 0:cols_used]

    def read_patch_piece(c, r, j):
        # (1, ps) piece = padded[c, r, j*ps:(j+1)*ps]
        if use_scratch:
            return pad_ref[c, r:r + 1, j * ps:(j + 1) * ps]
        return x_ref[0, c, r:r + 1, j * ps:(j + 1) * ps]

    # TODO(synk): for bf16/int8 inputs, pltpu.bitcast-pack pairs/quads along w
    # into uint32 before the relayout to halve/quarter lane traffic.
    if mode == "fold":
        # Fast path: per (channel, h) one strided row load + one reshape that
        # puts the patch index (t, j) on sublanes and w on lanes; concat over h
        # gives the (h, w) lane order; one lane-range store per channel.
        for c in range(ct):
            pieces = [read_rows(c, h).reshape(p1 * p2, ps) for h in range(ps)]
            o_ref[0, :, c * L1:(c + 1) * L1] = jnp.concatenate(pieces, axis=-1)
    else:
        # Conservative fallback: small lane slices + concatenation only (op
        # classes guaranteed to lower), but still dense multi-sublane stores.
        for t in range(p1):
            rows = []
            for j in range(p2):
                feats = [read_patch_piece(c, t * ps + h, j)
                         for c in range(ct) for h in range(ps)]
                rows.append(jnp.concatenate(feats, axis=-1))      # (1, ct*L1)
            o_ref[0, t * p2:(t + 1) * p2, :] = jnp.concatenate(rows, axis=0)


# ----------------------------------------------------------------------------
# Wrapper
# ----------------------------------------------------------------------------
def _build_pallas_fn(shape, dtype, ps, padding, mode):
    B, C, H, W = shape
    wl, wr, ht, hb = padding
    Hp, Wp = H + ht + hb, W + wl + wr
    p1, p2 = Hp // ps, Wp // ps            # stride==size unfold drops remainders
    if p1 <= 0 or p2 <= 0:
        raise ValueError("patch size larger than the padded input")
    L1 = ps * ps
    no_pad = (wl == 0 and wr == 0 and ht == 0 and hb == 0)
    itemsize = jnp.dtype(dtype).itemsize

    budget, vmem_limit = _vmem_budget()
    ct = _pick_channel_tile(C, ps, H, W, p1, p2, itemsize, not no_pad, budget, B)

    kern = functools.partial(_unfold_kernel, ps=ps, p1=p1, p2=p2, ct=ct,
                             H=H, W=W, pads=padding, mode=mode)
    scratch = [] if no_pad else [pltpu.VMEM((ct, p1 * ps, p2 * ps), dtype)]

    # TODO(synk): for planes too large for VMEM, add a patch-row grid axis (or
    # a manual HBM->scratch DMA pipeline) instead of whole-plane steps.
    grid_spec = pltpu.PrefetchScalarGridSpec(
        num_scalar_prefetch=0,
        grid=(B, C // ct),
        in_specs=[pl.BlockSpec((1, ct, H, W), lambda b, c: (b, c, 0, 0))],
        out_specs=pl.BlockSpec((1, p1 * p2, ct * L1), lambda b, c: (b, 0, c)),
        scratch_shapes=scratch,
    )
    return pl.pallas_call(
        kern,
        out_shape=jax.ShapeDtypeStruct((B, p1 * p2, C * L1), dtype),
        grid_spec=grid_spec,
        compiler_params=pltpu.CompilerParams(
            dimension_semantics=("parallel", "parallel"),
            vmem_limit_bytes=vmem_limit,
        ),
    )


def unfolder_ref(x, patches_size, padding):
    """Pure-JAX reference mirroring the PyTorch forward, for verification."""
    wl, wr, ht, hb = padding
    ps = patches_size
    xp = jnp.pad(x, ((0, 0), (0, 0), (ht, hb), (wl, wr)))
    B, C, Hp, Wp = xp.shape
    p1, p2 = Hp // ps, Wp // ps
    xp = xp[:, :, : p1 * ps, : p2 * ps]
    patches = xp.reshape(B, C, p1, ps, p2, ps)
    patches = jnp.transpose(patches, (0, 2, 4, 1, 3, 5))  # b p1 p2 c h w
    return patches.reshape(B, p1 * p2, C * ps * ps)


_FN_CACHE = {}


def _select_fn(x, ps, padding, mode):
    if mode != "auto":
        return jax.jit(_build_pallas_fn(x.shape, x.dtype, ps, padding, mode))
    # One-time selection per configuration: try the XLU relayout path, verify
    # it numerically against the XLA reference, and fall back to the
    # conservative kernel on any compile/runtime/accuracy issue.
    try:
        fast = _build_pallas_fn(x.shape, x.dtype, ps, padding, "fold")
        compiled = jax.jit(fast).lower(x).compile()
        out = compiled(x)
        ref = unfolder_ref(x, ps, padding)
        if not bool(jnp.allclose(out, ref, rtol=1e-5, atol=1e-5)):
            raise RuntimeError("fold-mode self check failed")
        return compiled
    except Exception:
        return jax.jit(_build_pallas_fn(x.shape, x.dtype, ps, padding, "slice"))


def unfolder(x, patches_size, padding, mode="auto"):
    """Equivalent of Unfolder(patches_size, padding)(x) for NCHW `x`.

    `padding` follows torch.nn.functional.pad for 4-D NCHW input:
    (w_left, w_right, h_top, h_bottom), non-negative constant zero padding.
    """
    padding = tuple(int(p) for p in padding)
    if min(padding) < 0:
        raise ValueError("negative padding is not supported")
    key = (tuple(x.shape), str(x.dtype), int(patches_size), padding, mode)
    fn = _FN_CACHE.get(key)
    if fn is None:
        fn = _select_fn(x, int(patches_size), padding, mode)
        _FN_CACHE[key] = fn
    return fn(x)


if __name__ == "__main__":
    key = jax.random.PRNGKey(0)
    # B=2, C=4, H=W=16, patches_size=4, padding=(2,2,2,2) -> 20x20 padded,
    # 5x5=25 patches, each flattened to C*ps*ps = 64 features.
    x = jax.random.normal(key, (2, 4, 16, 16), dtype=jnp.float32)
    patches_size = 4
    padding = (2, 2, 2, 2)

    out = unfolder(x, patches_size, padding)
    out = jax.block_until_ready(out)

    ref = unfolder_ref(x, patches_size, padding)
    assert out.shape == (2, 25, 64), out.shape
    assert out.dtype == x.dtype
    assert jnp.allclose(out, ref, rtol=1e-5, atol=1e-5), "mismatch vs reference"

    print("KERNEL_OK")
</pallas_src>

<mosaic_0001>
module attributes {stable_mosaic.version = 11 : i64} {
  func.func @_unfold_kernel(%arg0: i32, %arg1: i32, %arg2: memref<1x4x16x16xf32, #tpu.memory_space<vmem>>, %arg3: memref<1x25x64xf32, #tpu.memory_space<vmem>>, %arg4: memref<4x20x20xf32, #tpu.memory_space<vmem>>) attributes {dimension_semantics = [#tpu.dimension_semantics<parallel>, #tpu.dimension_semantics<parallel>], iteration_bounds = array<i64: 2, 1>, scalar_prefetch = 0 : i64, scratch_operands = 1 : i64, tpu.core_type = #tpu.core_type<tc>, window_params = [{transform_indices = @transform_0, window_bounds = array<i64: 1, 4, 16, 16>}, {transform_indices = @transform_1, window_bounds = array<i64: 1, 25, 64>}]} {
    %cst = arith.constant 0.000000e+00 : f32
    %0 = vector.broadcast %cst : f32 to vector<4x2x20xf32>
    %c0 = arith.constant 0 : index
    %c0_0 = arith.constant 0 : index
    %c0_1 = arith.constant 0 : index
    %1 = vector.load %arg4[%c0, %c0_0, %c0_1] : memref<4x20x20xf32, #tpu.memory_space<vmem>>, vector<4x2x20xf32>
    tpu.vector_store %arg4[%c0, %c0_0, %c0_1], %0 {strides = array<i32>} : memref<4x20x20xf32, #tpu.memory_space<vmem>>, vector<4x2x20xf32>,
    %cst_2 = arith.constant 0.000000e+00 : f32
    %2 = vector.broadcast %cst_2 : f32 to vector<4x2x20xf32>
    %c0_3 = arith.constant 0 : index
    %c18 = arith.constant 18 : index
    %c0_4 = arith.constant 0 : index
    %3 = vector.load %arg4[%c0_3, %c18, %c0_4] : memref<4x20x20xf32, #tpu.memory_space<vmem>>, vector<4x2x20xf32>
    tpu.vector_store %arg4[%c0_3, %c18, %c0_4], %2 {strides = array<i32>} : memref<4x20x20xf32, #tpu.memory_space<vmem>>, vector<4x2x20xf32>,
    %cst_5 = arith.constant 0.000000e+00 : f32
    %4 = vector.broadcast %cst_5 : f32 to vector<4x16x2xf32>
    %c0_6 = arith.constant 0 : index
    %c2 = arith.constant 2 : index
    %c0_7 = arith.constant 0 : index
    %5 = vector.load %arg4[%c0_6, %c2, %c0_7] : memref<4x20x20xf32, #tpu.memory_space<vmem>>, vector<4x16x2xf32>
    tpu.vector_store %arg4[%c0_6, %c2, %c0_7], %4 {strides = array<i32>} : memref<4x20x20xf32, #tpu.memory_space<vmem>>, vector<4x16x2xf32>,
    %cst_8 = arith.constant 0.000000e+00 : f32
    %6 = vector.broadcast %cst_8 : f32 to vector<4x16x2xf32>
    %c0_9 = arith.constant 0 : index
    %c2_10 = arith.constant 2 : index
    %c18_11 = arith.constant 18 : index
    %7 = vector.load %arg4[%c0_9, %c2_10, %c18_11] : memref<4x20x20xf32, #tpu.memory_space<vmem>>, vector<4x16x2xf32>
    tpu.vector_store %arg4[%c0_9, %c2_10, %c18_11], %6 {strides = array<i32>} : memref<4x20x20xf32, #tpu.memory_space<vmem>>, vector<4x16x2xf32>,
    %c0_12 = arith.constant 0 : index
    %c0_13 = arith.constant 0 : index
    %c0_14 = arith.constant 0 : index
    %c0_15 = arith.constant 0 : index
    %8 = vector.load %arg2[%c0_12, %c0_13, %c0_14, %c0_15] : memref<1x4x16x16xf32, #tpu.memory_space<vmem>>, vector<1x1x16x16xf32>
    %9 = vector.shape_cast %8 : vector<1x1x16x16xf32> to vector<16x16xf32>
    %c0_16 = arith.constant 0 : index
    %c2_17 = arith.constant 2 : index
    %c2_18 = arith.constant 2 : index
    %10 = vector.load %arg4[%c0_16, %c2_17, %c2_18] : memref<4x20x20xf32, #tpu.memory_space<vmem>>, vector<1x16x16xf32>
    %11 = vector.shape_cast %10 : vector<1x16x16xf32> to vector<16x16xf32>
    %12 = vector.shape_cast %9 : vector<16x16xf32> to vector<1x16x16xf32>
    tpu.vector_store %arg4[%c0_16, %c2_17, %c2_18], %12 {strides = array<i32>} : memref<4x20x20xf32, #tpu.memory_space<vmem>>, vector<1x16x16xf32>,
    %c0_19 = arith.constant 0 : index
    %c1 = arith.constant 1 : index
    %c0_20 = arith.constant 0 : index
    %c0_21 = arith.constant 0 : index
    %13 = vector.load %arg2[%c0_19, %c1, %c0_20, %c0_21] : memref<1x4x16x16xf32, #tpu.memory_space<vmem>>, vector<1x1x16x16xf32>
    %14 = vector.shape_cast %13 : vector<1x1x16x16xf32> to vector<16x16xf32>
    %c1_22 = arith.constant 1 : index
    %c2_23 = arith.constant 2 : index
    %c2_24 = arith.constant 2 : index
    %15 = vector.load %arg4[%c1_22, %c2_23, %c2_24] : memref<4x20x20xf32, #tpu.memory_space<vmem>>, vector<1x16x16xf32>
    %16 = vector.shape_cast %15 : vector<1x16x16xf32> to vector<16x16xf32>
    %17 = vector.shape_cast %14 : vector<16x16xf32> to vector<1x16x16xf32>
    tpu.vector_store %arg4[%c1_22, %c2_23, %c2_24], %17 {strides = array<i32>} : memref<4x20x20xf32, #tpu.memory_space<vmem>>, vector<1x16x16xf32>,
    %c0_25 = arith.constant 0 : index
    %c2_26 = arith.constant 2 : index
    %c0_27 = arith.constant 0 : index
    %c0_28 = arith.constant 0 : index
    %18 = vector.load %arg2[%c0_25, %c2_26, %c0_27, %c0_28] : memref<1x4x16x16xf32, #tpu.memory_space<vmem>>, vector<1x1x16x16xf32>
    %19 = vector.shape_cast %18 : vector<1x1x16x16xf32> to vector<16x16xf32>
    %c2_29 = arith.constant 2 : index
    %c2_30 = arith.constant 2 : index
    %c2_31 = arith.constant 2 : index
    %20 = vector.load %arg4[%c2_29, %c2_30, %c2_31] : memref<4x20x20xf32, #tpu.memory_space<vmem>>, vector<1x16x16xf32>
    %21 = vector.shape_cast %20 : vector<1x16x16xf32> to vector<16x16xf32>
    %22 = vector.shape_cast %19 : vector<16x16xf32> to vector<1x16x16xf32>
    tpu.vector_store %arg4[%c2_29, %c2_30, %c2_31], %22 {strides = array<i32>} : memref<4x20x20xf32, #tpu.memory_space<vmem>>, vector<1x16x16xf32>,
    %c0_32 = arith.constant 0 : index
    %c3 = arith.constant 3 : index
    %c0_33 = arith.constant 0 : index
    %c0_34 = arith.constant 0 : index
    %23 = vector.load %arg2[%c0_32, %c3, %c0_33, %c0_34] : memref<1x4x16x16xf32, #tpu.memory_space<vmem>>, vector<1x1x16x16xf32>
    %24 = vector.shape_cast %23 : vector<1x1x16x16xf32> to vector<16x16xf32>
    %c3_35 = arith.constant 3 : index
    %c2_36 = arith.constant 2 : index
    %c2_37 = arith.constant 2 : index
    %25 = vector.load %arg4[%c3_35, %c2_36, %c2_37] : memref<4x20x20xf32, #tpu.memory_space<vmem>>, vector<1x16x16xf32>
    %26 = vector.shape_cast %25 : vector<1x16x16xf32> to vector<16x16xf32>
    %27 = vector.shape_cast %24 : vector<16x16xf32> to vector<1x16x16xf32>
    tpu.vector_store %arg4[%c3_35, %c2_36, %c2_37], %27 {strides = array<i32>} : memref<4x20x20xf32, #tpu.memory_space<vmem>>, vector<1x16x16xf32>,
    %c0_38 = arith.constant 0 : index
    %c0_39 = arith.constant 0 : index
    %c0_40 = arith.constant 0 : index
    %28 = vector.load %arg4[%c0_38, %c0_39, %c0_40] : memref<4x20x20xf32, #tpu.memory_space<vmem>>, vector<1x1x4xf32>
    %29 = vector.shape_cast %28 : vector<1x1x4xf32> to vector<1x4xf32>
    %c0_41 = arith.constant 0 : index
    %c1_42 = arith.constant 1 : index
    %c0_43 = arith.constant 0 : index
    %30 = vector.load %arg4[%c0_41, %c1_42, %c0_43] : memref<4x20x20xf32, #tpu.memory_space<vmem>>, vector<1x1x4xf32>
    %31 = vector.shape_cast %30 : vector<1x1x4xf32> to vector<1x4xf32>
    %c0_44 = arith.constant 0 : index
    %c2_45 = arith.constant 2 : index
    %c0_46 = arith.constant 0 : index
    %32 = vector.load %arg4[%c0_44, %c2_45, %c0_46] : memref<4x20x20xf32, #tpu.memory_space<vmem>>, vector<1x1x4xf32>
    %33 = vector.shape_cast %32 : vector<1x1x4xf32> to vector<1x4xf32>
    %c0_47 = arith.constant 0 : index
    %c3_48 = arith.constant 3 : index
    %c0_49 = arith.constant 0 : index
    %34 = vector.load %arg4[%c0_47, %c3_48, %c0_49] : memref<4x20x20xf32, #tpu.memory_space<vmem>>, vector<1x1x4xf32>
    %35 = vector.shape_cast %34 : vector<1x1x4xf32> to vector<1x4xf32>
    %c1_50 = arith.constant 1 : index
    %c0_51 = arith.constant 0 : index
    %c0_52 = arith.constant 0 : index
    %36 = vector.load %arg4[%c1_50, %c0_51, %c0_52] : memref<4x20x20xf32, #tpu.memory_space<vmem>>, vector<1x1x4xf32>
    %37 = vector.shape_cast %36 : vector<1x1x4xf32> to vector<1x4xf32>
    %c1_53 = arith.constant 1 : index
    %c1_54 = arith.constant 1 : index
    %c0_55 = arith.constant 0 : index
    %38 = vector.load %arg4[%c1_53, %c1_54, %c0_55] : memref<4x20x20xf32, #tpu.memory_space<vmem>>, vector<1x1x4xf32>
    %39 = vector.shape_cast %38 : vector<1x1x4xf32> to vector<1x4xf32>
    %c1_56 = arith.constant 1 : index
    %c2_57 = arith.constant 2 : index
    %c0_58 = arith.constant 0 : index
    %40 = vector.load %arg4[%c1_56, %c2_57, %c0_58] : memref<4x20x20xf32, #tpu.memory_space<vmem>>, vector<1x1x4xf32>
    %41 = vector.shape_cast %40 : vector<1x1x4xf32> to vector<1x4xf32>
    %c1_59 = arith.constant 1 : index
    %c3_60 = arith.constant 3 : index
    %c0_61 = arith.constant 0 : index
    %42 = vector.load %arg4[%c1_59, %c3_60, %c0_61] : memref<4x20x20xf32, #tpu.memory_space<vmem>>, vector<1x1x4xf32>
    %43 = vector.shape_cast %42 : vector<1x1x4xf32> to vector<1x4xf32>
    %c2_62 = arith.constant 2 : index
    %c0_63 = arith.constant 0 : index
    %c0_64 = arith.constant 0 : index
    %44 = vector.load %arg4[%c2_62, %c0_63, %c0_64] : memref<4x20x20xf32, #tpu.memory_space<vmem>>, vector<1x1x4xf32>
    %45 = vector.shape_cast %44 : vector<1x1x4xf32> to vector<1x4xf32>
    %c2_65 = arith.constant 2 : index
    %c1_66 = arith.constant 1 : index
    %c0_67 = arith.constant 0 : index
    %46 = vector.load %arg4[%c2_65, %c1_66, %c0_67] : memref<4x20x20xf32, #tpu.memory_space<vmem>>, vector<1x1x4xf32>
    %47 = vector.shape_cast %46 : vector<1x1x4xf32> to vector<1x4xf32>
    %c2_68 = arith.constant 2 : index
    %c2_69 = arith.constant 2 : index
    %c0_70 = arith.constant 0 : index
    %48 = vector.load %arg4[%c2_68, %c2_69, %c0_70] : memref<4x20x20xf32, #tpu.memory_space<vmem>>, vector<1x1x4xf32>
    %49 = vector.shape_cast %48 : vector<1x1x4xf32> to vector<1x4xf32>
    %c2_71 = arith.constant 2 : index
    %c3_72 = arith.constant 3 : index
    %c0_73 = arith.constant 0 : index
    %50 = vector.load %arg4[%c2_71, %c3_72, %c0_73] : memref<4x20x20xf32, #tpu.memory_space<vmem>>, vector<1x1x4xf32>
    %51 = vector.shape_cast %50 : vector<1x1x4xf32> to vector<1x4xf32>
    %c3_74 = arith.constant 3 : index
    %c0_75 = arith.constant 0 : index
    %c0_76 = arith.constant 0 : index
    %52 = vector.load %arg4[%c3_74, %c0_75, %c0_76] : memref<4x20x20xf32, #tpu.memory_space<vmem>>, vector<1x1x4xf32>
    %53 = vector.shape_cast %52 : vector<1x1x4xf32> to vector<1x4xf32>
    %c3_77 = arith.constant 3 : index
    %c1_78 = arith.constant 1 : index
    %c0_79 = arith.constant 0 : index
    %54 = vector.load %arg4[%c3_77, %c1_78, %c0_79] : memref<4x20x20xf32, #tpu.memory_space<vmem>>, vector<1x1x4xf32>
    %55 = vector.shape_cast %54 : vector<1x1x4xf32> to vector<1x4xf32>
    %c3_80 = arith.constant 3 : index
    %c2_81 = arith.constant 2 : index
    %c0_82 = arith.constant 0 : index
    %56 = vector.load %arg4[%c3_80, %c2_81, %c0_82] : memref<4x20x20xf32, #tpu.memory_space<vmem>>, vector<1x1x4xf32>
    %57 = vector.shape_cast %56 : vector<1x1x4xf32> to vector<1x4xf32>
    %c3_83 = arith.constant 3 : index
    %c3_84 = arith.constant 3 : index
    %c0_85 = arith.constant 0 : index
    %58 = vector.load %arg4[%c3_83, %c3_84, %c0_85] : memref<4x20x20xf32, #tpu.memory_space<vmem>>, vector<1x1x4xf32>
    %59 = vector.shape_cast %58 : vector<1x1x4xf32> to vector<1x4xf32>
    %60 = tpu.concatenate %29, %31, %33, %35, %37, %39, %41, %43, %45, %47, %49, %51, %53, %55, %57, %59 in 1 : vector<1x4xf32>, vector<1x4xf32>, vector<1x4xf32>, vector<1x4xf32>, vector<1x4xf32>, vector<1x4xf32>, vector<1x4xf32>, vector<1x4xf32>, vector<1x4xf32>, vector<1x4xf32>, vector<1x4xf32>, vector<1x4xf32>, vector<1x4xf32>, vector<1x4xf32>, vector<1x4xf32>, vector<1x4xf32> -> vector<1x64xf32>
    %c0_86 = arith.constant 0 : index
    %c0_87 = arith.constant 0 : index
    %c4 = arith.constant 4 : index
    %61 = vector.load %arg4[%c0_86, %c0_87, %c4] : memref<4x20x20xf32, #tpu.memory_space<vmem>>, vector<1x1x4xf32>
    %62 = vector.shape_cast %61 : vector<1x1x4xf32> to vector<1x4xf32>
    %c0_88 = arith.constant 0 : index
    %c1_89 = arith.constant 1 : index
    %c4_90 = arith.constant 4 : index
    %63 = vector.load %arg4[%c0_88, %c1_89, %c4_90] : memref<4x20x20xf32, #tpu.memory_space<vmem>>, vector<1x1x4xf32>
    %64 = vector.shape_cast %63 : vector<1x1x4xf32> to vector<1x4xf32>
    %c0_91 = arith.constant 0 : index
    %c2_92 = arith.constant 2 : index
    %c4_93 = arith.constant 4 : index
    %65 = vector.load %arg4[%c0_91, %c2_92, %c4_93] : memref<4x20x20xf32, #tpu.memory_space<vmem>>, vector<1x1x4xf32>
    %66 = vector.shape_cast %65 : vector<1x1x4xf32> to vector<1x4xf32>
    %c0_94 = arith.constant 0 : index
    %c3_95 = arith.constant 3 : index
    %c4_96 = arith.constant 4 : index
    %67 = vector.load %arg4[%c0_94, %c3_95, %c4_96] : memref<4x20x20xf32, #tpu.memory_space<vmem>>, vector<1x1x4xf32>
    %68 = vector.shape_cast %67 : vector<1x1x4xf32> to vector<1x4xf32>
    %c1_97 = arith.constant 1 : index
    %c0_98 = arith.constant 0 : index
    %c4_99 = arith.constant 4 : index
    %69 = vector.load %arg4[%c1_97, %c0_98, %c4_99] : memref<4x20x20xf32, #tpu.memory_space<vmem>>, vector<1x1x4xf32>
    %70 = vector.shape_cast %69 : vector<1x1x4xf32> to vector<1x4xf32>
    %c1_100 = arith.constant 1 : index
    %c1_101 = arith.constant 1 : index
    %c4_102 = arith.constant 4 : index
    %71 = vector.load %arg4[%c1_100, %c1_101, %c4_102] : memref<4x20x20xf32, #tpu.memory_space<vmem>>, vector<1x1x4xf32>
    %72 = vector.shape_cast %71 : vector<1x1x4xf32> to vector<1x4xf32>
    %c1_103 = arith.constant 1 : index
    %c2_104 = arith.constant 2 : index
    %c4_105 = arith.constant 4 : index
    %73 = vector.load %arg4[%c1_103, %c2_104, %c4_105] : memref<4x20x20xf32, #tpu.memory_space<vmem>>, vector<1x1x4xf32>
    %74 = vector.shape_cast %73 : vector<1x1x4xf32> to vector<1x4xf32>
    %c1_106 = arith.constant 1 : index
    %c3_107 = arith.constant 3 : index
    %c4_108 = arith.constant 4 : index
    %75 = vector.load %arg4[%c1_106, %c3_107, %c4_108] : memref<4x20x20xf32, #tpu.memory_space<vmem>>, vector<1x1x4xf32>
    %76 = vector.shape_cast %75 : vector<1x1x4xf32> to vector<1x4xf32>
    %c2_109 = arith.constant 2 : index
    %c0_110 = arith.constant 0 : index
    %c4_111 = arith.constant 4 : index
    %77 = vector.load %arg4[%c2_109, %c0_110, %c4_111] : memref<4x20x20xf32, #tpu.memory_space<vmem>>, vector<1x1x4xf32>
    %78 = vector.shape_cast %77 : vector<1x1x4xf32> to vector<1x4xf32>
    %c2_112 = arith.constant 2 : index
    %c1_113 = arith.constant 1 : index
    %c4_114 = arith.constant 4 : index
    %79 = vector.load %arg4[%c2_112, %c1_113, %c4_114] : memref<4x20x20xf32, #tpu.memory_space<vmem>>, vector<1x1x4xf32>
    %80 = vector.shape_cast %79 : vector<1x1x4xf32> to vector<1x4xf32>
    %c2_115 = arith.constant 2 : index
    %c2_116 = arith.constant 2 : index
    %c4_117 = arith.constant 4 : index
    %81 = vector.load %arg4[%c2_115, %c2_116, %c4_117] : memref<4x20x20xf32, #tpu.memory_space<vmem>>, vector<1x1x4xf32>
    %82 = vector.shape_cast %81 : vector<1x1x4xf32> to vector<1x4xf32>
    %c2_118 = arith.constant 2 : index
    %c3_119 = arith.constant 3 : index
    %c4_120 = arith.constant 4 : index
    %83 = vector.load %arg4[%c2_118, %c3_119, %c4_120] : memref<4x20x20xf32, #tpu.memory_space<vmem>>, vector<1x1x4xf32>
    %84 = vector.shape_cast %83 : vector<1x1x4xf32> to vector<1x4xf32>
    %c3_121 = arith.constant 3 : index
    %c0_122 = arith.constant 0 : index
    %c4_123 = arith.constant 4 : index
    %85 = vector.load %arg4[%c3_121, %c0_122, %c4_123] : memref<4x20x20xf32, #tpu.memory_space<vmem>>, vector<1x1x4xf32>
    %86 = vector.shape_cast %85 : vector<1x1x4xf32> to vector<1x4xf32>
    %c3_124 = arith.constant 3 : index
    %c1_125 = arith.constant 1 : index
    %c4_126 = arith.constant 4 : index
    %87 = vector.load %arg4[%c3_124, %c1_125, %c4_126] : memref<4x20x20xf32, #tpu.memory_space<vmem>>, vector<1x1x4xf32>
    %88 = vector.shape_cast %87 : vector<1x1x4xf32> to vector<1x4xf32>
    %c3_127 = arith.constant 3 : index
    %c2_128 = arith.constant 2 : index
    %c4_129 = arith.constant 4 : index
    %89 = vector.load %arg4[%c3_127, %c2_128, %c4_129] : memref<4x20x20xf32, #tpu.memory_space<vmem>>, vector<1x1x4xf32>
    %90 = vector.shape_cast %89 : vector<1x1x4xf32> to vector<1x4xf32>
    %c3_130 = arith.constant 3 : index
    %c3_131 = arith.constant 3 : index
    %c4_132 = arith.constant 4 : index
    %91 = vector.load %arg4[%c3_130, %c3_131, %c4_132] : memref<4x20x20xf32, #tpu.memory_space<vmem>>, vector<1x1x4xf32>
    %92 = vector.shape_cast %91 : vector<1x1x4xf32> to vector<1x4xf32>
    %93 = tpu.concatenate %62, %64, %66, %68, %70, %72, %74, %76, %78, %80, %82, %84, %86, %88, %90, %92 in 1 : vector<1x4xf32>, vector<1x4xf32>, vector<1x4xf32>, vector<1x4xf32>, vector<1x4xf32>, vector<1x4xf32>, vector<1x4xf32>, vector<1x4xf32>, vector<1x4xf32>, vector<1x4xf32>, vector<1x4xf32>, vector<1x4xf32>, vector<1x4xf32>, vector<1x4xf32>, vector<1x4xf32>, vector<1x4xf32> -> vector<1x64xf32>
    %c0_133 = arith.constant 0 : index
    %c0_134 = arith.constant 0 : index
    %c8 = arith.constant 8 : index
    %94 = vector.load %arg4[%c0_133, %c0_134, %c8] : memref<4x20x20xf32, #tpu.memory_space<vmem>>, vector<1x1x4xf32>
    %95 = vector.shape_cast %94 : vector<1x1x4xf32> to vector<1x4xf32>
    %c0_135 = arith.constant 0 : index
    %c1_136 = arith.constant 1 : index
    %c8_137 = arith.constant 8 : index
    %96 = vector.load %arg4[%c0_135, %c1_136, %c8_137] : memref<4x20x20xf32, #tpu.memory_space<vmem>>, vector<1x1x4xf32>
    %97 = vector.shape_cast %96 : vector<1x1x4xf32> to vector<1x4xf32>
    %c0_138 = arith.constant 0 : index
    %c2_139 = arith.constant 2 : index
    %c8_140 = arith.constant 8 : index
    %98 = vector.load %arg4[%c0_138, %c2_139, %c8_140] : memref<4x20x20xf32, #tpu.memory_space<vmem>>, vector<1x1x4xf32>
    %99 = vector.shape_cast %98 : vector<1x1x4xf32> to vector<1x4xf32>
    %c0_141 = arith.constant 0 : index
    %c3_142 = arith.constant 3 : index
    %c8_143 = arith.constant 8 : index
    %100 = vector.load %arg4[%c0_141, %c3_142, %c8_143] : memref<4x20x20xf32, #tpu.memory_space<vmem>>, vector<1x1x4xf32>
    %101 = vector.shape_cast %100 : vector<1x1x4xf32> to vector<1x4xf32>
    %c1_144 = arith.constant 1 : index
    %c0_145 = arith.constant 0 : index
    %c8_146 = arith.constant 8 : index
    %102 = vector.load %arg4[%c1_144, %c0_145, %c8_146] : memref<4x20x20xf32, #tpu.memory_space<vmem>>, vector<1x1x4xf32>
    %103 = vector.shape_cast %102 : vector<1x1x4xf32> to vector<1x4xf32>
    %c1_147 = arith.constant 1 : index
    %c1_148 = arith.constant 1 : index
    %c8_149 = arith.constant 8 : index
    %104 = vector.load %arg4[%c1_147, %c1_148, %c8_149] : memref<4x20x20xf32, #tpu.memory_space<vmem>>, vector<1x1x4xf32>
    %105 = vector.shape_cast %104 : vector<1x1x4xf32> to vector<1x4xf32>
    %c1_150 = arith.constant 1 : index
    %c2_151 = arith.constant 2 : index
    %c8_152 = arith.constant 8 : index
    %106 = vector.load %arg4[%c1_150, %c2_151, %c8_152] : memref<4x20x20xf32, #tpu.memory_space<vmem>>, vector<1x1x4xf32>
    %107 = vector.shape_cast %106 : vector<1x1x4xf32> to vector<1x4xf32>
    %c1_153 = arith.constant 1 : index
    %c3_154 = arith.constant 3 : index
    %c8_155 = arith.constant 8 : index
    %108 = vector.load %arg4[%c1_153, %c3_154, %c8_155] : memref<4x20x20xf32, #tpu.memory_space<vmem>>, vector<1x1x4xf32>
    %109 = vector.shape_cast %108 : vector<1x1x4xf32> to vector<1x4xf32>
    %c2_156 = arith.constant 2 : index
    %c0_157 = arith.constant 0 : index
    %c8_158 = arith.constant 8 : index
    %110 = vector.load %arg4[%c2_156, %c0_157, %c8_158] : memref<4x20x20xf32, #tpu.memory_space<vmem>>, vector<1x1x4xf32>
    %111 = vector.shape_cast %110 : vector<1x1x4xf32> to vector<1x4xf32>
    %c2_159 = arith.constant 2 : index
    %c1_160 = arith.constant 1 : index
    %c8_161 = arith.constant 8 : index
    %112 = vector.load %arg4[%c2_159, %c1_160, %c8_161] : memref<4x20x20xf32, #tpu.memory_space<vmem>>, vector<1x1x4xf32>
    %113 = vector.shape_cast %112 : vector<1x1x4xf32> to vector<1x4xf32>
    %c2_162 = arith.constant 2 : index
    %c2_163 = arith.constant 2 : index
    %c8_164 = arith.constant 8 : index
    %114 = vector.load %arg4[%c2_162, %c2_163, %c8_164] : memref<4x20x20xf32, #tpu.memory_space<vmem>>, vector<1x1x4xf32>
    %115 = vector.shape_cast %114 : vector<1x1x4xf32> to vector<1x4xf32>
    %c2_165 = arith.constant 2 : index
    %c3_166 = arith.constant 3 : index
    %c8_167 = arith.constant 8 : index
    %116 = vector.load %arg4[%c2_165, %c3_166, %c8_167] : memref<4x20x20xf32, #tpu.memory_space<vmem>>, vector<1x1x4xf32>
    %117 = vector.shape_cast %116 : vector<1x1x4xf32> to vector<1x4xf32>
    %c3_168 = arith.constant 3 : index
    %c0_169 = arith.constant 0 : index
    %c8_170 = arith.constant 8 : index
    %118 = vector.load %arg4[%c3_168, %c0_169, %c8_170] : memref<4x20x20xf32, #tpu.memory_space<vmem>>, vector<1x1x4xf32>
    %119 = vector.shape_cast %118 : vector<1x1x4xf32> to vector<1x4xf32>
    %c3_171 = arith.constant 3 : index
    %c1_172 = arith.constant 1 : index
    %c8_173 = arith.constant 8 : index
    %120 = vector.load %arg4[%c3_171, %c1_172, %c8_173] : memref<4x20x20xf32, #tpu.memory_space<vmem>>, vector<1x1x4xf32>
    %121 = vector.shape_cast %120 : vector<1x1x4xf32> to vector<1x4xf32>
    %c3_174 = arith.constant 3 : index
    %c2_175 = arith.constant 2 : index
    %c8_176 = arith.constant 8 : index
    %122 = vector.load %arg4[%c3_174, %c2_175, %c8_176] : memref<4x20x20xf32, #tpu.memory_space<vmem>>, vector<1x1x4xf32>
    %123 = vector.shape_cast %122 : vector<1x1x4xf32> to vector<1x4xf32>
    %c3_177 = arith.constant 3 : index
    %c3_178 = arith.constant 3 : index
    %c8_179 = arith.constant 8 : index
    %124 = vector.load %arg4[%c3_177, %c3_178, %c8_179] : memref<4x20x20xf32, #tpu.memory_space<vmem>>, vector<1x1x4xf32>
    %125 = vector.shape_cast %124 : vector<1x1x4xf32> to vector<1x4xf32>
    %126 = tpu.concatenate %95, %97, %99, %101, %103, %105, %107, %109, %111, %113, %115, %117, %119, %121, %123, %125 in 1 : vector<1x4xf32>, vector<1x4xf32>, vector<1x4xf32>, vector<1x4xf32>, vector<1x4xf32>, vector<1x4xf32>, vector<1x4xf32>, vector<1x4xf32>, vector<1x4xf32>, vector<1x4xf32>, vector<1x4xf32>, vector<1x4xf32>, vector<1x4xf32>, vector<1x4xf32>, vector<1x4xf32>, vector<1x4xf32> -> vector<1x64xf32>
    %c0_180 = arith.constant 0 : index
    %c0_181 = arith.constant 0 : index
    %c12 = arith.constant 12 : index
    %127 = vector.load %arg4[%c0_180, %c0_181, %c12] : memref<4x20x20xf32, #tpu.memory_space<vmem>>, vector<1x1x4xf32>
    %128 = vector.shape_cast %127 : vector<1x1x4xf32> to vector<1x4xf32>
    %c0_182 = arith.constant 0 : index
    %c1_183 = arith.constant 1 : index
    %c12_184 = arith.constant 12 : index
    %129 = vector.load %arg4[%c0_182, %c1_183, %c12_184] : memref<4x20x20xf32, #tpu.memory_space<vmem>>, vector<1x1x4xf32>
    %130 = vector.shape_cast %129 : vector<1x1x4xf32> to vector<1x4xf32>
    %c0_185 = arith.constant 0 : index
    %c2_186 = arith.constant 2 : index
    %c12_187 = arith.constant 12 : index
    %131 = vector.load %arg4[%c0_185, %c2_186, %c12_187] : memref<4x20x20xf32, #tpu.memory_space<vmem>>, vector<1x1x4xf32>
    %132 = vector.shape_cast %131 : vector<1x1x4xf32> to vector<1x4xf32>
    %c0_188 = arith.constant 0 : index
    %c3_189 = arith.constant 3 : index
    %c12_190 = arith.constant 12 : index
    %133 = vector.load %arg4[%c0_188, %c3_189, %c12_190] : memref<4x20x20xf32, #tpu.memory_space<vmem>>, vector<1x1x4xf32>
    %134 = vector.shape_cast %133 : vector<1x1x4xf32> to vector<1x4xf32>
    %c1_191 = arith.constant 1 : index
    %c0_192 = arith.constant 0 : index
    %c12_193 = arith.constant 12 : index
    %135 = vector.load %arg4[%c1_191, %c0_192, %c12_193] : memref<4x20x20xf32, #tpu.memory_space<vmem>>, vector<1x1x4xf32>
    %136 = vector.shape_cast %135 : vector<1x1x4xf32> to vector<1x4xf32>
    %c1_194 = arith.constant 1 : index
    %c1_195 = arith.constant 1 : index
    %c12_196 = arith.constant 12 : index
    %137 = vector.load %arg4[%c1_194, %c1_195, %c12_196] : memref<4x20x20xf32, #tpu.memory_space<vmem>>, vector<1x1x4xf32>
    %138 = vector.shape_cast %137 : vector<1x1x4xf32> to vector<1x4xf32>
    %c1_197 = arith.constant 1 : index
    %c2_198 = arith.constant 2 : index
    %c12_199 = arith.constant 12 : index
    %139 = vector.load %arg4[%c1_197, %c2_198, %c12_199] : memref<4x20x20xf32, #tpu.memory_space<vmem>>, vector<1x1x4xf32>
    %140 = vector.shape_cast %139 : vector<1x1x4xf32> to vector<1x4xf32>
    %c1_200 = arith.constant 1 : index
    %c3_201 = arith.constant 3 : index
    %c12_202 = arith.constant 12 : index
    %141 = vector.load %arg4[%c1_200, %c3_201, %c12_202] : memref<4x20x20xf32, #tpu.memory_space<vmem>>, vector<1x1x4xf32>
    %142 = vector.shape_cast %141 : vector<1x1x4xf32> to vector<1x4xf32>
    %c2_203 = arith.constant 2 : index
    %c0_204 = arith.constant 0 : index
    %c12_205 = arith.constant 12 : index
    %143 = vector.load %arg4[%c2_203, %c0_204, %c12_205] : memref<4x20x20xf32, #tpu.memory_space<vmem>>, vector<1x1x4xf32>
    %144 = vector.shape_cast %143 : vector<1x1x4xf32> to vector<1x4xf32>
    %c2_206 = arith.constant 2 : index
    %c1_207 = arith.constant 1 : index
    %c12_208 = arith.constant 12 : index
    %145 = vector.load %arg4[%c2_206, %c1_207, %c12_208] : memref<4x20x20xf32, #tpu.memory_space<vmem>>, vector<1x1x4xf32>
    %146 = vector.shape_cast %145 : vector<1x1x4xf32> to vector<1x4xf32>
    %c2_209 = arith.constant 2 : index
    %c2_210 = arith.constant 2 : index
    %c12_211 = arith.constant 12 : index
    %147 = vector.load %arg4[%c2_209, %c2_210, %c12_211] : memref<4x20x20xf32, #tpu.memory_space<vmem>>, vector<1x1x4xf32>
    %148 = vector.shape_cast %147 : vector<1x1x4xf32> to vector<1x4xf32>
    %c2_212 = arith.constant 2 : index
    %c3_213 = arith.constant 3 : index
    %c12_214 = arith.constant 12 : index
    %149 = vector.load %arg4[%c2_212, %c3_213, %c12_214] : memref<4x20x20xf32, #tpu.memory_space<vmem>>, vector<1x1x4xf32>
    %150 = vector.shape_cast %149 : vector<1x1x4xf32> to vector<1x4xf32>
    %c3_215 = arith.constant 3 : index
    %c0_216 = arith.constant 0 : index
    %c12_217 = arith.constant 12 : index
    %151 = vector.load %arg4[%c3_215, %c0_216, %c12_217] : memref<4x20x20xf32, #tpu.memory_space<vmem>>, vector<1x1x4xf32>
    %152 = vector.shape_cast %151 : vector<1x1x4xf32> to vector<1x4xf32>
    %c3_218 = arith.constant 3 : index
    %c1_219 = arith.constant 1 : index
    %c12_220 = arith.constant 12 : index
    %153 = vector.load %arg4[%c3_218, %c1_219, %c12_220] : memref<4x20x20xf32, #tpu.memory_space<vmem>>, vector<1x1x4xf32>
    %154 = vector.shape_cast %153 : vector<1x1x4xf32> to vector<1x4xf32>
    %c3_221 = arith.constant 3 : index
    %c2_222 = arith.constant 2 : index
    %c12_223 = arith.constant 12 : index
    %155 = vector.load %arg4[%c3_221, %c2_222, %c12_223] : memref<4x20x20xf32, #tpu.memory_space<vmem>>, vector<1x1x4xf32>
    %156 = vector.shape_cast %155 : vector<1x1x4xf32> to vector<1x4xf32>
    %c3_224 = arith.constant 3 : index
    %c3_225 = arith.constant 3 : index
    %c12_226 = arith.constant 12 : index
    %157 = vector.load %arg4[%c3_224, %c3_225, %c12_226] : memref<4x20x20xf32, #tpu.memory_space<vmem>>, vector<1x1x4xf32>
    %158 = vector.shape_cast %157 : vector<1x1x4xf32> to vector<1x4xf32>
    %159 = tpu.concatenate %128, %130, %132, %134, %136, %138, %140, %142, %144, %146, %148, %150, %152, %154, %156, %158 in 1 : vector<1x4xf32>, vector<1x4xf32>, vector<1x4xf32>, vector<1x4xf32>, vector<1x4xf32>, vector<1x4xf32>, vector<1x4xf32>, vector<1x4xf32>, vector<1x4xf32>, vector<1x4xf32>, vector<1x4xf32>, vector<1x4xf32>, vector<1x4xf32>, vector<1x4xf32>, vector<1x4xf32>, vector<1x4xf32> -> vector<1x64xf32>
    %c0_227 = arith.constant 0 : index
    %c0_228 = arith.constant 0 : index
    %c16 = arith.constant 16 : index
    %160 = vector.load %arg4[%c0_227, %c0_228, %c16] : memref<4x20x20xf32, #tpu.memory_space<vmem>>, vector<1x1x4xf32>
    %161 = vector.shape_cast %160 : vector<1x1x4xf32> to vector<1x4xf32>
    %c0_229 = arith.constant 0 : index
    %c1_230 = arith.constant 1 : index
    %c16_231 = arith.constant 16 : index
    %162 = vector.load %arg4[%c0_229, %c1_230, %c16_231] : memref<4x20x20xf32, #tpu.memory_space<vmem>>, vector<1x1x4xf32>
    %163 = vector.shape_cast %162 : vector<1x1x4xf32> to vector<1x4xf32>
    %c0_232 = arith.constant 0 : index
    %c2_233 = arith.constant 2 : index
    %c16_234 = arith.constant 16 : index
    %164 = vector.load %arg4[%c0_232, %c2_233, %c16_234] : memref<4x20x20xf32, #tpu.memory_space<vmem>>, vector<1x1x4xf32>
    %165 = vector.shape_cast %164 : vector<1x1x4xf32> to vector<1x4xf32>
    %c0_235 = arith.constant 0 : index
    %c3_236 = arith.constant 3 : index
    %c16_237 = arith.constant 16 : index
    %166 = vector.load %arg4[%c0_235, %c3_236, %c16_237] : memref<4x20x20xf32, #tpu.memory_space<vmem>>, vector<1x1x4xf32>
    %167 = vector.shape_cast %166 : vector<1x1x4xf32> to vector<1x4xf32>
    %c1_238 = arith.constant 1 : index
    %c0_239 = arith.constant 0 : index
    %c16_240 = arith.constant 16 : index
    %168 = vector.load %arg4[%c1_238, %c0_239, %c16_240] : memref<4x20x20xf32, #tpu.memory_space<vmem>>, vector<1x1x4xf32>
    %169 = vector.shape_cast %168 : vector<1x1x4xf32> to vector<1x4xf32>
    %c1_241 = arith.constant 1 : index
    %c1_242 = arith.constant 1 : index
    %c16_243 = arith.constant 16 : index
    %170 = vector.load %arg4[%c1_241, %c1_242, %c16_243] : memref<4x20x20xf32, #tpu.memory_space<vmem>>, vector<1x1x4xf32>
    %171 = vector.shape_cast %170 : vector<1x1x4xf32> to vector<1x4xf32>
    %c1_244 = arith.constant 1 : index
    %c2_245 = arith.constant 2 : index
    %c16_246 = arith.constant 16 : index
    %172 = vector.load %arg4[%c1_244, %c2_245, %c16_246] : memref<4x20x20xf32, #tpu.memory_space<vmem>>, vector<1x1x4xf32>
    %173 = vector.shape_cast %172 : vector<1x1x4xf32> to vector<1x4xf32>
    %c1_247 = arith.constant 1 : index
    %c3_248 = arith.constant 3 : index
    %c16_249 = arith.constant 16 : index
    %174 = vector.load %arg4[%c1_247, %c3_248, %c16_249] : memref<4x20x20xf32, #tpu.memory_space<vmem>>, vector<1x1x4xf32>
    %175 = vector.shape_cast %174 : vector<1x1x4xf32> to vector<1x4xf32>
    %c2_250 = arith.constant 2 : index
    %c0_251 = arith.constant 0 : index
    %c16_252 = arith.constant 16 : index
    %176 = vector.load %arg4[%c2_250, %c0_251, %c16_252] : memref<4x20x20xf32, #tpu.memory_space<vmem>>, vector<1x1x4xf32>
    %177 = vector.shape_cast %176 : vector<1x1x4xf32> to vector<1x4xf32>
    %c2_253 = arith.constant 2 : index
    %c1_254 = arith.constant 1 : index
    %c16_255 = arith.constant 16 : index
    %178 = vector.load %arg4[%c2_253, %c1_254, %c16_255] : memref<4x20x20xf32, #tpu.memory_space<vmem>>, vector<1x1x4xf32>
    %179 = vector.shape_cast %178 : vector<1x1x4xf32> to vector<1x4xf32>
    %c2_256 = arith.constant 2 : index
    %c2_257 = arith.constant 2 : index
    %c16_258 = arith.constant 16 : index
    %180 = vector.load %arg4[%c2_256, %c2_257, %c16_258] : memref<4x20x20xf32, #tpu.memory_space<vmem>>, vector<1x1x4xf32>
    %181 = vector.shape_cast %180 : vector<1x1x4xf32> to vector<1x4xf32>
    %c2_259 = arith.constant 2 : index
    %c3_260 = arith.constant 3 : index
    %c16_261 = arith.constant 16 : index
    %182 = vector.load %arg4[%c2_259, %c3_260, %c16_261] : memref<4x20x20xf32, #tpu.memory_space<vmem>>, vector<1x1x4xf32>
    %183 = vector.shape_cast %182 : vector<1x1x4xf32> to vector<1x4xf32>
    %c3_262 = arith.constant 3 : index
    %c0_263 = arith.constant 0 : index
    %c16_264 = arith.constant 16 : index
    %184 = vector.load %arg4[%c3_262, %c0_263, %c16_264] : memref<4x20x20xf32, #tpu.memory_space<vmem>>, vector<1x1x4xf32>
    %185 = vector.shape_cast %184 : vector<1x1x4xf32> to vector<1x4xf32>
    %c3_265 = arith.constant 3 : index
    %c1_266 = arith.constant 1 : index
    %c16_267 = arith.constant 16 : index
    %186 = vector.load %arg4[%c3_265, %c1_266, %c16_267] : memref<4x20x20xf32, #tpu.memory_space<vmem>>, vector<1x1x4xf32>
    %187 = vector.shape_cast %186 : vector<1x1x4xf32> to vector<1x4xf32>
    %c3_268 = arith.constant 3 : index
    %c2_269 = arith.constant 2 : index
    %c16_270 = arith.constant 16 : index
    %188 = vector.load %arg4[%c3_268, %c2_269, %c16_270] : memref<4x20x20xf32, #tpu.memory_space<vmem>>, vector<1x1x4xf32>
    %189 = vector.shape_cast %188 : vector<1x1x4xf32> to vector<1x4xf32>
    %c3_271 = arith.constant 3 : index
    %c3_272 = arith.constant 3 : index
    %c16_273 = arith.constant 16 : index
    %190 = vector.load %arg4[%c3_271, %c3_272, %c16_273] : memref<4x20x20xf32, #tpu.memory_space<vmem>>, vector<1x1x4xf32>
    %191 = vector.shape_cast %190 : vector<1x1x4xf32> to vector<1x4xf32>
    %192 = tpu.concatenate %161, %163, %165, %167, %169, %171, %173, %175, %177, %179, %181, %183, %185, %187, %189, %191 in 1 : vector<1x4xf32>, vector<1x4xf32>, vector<1x4xf32>, vector<1x4xf32>, vector<1x4xf32>, vector<1x4xf32>, vector<1x4xf32>, vector<1x4xf32>, vector<1x4xf32>, vector<1x4xf32>, vector<1x4xf32>, vector<1x4xf32>, vector<1x4xf32>, vector<1x4xf32>, vector<1x4xf32>, vector<1x4xf32> -> vector<1x64xf32>
    %193 = tpu.concatenate %60, %93, %126, %159, %192 in 0 : vector<1x64xf32>, vector<1x64xf32>, vector<1x64xf32>, vector<1x64xf32>, vector<1x64xf32> -> vector<5x64xf32>
    %c0_274 = arith.constant 0 : index
    %c0_275 = arith.constant 0 : index
    %c0_276 = arith.constant 0 : index
    %194 = vector.load %arg3[%c0_274, %c0_275, %c0_276] : memref<1x25x64xf32, #tpu.memory_space<vmem>>, vector<1x5x64xf32>
    %195 = vector.shape_cast %194 : vector<1x5x64xf32> to vector<5x64xf32>
    %196 = vector.shape_cast %193 : vector<5x64xf32> to vector<1x5x64xf32>
    tpu.vector_store %arg3[%c0_274, %c0_275, %c0_276], %196 {strides = array<i32>} : memref<1x25x64xf32, #tpu.memory_space<vmem>>, vector<1x5x64xf32>,
    %c0_277 = arith.constant 0 : index
    %c4_278 = arith.constant 4 : index
    %c0_279 = arith.constant 0 : index
    %197 = vector.load %arg4[%c0_277, %c4_278, %c0_279] : memref<4x20x20xf32, #tpu.memory_space<vmem>>, vector<1x1x4xf32>
    %198 = vector.shape_cast %197 : vector<1x1x4xf32> to vector<1x4xf32>
    %c0_280 = arith.constant 0 : index
    %c5 = arith.constant 5 : index
    %c0_281 = arith.constant 0 : index
    %199 = vector.load %arg4[%c0_280, %c5, %c0_281] : memref<4x20x20xf32, #tpu.memory_space<vmem>>, vector<1x1x4xf32>
    %200 = vector.shape_cast %199 : vector<1x1x4xf32> to vector<1x4xf32>
    %c0_282 = arith.constant 0 : index
    %c6 = arith.constant 6 : index
    %c0_283 = arith.constant 0 : index
    %201 = vector.load %arg4[%c0_282, %c6, %c0_283] : memref<4x20x20xf32, #tpu.memory_space<vmem>>, vector<1x1x4xf32>
    %202 = vector.shape_cast %201 : vector<1x1x4xf32> to vector<1x4xf32>
    %c0_284 = arith.constant 0 : index
    %c7 = arith.constant 7 : index
    %c0_285 = arith.constant 0 : index
    %203 = vector.load %arg4[%c0_284, %c7, %c0_285] : memref<4x20x20xf32, #tpu.memory_space<vmem>>, vector<1x1x4xf32>
    %204 = vector.shape_cast %203 : vector<1x1x4xf32> to vector<1x4xf32>
    %c1_286 = arith.constant 1 : index
    %c4_287 = arith.constant 4 : index
    %c0_288 = arith.constant 0 : index
    %205 = vector.load %arg4[%c1_286, %c4_287, %c0_288] : memref<4x20x20xf32, #tpu.memory_space<vmem>>, vector<1x1x4xf32>
    %206 = vector.shape_cast %205 : vector<1x1x4xf32> to vector<1x4xf32>
    %c1_289 = arith.constant 1 : index
    %c5_290 = arith.constant 5 : index
    %c0_291 = arith.constant 0 : index
    %207 = vector.load %arg4[%c1_289, %c5_290, %c0_291] : memref<4x20x20xf32, #tpu.memory_space<vmem>>, vector<1x1x4xf32>
    %208 = vector.shape_cast %207 : vector<1x1x4xf32> to vector<1x4xf32>
    %c1_292 = arith.constant 1 : index
    %c6_293 = arith.constant 6 : index
    %c0_294 = arith.constant 0 : index
    %209 = vector.load %arg4[%c1_292, %c6_293, %c0_294] : memref<4x20x20xf32, #tpu.memory_space<vmem>>, vector<1x1x4xf32>
    %210 = vector.shape_cast %209 : vector<1x1x4xf32> to vector<1x4xf32>
    %c1_295 = arith.constant 1 : index
    %c7_296 = arith.constant 7 : index
    %c0_297 = arith.constant 0 : index
    %211 = vector.load %arg4[%c1_295, %c7_296, %c0_297] : memref<4x20x20xf32, #tpu.memory_space<vmem>>, vector<1x1x4xf32>
    %212 = vector.shape_cast %211 : vector<1x1x4xf32> to vector<1x4xf32>
    %c2_298 = arith.constant 2 : index
    %c4_299 = arith.constant 4 : index
    %c0_300 = arith.constant 0 : index
    %213 = vector.load %arg4[%c2_298, %c4_299, %c0_300] : memref<4x20x20xf32, #tpu.memory_space<vmem>>, vector<1x1x4xf32>
    %214 = vector.shape_cast %213 : vector<1x1x4xf32> to vector<1x4xf32>
    %c2_301 = arith.constant 2 : index
    %c5_302 = arith.constant 5 : index
    %c0_303 = arith.constant 0 : index
    %215 = vector.load %arg4[%c2_301, %c5_302, %c0_303] : memref<4x20x20xf32, #tpu.memory_space<vmem>>, vector<1x1x4xf32>
    %216 = vector.shape_cast %215 : vector<1x1x4xf32> to vector<1x4xf32>
    %c2_304 = arith.constant 2 : index
    %c6_305 = arith.constant 6 : index
    %c0_306 = arith.constant 0 : index
    %217 = vector.load %arg4[%c2_304, %c6_305, %c0_306] : memref<4x20x20xf32, #tpu.memory_space<vmem>>, vector<1x1x4xf32>
    %218 = vector.shape_cast %217 : vector<1x1x4xf32> to vector<1x4xf32>
    %c2_307 = arith.constant 2 : index
    %c7_308 = arith.constant 7 : index
    %c0_309 = arith.constant 0 : index
    %219 = vector.load %arg4[%c2_307, %c7_308, %c0_309] : memref<4x20x20xf32, #tpu.memory_space<vmem>>, vector<1x1x4xf32>
    %220 = vector.shape_cast %219 : vector<1x1x4xf32> to vector<1x4xf32>
    %c3_310 = arith.constant 3 : index
    %c4_311 = arith.constant 4 : index
    %c0_312 = arith.constant 0 : index
    %221 = vector.load %arg4[%c3_310, %c4_311, %c0_312] : memref<4x20x20xf32, #tpu.memory_space<vmem>>, vector<1x1x4xf32>
    %222 = vector.shape_cast %221 : vector<1x1x4xf32> to vector<1x4xf32>
    %c3_313 = arith.constant 3 : index
    %c5_314 = arith.constant 5 : index
    %c0_315 = arith.constant 0 : index
    %223 = vector.load %arg4[%c3_313, %c5_314, %c0_315] : memref<4x20x20xf32, #tpu.memory_space<vmem>>, vector<1x1x4xf32>
    %224 = vector.shape_cast %223 : vector<1x1x4xf32> to vector<1x4xf32>
    %c3_316 = arith.constant 3 : index
    %c6_317 = arith.constant 6 : index
    %c0_318 = arith.constant 0 : index
    %225 = vector.load %arg4[%c3_316, %c6_317, %c0_318] : memref<4x20x20xf32, #tpu.memory_space<vmem>>, vector<1x1x4xf32>
    %226 = vector.shape_cast %225 : vector<1x1x4xf32> to vector<1x4xf32>
    %c3_319 = arith.constant 3 : index
    %c7_320 = arith.constant 7 : index
    %c0_321 = arith.constant 0 : index
    %227 = vector.load %arg4[%c3_319, %c7_320, %c0_321] : memref<4x20x20xf32, #tpu.memory_space<vmem>>, vector<1x1x4xf32>
    %228 = vector.shape_cast %227 : vector<1x1x4xf32> to vector<1x4xf32>
    %229 = tpu.concatenate %198, %200, %202, %204, %206, %208, %210, %212, %214, %216, %218, %220, %222, %224, %226, %228 in 1 : vector<1x4xf32>, vector<1x4xf32>, vector<1x4xf32>, vector<1x4xf32>, vector<1x4xf32>, vector<1x4xf32>, vector<1x4xf32>, vector<1x4xf32>, vector<1x4xf32>, vector<1x4xf32>, vector<1x4xf32>, vector<1x4xf32>, vector<1x4xf32>, vector<1x4xf32>, vector<1x4xf32>, vector<1x4xf32> -> vector<1x64xf32>
    %c0_322 = arith.constant 0 : index
    %c4_323 = arith.constant 4 : index
    %c4_324 = arith.constant 4 : index
    %230 = vector.load %arg4[%c0_322, %c4_323, %c4_324] : memref<4x20x20xf32, #tpu.memory_space<vmem>>, vector<1x1x4xf32>
    %231 = vector.shape_cast %230 : vector<1x1x4xf32> to vector<1x4xf32>
    %c0_325 = arith.constant 0 : index
    %c5_326 = arith.constant 5 : index
    %c4_327 = arith.constant 4 : index
    %232 = vector.load %arg4[%c0_325, %c5_326, %c4_327] : memref<4x20x20xf32, #tpu.memory_space<vmem>>, vector<1x1x4xf32>
    %233 = vector.shape_cast %232 : vector<1x1x4xf32> to vector<1x4xf32>
    %c0_328 = arith.constant 0 : index
    %c6_329 = arith.constant 6 : index
    %c4_330 = arith.constant 4 : index
    %234 = vector.load %arg4[%c0_328, %c6_329, %c4_330] : memref<4x20x20xf32, #tpu.memory_space<vmem>>, vector<1x1x4xf32>
    %235 = vector.shape_cast %234 : vector<1x1x4xf32> to vector<1x4xf32>
    %c0_331 = arith.constant 0 : index
    %c7_332 = arith.constant 7 : index
    %c4_333 = arith.constant 4 : index
    %236 = vector.load %arg4[%c0_331, %c7_332, %c4_333] : memref<4x20x20xf32, #tpu.memory_space<vmem>>, vector<1x1x4xf32>
    %237 = vector.shape_cast %236 : vector<1x1x4xf32> to vector<1x4xf32>
    %c1_334 = arith.constant 1 : index
    %c4_335 = arith.constant 4 : index
    %c4_336 = arith.constant 4 : index
    %238 = vector.load %arg4[%c1_334, %c4_335, %c4_336] : memref<4x20x20xf32, #tpu.memory_space<vmem>>, vector<1x1x4xf32>
    %239 = vector.shape_cast %238 : vector<1x1x4xf32> to vector<1x4xf32>
    %c1_337 = arith.constant 1 : index
    %c5_338 = arith.constant 5 : index
    %c4_339 = arith.constant 4 : index
    %240 = vector.load %arg4[%c1_337, %c5_338, %c4_339] : memref<4x20x20xf32, #tpu.memory_space<vmem>>, vector<1x1x4xf32>
    %241 = vector.shape_cast %240 : vector<1x1x4xf32> to vector<1x4xf32>
    %c1_340 = arith.constant 1 : index
    %c6_341 = arith.constant 6 : index
    %c4_342 = arith.constant 4 : index
    %242 = vector.load %arg4[%c1_340, %c6_341, %c4_342] : memref<4x20x20xf32, #tpu.memory_space<vmem>>, vector<1x1x4xf32>
    %243 = vector.shape_cast %242 : vector<1x1x4xf32> to vector<1x4xf32>
    %c1_343 = arith.constant 1 : index
    %c7_344 = arith.constant 7 : index
    %c4_345 = arith.constant 4 : index
    %244 = vector.load %arg4[%c1_343, %c7_344, %c4_345] : memref<4x20x20xf32, #tpu.memory_space<vmem>>, vector<1x1x4xf32>
    %245 = vector.shape_cast %244 : vector<1x1x4xf32> to vector<1x4xf32>
    %c2_346 = arith.constant 2 : index
    %c4_347 = arith.constant 4 : index
    %c4_348 = arith.constant 4 : index
    %246 = vector.load %arg4[%c2_346, %c4_347, %c4_348] : memref<4x20x20xf32, #tpu.memory_space<vmem>>, vector<1x1x4xf32>
    %247 = vector.shape_cast %246 : vector<1x1x4xf32> to vector<1x4xf32>
    %c2_349 = arith.constant 2 : index
    %c5_350 = arith.constant 5 : index
    %c4_351 = arith.constant 4 : index
    %248 = vector.load %arg4[%c2_349, %c5_350, %c4_351] : memref<4x20x20xf32, #tpu.memory_space<vmem>>, vector<1x1x4xf32>
    %249 = vector.shape_cast %248 : vector<1x1x4xf32> to vector<1x4xf32>
    %c2_352 = arith.constant 2 : index
    %c6_353 = arith.constant 6 : index
    %c4_354 = arith.constant 4 : index
    %250 = vector.load %arg4[%c2_352, %c6_353, %c4_354] : memref<4x20x20xf32, #tpu.memory_space<vmem>>, vector<1x1x4xf32>
    %251 = vector.shape_cast %250 : vector<1x1x4xf32> to vector<1x4xf32>
    %c2_355 = arith.constant 2 : index
    %c7_356 = arith.constant 7 : index
    %c4_357 = arith.constant 4 : index
    %252 = vector.load %arg4[%c2_355, %c7_356, %c4_357] : memref<4x20x20xf32, #tpu.memory_space<vmem>>, vector<1x1x4xf32>
    %253 = vector.shape_cast %252 : vector<1x1x4xf32> to vector<1x4xf32>
    %c3_358 = arith.constant 3 : index
    %c4_359 = arith.constant 4 : index
    %c4_360 = arith.constant 4 : index
    %254 = vector.load %arg4[%c3_358, %c4_359, %c4_360] : memref<4x20x20xf32, #tpu.memory_space<vmem>>, vector<1x1x4xf32>
    %255 = vector.shape_cast %254 : vector<1x1x4xf32> to vector<1x4xf32>
    %c3_361 = arith.constant 3 : index
    %c5_362 = arith.constant 5 : index
    %c4_363 = arith.constant 4 : index
    %256 = vector.load %arg4[%c3_361, %c5_362, %c4_363] : memref<4x20x20xf32, #tpu.memory_space<vmem>>, vector<1x1x4xf32>
    %257 = vector.shape_cast %256 : vector<1x1x4xf32> to vector<1x4xf32>
    %c3_364 = arith.constant 3 : index
    %c6_365 = arith.constant 6 : index
    %c4_366 = arith.constant 4 : index
    %258 = vector.load %arg4[%c3_364, %c6_365, %c4_366] : memref<4x20x20xf32, #tpu.memory_space<vmem>>, vector<1x1x4xf32>
    %259 = vector.shape_cast %258 : vector<1x1x4xf32> to vector<1x4xf32>
    %c3_367 = arith.constant 3 : index
    %c7_368 = arith.constant 7 : index
    %c4_369 = arith.constant 4 : index
    %260 = vector.load %arg4[%c3_367, %c7_368, %c4_369] : memref<4x20x20xf32, #tpu.memory_space<vmem>>, vector<1x1x4xf32>
    %261 = vector.shape_cast %260 : vector<1x1x4xf32> to vector<1x4xf32>
    %262 = tpu.concatenate %231, %233, %235, %237, %239, %241, %243, %245, %247, %249, %251, %253, %255, %257, %259, %261 in 1 : vector<1x4xf32>, vector<1x4xf32>, vector<1x4xf32>, vector<1x4xf32>, vector<1x4xf32>, vector<1x4xf32>, vector<1x4xf32>, vector<1x4xf32>, vector<1x4xf32>, vector<1x4xf32>, vector<1x4xf32>, vector<1x4xf32>, vector<1x4xf32>, vector<1x4xf32>, vector<1x4xf32>, vector<1x4xf32> -> vector<1x64xf32>
    %c0_370 = arith.constant 0 : index
    %c4_371 = arith.constant 4 : index
    %c8_372 = arith.constant 8 : index
    %263 = vector.load %arg4[%c0_370, %c4_371, %c8_372] : memref<4x20x20xf32, #tpu.memory_space<vmem>>, vector<1x1x4xf32>
    %264 = vector.shape_cast %263 : vector<1x1x4xf32> to vector<1x4xf32>
    %c0_373 = arith.constant 0 : index
    %c5_374 = arith.constant 5 : index
    %c8_375 = arith.constant 8 : index
    %265 = vector.load %arg4[%c0_373, %c5_374, %c8_375] : memref<4x20x20xf32, #tpu.memory_space<vmem>>, vector<1x1x4xf32>
    %266 = vector.shape_cast %265 : vector<1x1x4xf32> to vector<1x4xf32>
    %c0_376 = arith.constant 0 : index
    %c6_377 = arith.constant 6 : index
    %c8_378 = arith.constant 8 : index
    %267 = vector.load %arg4[%c0_376, %c6_377, %c8_378] : memref<4x20x20xf32, #tpu.memory_space<vmem>>, vector<1x1x4xf32>
    %268 = vector.shape_cast %267 : vector<1x1x4xf32> to vector<1x4xf32>
    %c0_379 = arith.constant 0 : index
    %c7_380 = arith.constant 7 : index
    %c8_381 = arith.constant 8 : index
    %269 = vector.load %arg4[%c0_379, %c7_380, %c8_381] : memref<4x20x20xf32, #tpu.memory_space<vmem>>, vector<1x1x4xf32>
    %270 = vector.shape_cast %269 : vector<1x1x4xf32> to vector<1x4xf32>
    %c1_382 = arith.constant 1 : index
    %c4_383 = arith.constant 4 : index
    %c8_384 = arith.constant 8 : index
    %271 = vector.load %arg4[%c1_382, %c4_383, %c8_384] : memref<4x20x20xf32, #tpu.memory_space<vmem>>, vector<1x1x4xf32>
    %272 = vector.shape_cast %271 : vector<1x1x4xf32> to vector<1x4xf32>
    %c1_385 = arith.constant 1 : index
    %c5_386 = arith.constant 5 : index
    %c8_387 = arith.constant 8 : index
    %273 = vector.load %arg4[%c1_385, %c5_386, %c8_387] : memref<4x20x20xf32, #tpu.memory_space<vmem>>, vector<1x1x4xf32>
    %274 = vector.shape_cast %273 : vector<1x1x4xf32> to vector<1x4xf32>
    %c1_388 = arith.constant 1 : index
    %c6_389 = arith.constant 6 : index
    %c8_390 = arith.constant 8 : index
    %275 = vector.load %arg4[%c1_388, %c6_389, %c8_390] : memref<4x20x20xf32, #tpu.memory_space<vmem>>, vector<1x1x4xf32>
    %276 = vector.shape_cast %275 : vector<1x1x4xf32> to vector<1x4xf32>
    %c1_391 = arith.constant 1 : index
    %c7_392 = arith.constant 7 : index
    %c8_393 = arith.constant 8 : index
    %277 = vector.load %arg4[%c1_391, %c7_392, %c8_393] : memref<4x20x20xf32, #tpu.memory_space<vmem>>, vector<1x1x4xf32>
    %278 = vector.shape_cast %277 : vector<1x1x4xf32> to vector<1x4xf32>
    %c2_394 = arith.constant 2 : index
    %c4_395 = arith.constant 4 : index
    %c8_396 = arith.constant 8 : index
    %279 = vector.load %arg4[%c2_394, %c4_395, %c8_396] : memref<4x20x20xf32, #tpu.memory_space<vmem>>, vector<1x1x4xf32>
    %280 = vector.shape_cast %279 : vector<1x1x4xf32> to vector<1x4xf32>
    %c2_397 = arith.constant 2 : index
    %c5_398 = arith.constant 5 : index
    %c8_399 = arith.constant 8 : index
    %281 = vector.load %arg4[%c2_397, %c5_398, %c8_399] : memref<4x20x20xf32, #tpu.memory_space<vmem>>, vector<1x1x4xf32>
    %282 = vector.shape_cast %281 : vector<1x1x4xf32> to vector<1x4xf32>
    %c2_400 = arith.constant 2 : index
    %c6_401 = arith.constant 6 : index
    %c8_402 = arith.constant 8 : index
    %283 = vector.load %arg4[%c2_400, %c6_401, %c8_402] : memref<4x20x20xf32, #tpu.memory_space<vmem>>, vector<1x1x4xf32>
    %284 = vector.shape_cast %283 : vector<1x1x4xf32> to vector<1x4xf32>
    %c2_403 = arith.constant 2 : index
    %c7_404 = arith.constant 7 : index
    %c8_405 = arith.constant 8 : index
    %285 = vector.load %arg4[%c2_403, %c7_404, %c8_405] : memref<4x20x20xf32, #tpu.memory_space<vmem>>, vector<1x1x4xf32>
    %286 = vector.shape_cast %285 : vector<1x1x4xf32> to vector<1x4xf32>
    %c3_406 = arith.constant 3 : index
    %c4_407 = arith.constant 4 : index
    %c8_408 = arith.constant 8 : index
    %287 = vector.load %arg4[%c3_406, %c4_407, %c8_408] : memref<4x20x20xf32, #tpu.memory_space<vmem>>, vector<1x1x4xf32>
    %288 = vector.shape_cast %287 : vector<1x1x4xf32> to vector<1x4xf32>
    %c3_409 = arith.constant 3 : index
    %c5_410 = arith.constant 5 : index
    %c8_411 = arith.constant 8 : index
    %289 = vector.load %arg4[%c3_409, %c5_410, %c8_411] : memref<4x20x20xf32, #tpu.memory_space<vmem>>, vector<1x1x4xf32>
    %290 = vector.shape_cast %289 : vector<1x1x4xf32> to vector<1x4xf32>
    %c3_412 = arith.constant 3 : index
    %c6_413 = arith.constant 6 : index
    %c8_414 = arith.constant 8 : index
    %291 = vector.load %arg4[%c3_412, %c6_413, %c8_414] : memref<4x20x20xf32, #tpu.memory_space<vmem>>, vector<1x1x4xf32>
    %292 = vector.shape_cast %291 : vector<1x1x4xf32> to vector<1x4xf32>
    %c3_415 = arith.constant 3 : index
    %c7_416 = arith.constant 7 : index
    %c8_417 = arith.constant 8 : index
    %293 = vector.load %arg4[%c3_415, %c7_416, %c8_417] : memref<4x20x20xf32, #tpu.memory_space<vmem>>, vector<1x1x4xf32>
    %294 = vector.shape_cast %293 : vector<1x1x4xf32> to vector<1x4xf32>
    %295 = tpu.concatenate %264, %266, %268, %270, %272, %274, %276, %278, %280, %282, %284, %286, %288, %290, %292, %294 in 1 : vector<1x4xf32>, vector<1x4xf32>, vector<1x4xf32>, vector<1x4xf32>, vector<1x4xf32>, vector<1x4xf32>, vector<1x4xf32>, vector<1x4xf32>, vector<1x4xf32>, vector<1x4xf32>, vector<1x4xf32>, vector<1x4xf32>, vector<1x4xf32>, vector<1x4xf32>, vector<1x4xf32>, vector<1x4xf32> -> vector<1x64xf32>
    %c0_418 = arith.constant 0 : index
    %c4_419 = arith.constant 4 : index
    %c12_420 = arith.constant 12 : index
    %296 = vector.load %arg4[%c0_418, %c4_419, %c12_420] : memref<4x20x20xf32, #tpu.memory_space<vmem>>, vector<1x1x4xf32>
    %297 = vector.shape_cast %296 : vector<1x1x4xf32> to vector<1x4xf32>
    %c0_421 = arith.constant 0 : index
    %c5_422 = arith.constant 5 : index
    %c12_423 = arith.constant 12 : index
    %298 = vector.load %arg4[%c0_421, %c5_422, %c12_423] : memref<4x20x20xf32, #tpu.memory_space<vmem>>, vector<1x1x4xf32>
    %299 = vector.shape_cast %298 : vector<1x1x4xf32> to vector<1x4xf32>
    %c0_424 = arith.constant 0 : index
    %c6_425 = arith.constant 6 : index
    %c12_426 = arith.constant 12 : index
    %300 = vector.load %arg4[%c0_424, %c6_425, %c12_426] : memref<4x20x20xf32, #tpu.memory_space<vmem>>, vector<1x1x4xf32>
    %301 = vector.shape_cast %300 : vector<1x1x4xf32> to vector<1x4xf32>
    %c0_427 = arith.constant 0 : index
    %c7_428 = arith.constant 7 : index
    %c12_429 = arith.constant 12 : index
    %302 = vector.load %arg4[%c0_427, %c7_428, %c12_429] : memref<4x20x20xf32, #tpu.memory_space<vmem>>, vector<1x1x4xf32>
    %303 = vector.shape_cast %302 : vector<1x1x4xf32> to vector<1x4xf32>
    %c1_430 = arith.constant 1 : index
    %c4_431 = arith.constant 4 : index
    %c12_432 = arith.constant 12 : index
    %304 = vector.load %arg4[%c1_430, %c4_431, %c12_432] : memref<4x20x20xf32, #tpu.memory_space<vmem>>, vector<1x1x4xf32>
    %305 = vector.shape_cast %304 : vector<1x1x4xf32> to vector<1x4xf32>
    %c1_433 = arith.constant 1 : index
    %c5_434 = arith.constant 5 : index
    %c12_435 = arith.constant 12 : index
    %306 = vector.load %arg4[%c1_433, %c5_434, %c12_435] : memref<4x20x20xf32, #tpu.memory_space<vmem>>, vector<1x1x4xf32>
    %307 = vector.shape_cast %306 : vector<1x1x4xf32> to vector<1x4xf32>
    %c1_436 = arith.constant 1 : index
    %c6_437 = arith.constant 6 : index
    %c12_438 = arith.constant 12 : index
    %308 = vector.load %arg4[%c1_436, %c6_437, %c12_438] : memref<4x20x20xf32, #tpu.memory_space<vmem>>, vector<1x1x4xf32>
    %309 = vector.shape_cast %308 : vector<1x1x4xf32> to vector<1x4xf32>
    %c1_439 = arith.constant 1 : index
    %c7_440 = arith.constant 7 : index
    %c12_441 = arith.constant 12 : index
    %310 = vector.load %arg4[%c1_439, %c7_440, %c12_441] : memref<4x20x20xf32, #tpu.memory_space<vmem>>, vector<1x1x4xf32>
    %311 = vector.shape_cast %310 : vector<1x1x4xf32> to vector<1x4xf32>
    %c2_442 = arith.constant 2 : index
    %c4_443 = arith.constant 4 : index
    %c12_444 = arith.constant 12 : index
    %312 = vector.load %arg4[%c2_442, %c4_443, %c12_444] : memref<4x20x20xf32, #tpu.memory_space<vmem>>, vector<1x1x4xf32>
    %313 = vector.shape_cast %312 : vector<1x1x4xf32> to vector<1x4xf32>
    %c2_445 = arith.constant 2 : index
    %c5_446 = arith.constant 5 : index
    %c12_447 = arith.constant 12 : index
    %314 = vector.load %arg4[%c2_445, %c5_446, %c12_447] : memref<4x20x20xf32, #tpu.memory_space<vmem>>, vector<1x1x4xf32>
    %315 = vector.shape_cast %314 : vector<1x1x4xf32> to vector<1x4xf32>
    %c2_448 = arith.constant 2 : index
    %c6_449 = arith.constant 6 : index
    %c12_450 = arith.constant 12 : index
    %316 = vector.load %arg4[%c2_448, %c6_449, %c12_450] : memref<4x20x20xf32, #tpu.memory_space<vmem>>, vector<1x1x4xf32>
    %317 = vector.shape_cast %316 : vector<1x1x4xf32> to vector<1x4xf32>
    %c2_451 = arith.constant 2 : index
    %c7_452 = arith.constant 7 : index
    %c12_453 = arith.constant 12 : index
    %318 = vector.load %arg4[%c2_451, %c7_452, %c12_453] : memref<4x20x20xf32, #tpu.memory_space<vmem>>, vector<1x1x4xf32>
    %319 = vector.shape_cast %318 : vector<1x1x4xf32> to vector<1x4xf32>
    %c3_454 = arith.constant 3 : index
    %c4_455 = arith.constant 4 : index
    %c12_456 = arith.constant 12 : index
    %320 = vector.load %arg4[%c3_454, %c4_455, %c12_456] : memref<4x20x20xf32, #tpu.memory_space<vmem>>, vector<1x1x4xf32>
    %321 = vector.shape_cast %320 : vector<1x1x4xf32> to vector<1x4xf32>
    %c3_457 = arith.constant 3 : index
    %c5_458 = arith.constant 5 : index
    %c12_459 = arith.constant 12 : index
    %322 = vector.load %arg4[%c3_457, %c5_458, %c12_459] : memref<4x20x20xf32, #tpu.memory_space<vmem>>, vector<1x1x4xf32>
    %323 = vector.shape_cast %322 : vector<1x1x4xf32> to vector<1x4xf32>
    %c3_460 = arith.constant 3 : index
    %c6_461 = arith.constant 6 : index
    %c12_462 = arith.constant 12 : index
    %324 = vector.load %arg4[%c3_460, %c6_461, %c12_462] : memref<4x20x20xf32, #tpu.memory_space<vmem>>, vector<1x1x4xf32>
    %325 = vector.shape_cast %324 : vector<1x1x4xf32> to vector<1x4xf32>
    %c3_463 = arith.constant 3 : index
    %c7_464 = arith.constant 7 : index
    %c12_465 = arith.constant 12 : index
    %326 = vector.load %arg4[%c3_463, %c7_464, %c12_465] : memref<4x20x20xf32, #tpu.memory_space<vmem>>, vector<1x1x4xf32>
    %327 = vector.shape_cast %326 : vector<1x1x4xf32> to vector<1x4xf32>
    %328 = tpu.concatenate %297, %299, %301, %303, %305, %307, %309, %311, %313, %315, %317, %319, %321, %323, %325, %327 in 1 : vector<1x4xf32>, vector<1x4xf32>, vector<1x4xf32>, vector<1x4xf32>, vector<1x4xf32>, vector<1x4xf32>, vector<1x4xf32>, vector<1x4xf32>, vector<1x4xf32>, vector<1x4xf32>, vector<1x4xf32>, vector<1x4xf32>, vector<1x4xf32>, vector<1x4xf32>, vector<1x4xf32>, vector<1x4xf32> -> vector<1x64xf32>
    %c0_466 = arith.constant 0 : index
    %c4_467 = arith.constant 4 : index
    %c16_468 = arith.constant 16 : index
    %329 = vector.load %arg4[%c0_466, %c4_467, %c16_468] : memref<4x20x20xf32, #tpu.memory_space<vmem>>, vector<1x1x4xf32>
    %330 = vector.shape_cast %329 : vector<1x1x4xf32> to vector<1x4xf32>
    %c0_469 = arith.constant 0 : index
    %c5_470 = arith.constant 5 : index
    %c16_471 = arith.constant 16 : index
    %331 = vector.load %arg4[%c0_469, %c5_470, %c16_471] : memref<4x20x20xf32, #tpu.memory_space<vmem>>, vector<1x1x4xf32>
    %332 = vector.shape_cast %331 : vector<1x1x4xf32> to vector<1x4xf32>
    %c0_472 = arith.constant 0 : index
    %c6_473 = arith.constant 6 : index
    %c16_474 = arith.constant 16 : index
    %333 = vector.load %arg4[%c0_472, %c6_473, %c16_474] : memref<4x20x20xf32, #tpu.memory_space<vmem>>, vector<1x1x4xf32>
    %334 = vector.shape_cast %333 : vector<1x1x4xf32> to vector<1x4xf32>
    %c0_475 = arith.constant 0 : index
    %c7_476 = arith.constant 7 : index
    %c16_477 = arith.constant 16 : index
    %335 = vector.load %arg4[%c0_475, %c7_476, %c16_477] : memref<4x20x20xf32, #tpu.memory_space<vmem>>, vector<1x1x4xf32>
    %336 = vector.shape_cast %335 : vector<1x1x4xf32> to vector<1x4xf32>
    %c1_478 = arith.constant 1 : index
    %c4_479 = arith.constant 4 : index
    %c16_480 = arith.constant 16 : index
    %337 = vector.load %arg4[%c1_478, %c4_479, %c16_480] : memref<4x20x20xf32, #tpu.memory_space<vmem>>, vector<1x1x4xf32>
    %338 = vector.shape_cast %337 : vector<1x1x4xf32> to vector<1x4xf32>
    %c1_481 = arith.constant 1 : index
    %c5_482 = arith.constant 5 : index
    %c16_483 = arith.constant 16 : index
    %339 = vector.load %arg4[%c1_481, %c5_482, %c16_483] : memref<4x20x20xf32, #tpu.memory_space<vmem>>, vector<1x1x4xf32>
    %340 = vector.shape_cast %339 : vector<1x1x4xf32> to vector<1x4xf32>
    %c1_484 = arith.constant 1 : index
    %c6_485 = arith.constant 6 : index
    %c16_486 = arith.constant 16 : index
    %341 = vector.load %arg4[%c1_484, %c6_485, %c16_486] : memref<4x20x20xf32, #tpu.memory_space<vmem>>, vector<1x1x4xf32>
    %342 = vector.shape_cast %341 : vector<1x1x4xf32> to vector<1x4xf32>
    %c1_487 = arith.constant 1 : index
    %c7_488 = arith.constant 7 : index
    %c16_489 = arith.constant 16 : index
    %343 = vector.load %arg4[%c1_487, %c7_488, %c16_489] : memref<4x20x20xf32, #tpu.memory_space<vmem>>, vector<1x1x4xf32>
    %344 = vector.shape_cast %343 : vector<1x1x4xf32> to vector<1x4xf32>
    %c2_490 = arith.constant 2 : index
    %c4_491 = arith.constant 4 : index
    %c16_492 = arith.constant 16 : index
    %345 = vector.load %arg4[%c2_490, %c4_491, %c16_492] : memref<4x20x20xf32, #tpu.memory_space<vmem>>, vector<1x1x4xf32>
    %346 = vector.shape_cast %345 : vector<1x1x4xf32> to vector<1x4xf32>
    %c2_493 = arith.constant 2 : index
    %c5_494 = arith.constant 5 : index
    %c16_495 = arith.constant 16 : index
    %347 = vector.load %arg4[%c2_493, %c5_494, %c16_495] : memref<4x20x20xf32, #tpu.memory_space<vmem>>, vector<1x1x4xf32>
    %348 = vector.shape_cast %347 : vector<1x1x4xf32> to vector<1x4xf32>
    %c2_496 = arith.constant 2 : index
    %c6_497 = arith.constant 6 : index
    %c16_498 = arith.constant 16 : index
    %349 = vector.load %arg4[%c2_496, %c6_497, %c16_498] : memref<4x20x20xf32, #tpu.memory_space<vmem>>, vector<1x1x4xf32>
    %350 = vector.shape_cast %349 : vector<1x1x4xf32> to vector<1x4xf32>
    %c2_499 = arith.constant 2 : index
    %c7_500 = arith.constant 7 : index
    %c16_501 = arith.constant 16 : index
    %351 = vector.load %arg4[%c2_499, %c7_500, %c16_501] : memref<4x20x20xf32, #tpu.memory_space<vmem>>, vector<1x1x4xf32>
    %352 = vector.shape_cast %351 : vector<1x1x4xf32> to vector<1x4xf32>
    %c3_502 = arith.constant 3 : index
    %c4_503 = arith.constant 4 : index
    %c16_504 = arith.constant 16 : index
    %353 = vector.load %arg4[%c3_502, %c4_503, %c16_504] : memref<4x20x20xf32, #tpu.memory_space<vmem>>, vector<1x1x4xf32>
    %354 = vector.shape_cast %353 : vector<1x1x4xf32> to vector<1x4xf32>
    %c3_505 = arith.constant 3 : index
    %c5_506 = arith.constant 5 : index
    %c16_507 = arith.constant 16 : index
    %355 = vector.load %arg4[%c3_505, %c5_506, %c16_507] : memref<4x20x20xf32, #tpu.memory_space<vmem>>, vector<1x1x4xf32>
    %356 = vector.shape_cast %355 : vector<1x1x4xf32> to vector<1x4xf32>
    %c3_508 = arith.constant 3 : index
    %c6_509 = arith.constant 6 : index
    %c16_510 = arith.constant 16 : index
    %357 = vector.load %arg4[%c3_508, %c6_509, %c16_510] : memref<4x20x20xf32, #tpu.memory_space<vmem>>, vector<1x1x4xf32>
    %358 = vector.shape_cast %357 : vector<1x1x4xf32> to vector<1x4xf32>
    %c3_511 = arith.constant 3 : index
    %c7_512 = arith.constant 7 : index
    %c16_513 = arith.constant 16 : index
    %359 = vector.load %arg4[%c3_511, %c7_512, %c16_513] : memref<4x20x20xf32, #tpu.memory_space<vmem>>, vector<1x1x4xf32>
    %360 = vector.shape_cast %359 : vector<1x1x4xf32> to vector<1x4xf32>
    %361 = tpu.concatenate %330, %332, %334, %336, %338, %340, %342, %344, %346, %348, %350, %352, %354, %356, %358, %360 in 1 : vector<1x4xf32>, vector<1x4xf32>, vector<1x4xf32>, vector<1x4xf32>, vector<1x4xf32>, vector<1x4xf32>, vector<1x4xf32>, vector<1x4xf32>, vector<1x4xf32>, vector<1x4xf32>, vector<1x4xf32>, vector<1x4xf32>, vector<1x4xf32>, vector<1x4xf32>, vector<1x4xf32>, vector<1x4xf32> -> vector<1x64xf32>
    %362 = tpu.concatenate %229, %262, %295, %328, %361 in 0 : vector<1x64xf32>, vector<1x64xf32>, vector<1x64xf32>, vector<1x64xf32>, vector<1x64xf32> -> vector<5x64xf32>
    %c0_514 = arith.constant 0 : index
    %c5_515 = arith.constant 5 : index
    %c0_516 = arith.constant 0 : index
    %363 = vector.load %arg3[%c0_514, %c5_515, %c0_516] : memref<1x25x64xf32, #tpu.memory_space<vmem>>, vector<1x5x64xf32>
    %364 = vector.shape_cast %363 : vector<1x5x64xf32> to vector<5x64xf32>
    %365 = vector.shape_cast %362 : vector<5x64xf32> to vector<1x5x64xf32>
    tpu.vector_store %arg3[%c0_514, %c5_515, %c0_516], %365 {strides = array<i32>} : memref<1x25x64xf32, #tpu.memory_space<vmem>>, vector<1x5x64xf32>,
    %c0_517 = arith.constant 0 : index
    %c8_518 = arith.constant 8 : index
    %c0_519 = arith.constant 0 : index
    %366 = vector.load %arg4[%c0_517, %c8_518, %c0_519] : memref<4x20x20xf32, #tpu.memory_space<vmem>>, vector<1x1x4xf32>
    %367 = vector.shape_cast %366 : vector<1x1x4xf32> to vector<1x4xf32>
    %c0_520 = arith.constant 0 : index
    %c9 = arith.constant 9 : index
    %c0_521 = arith.constant 0 : index
    %368 = vector.load %arg4[%c0_520, %c9, %c0_521] : memref<4x20x20xf32, #tpu.memory_space<vmem>>, vector<1x1x4xf32>
    %369 = vector.shape_cast %368 : vector<1x1x4xf32> to vector<1x4xf32>
    %c0_522 = arith.constant 0 : index
    %c10 = arith.constant 10 : index
    %c0_523 = arith.constant 0 : index
    %370 = vector.load %arg4[%c0_522, %c10, %c0_523] : memref<4x20x20xf32, #tpu.memory_space<vmem>>, vector<1x1x4xf32>
    %371 = vector.shape_cast %370 : vector<1x1x4xf32> to vector<1x4xf32>
    %c0_524 = arith.constant 0 : index
    %c11 = arith.constant 11 : index
    %c0_525 = arith.constant 0 : index
    %372 = vector.load %arg4[%c0_524, %c11, %c0_525] : memref<4x20x20xf32, #tpu.memory_space<vmem>>, vector<1x1x4xf32>
    %373 = vector.shape_cast %372 : vector<1x1x4xf32> to vector<1x4xf32>
    %c1_526 = arith.constant 1 : index
    %c8_527 = arith.constant 8 : index
    %c0_528 = arith.constant 0 : index
    %374 = vector.load %arg4[%c1_526, %c8_527, %c0_528] : memref<4x20x20xf32, #tpu.memory_space<vmem>>, vector<1x1x4xf32>
    %375 = vector.shape_cast %374 : vector<1x1x4xf32> to vector<1x4xf32>
    %c1_529 = arith.constant 1 : index
    %c9_530 = arith.constant 9 : index
    %c0_531 = arith.constant 0 : index
    %376 = vector.load %arg4[%c1_529, %c9_530, %c0_531] : memref<4x20x20xf32, #tpu.memory_space<vmem>>, vector<1x1x4xf32>
    %377 = vector.shape_cast %376 : vector<1x1x4xf32> to vector<1x4xf32>
    %c1_532 = arith.constant 1 : index
    %c10_533 = arith.constant 10 : index
    %c0_534 = arith.constant 0 : index
    %378 = vector.load %arg4[%c1_532, %c10_533, %c0_534] : memref<4x20x20xf32, #tpu.memory_space<vmem>>, vector<1x1x4xf32>
    %379 = vector.shape_cast %378 : vector<1x1x4xf32> to vector<1x4xf32>
    %c1_535 = arith.constant 1 : index
    %c11_536 = arith.constant 11 : index
    %c0_537 = arith.constant 0 : index
    %380 = vector.load %arg4[%c1_535, %c11_536, %c0_537] : memref<4x20x20xf32, #tpu.memory_space<vmem>>, vector<1x1x4xf32>
    %381 = vector.shape_cast %380 : vector<1x1x4xf32> to vector<1x4xf32>
    %c2_538 = arith.constant 2 : index
    %c8_539 = arith.constant 8 : index
    %c0_540 = arith.constant 0 : index
    %382 = vector.load %arg4[%c2_538, %c8_539, %c0_540] : memref<4x20x20xf32, #tpu.memory_space<vmem>>, vector<1x1x4xf32>
    %383 = vector.shape_cast %382 : vector<1x1x4xf32> to vector<1x4xf32>
    %c2_541 = arith.constant 2 : index
    %c9_542 = arith.constant 9 : index
    %c0_543 = arith.constant 0 : index
    %384 = vector.load %arg4[%c2_541, %c9_542, %c0_543] : memref<4x20x20xf32, #tpu.memory_space<vmem>>, vector<1x1x4xf32>
    %385 = vector.shape_cast %384 : vector<1x1x4xf32> to vector<1x4xf32>
    %c2_544 = arith.constant 2 : index
    %c10_545 = arith.constant 10 : index
    %c0_546 = arith.constant 0 : index
    %386 = vector.load %arg4[%c2_544, %c10_545, %c0_546] : memref<4x20x20xf32, #tpu.memory_space<vmem>>, vector<1x1x4xf32>
    %387 = vector.shape_cast %386 : vector<1x1x4xf32> to vector<1x4xf32>
    %c2_547 = arith.constant 2 : index
    %c11_548 = arith.constant 11 : index
    %c0_549 = arith.constant 0 : index
    %388 = vector.load %arg4[%c2_547, %c11_548, %c0_549] : memref<4x20x20xf32, #tpu.memory_space<vmem>>, vector<1x1x4xf32>
    %389 = vector.shape_cast %388 : vector<1x1x4xf32> to vector<1x4xf32>
    %c3_550 = arith.constant 3 : index
    %c8_551 = arith.constant 8 : index
    %c0_552 = arith.constant 0 : index
    %390 = vector.load %arg4[%c3_550, %c8_551, %c0_552] : memref<4x20x20xf32, #tpu.memory_space<vmem>>, vector<1x1x4xf32>
    %391 = vector.shape_cast %390 : vector<1x1x4xf32> to vector<1x4xf32>
    %c3_553 = arith.constant 3 : index
    %c9_554 = arith.constant 9 : index
    %c0_555 = arith.constant 0 : index
    %392 = vector.load %arg4[%c3_553, %c9_554, %c0_555] : memref<4x20x20xf32, #tpu.memory_space<vmem>>, vector<1x1x4xf32>
    %393 = vector.shape_cast %392 : vector<1x1x4xf32> to vector<1x4xf32>
    %c3_556 = arith.constant 3 : index
    %c10_557 = arith.constant 10 : index
    %c0_558 = arith.constant 0 : index
    %394 = vector.load %arg4[%c3_556, %c10_557, %c0_558] : memref<4x20x20xf32, #tpu.memory_space<vmem>>, vector<1x1x4xf32>
    %395 = vector.shape_cast %394 : vector<1x1x4xf32> to vector<1x4xf32>
    %c3_559 = arith.constant 3 : index
    %c11_560 = arith.constant 11 : index
    %c0_561 = arith.constant 0 : index
    %396 = vector.load %arg4[%c3_559, %c11_560, %c0_561] : memref<4x20x20xf32, #tpu.memory_space<vmem>>, vector<1x1x4xf32>
    %397 = vector.shape_cast %396 : vector<1x1x4xf32> to vector<1x4xf32>
    %398 = tpu.concatenate %367, %369, %371, %373, %375, %377, %379, %381, %383, %385, %387, %389, %391, %393, %395, %397 in 1 : vector<1x4xf32>, vector<1x4xf32>, vector<1x4xf32>, vector<1x4xf32>, vector<1x4xf32>, vector<1x4xf32>, vector<1x4xf32>, vector<1x4xf32>, vector<1x4xf32>, vector<1x4xf32>, vector<1x4xf32>, vector<1x4xf32>, vector<1x4xf32>, vector<1x4xf32>, vector<1x4xf32>, vector<1x4xf32> -> vector<1x64xf32>
    %c0_562 = arith.constant 0 : index
    %c8_563 = arith.constant 8 : index
    %c4_564 = arith.constant 4 : index
    %399 = vector.load %arg4[%c0_562, %c8_563, %c4_564] : memref<4x20x20xf32, #tpu.memory_space<vmem>>, vector<1x1x4xf32>
    %400 = vector.shape_cast %399 : vector<1x1x4xf32> to vector<1x4xf32>
    %c0_565 = arith.constant 0 : index
    %c9_566 = arith.constant 9 : index
    %c4_567 = arith.constant 4 : index
    %401 = vector.load %arg4[%c0_565, %c9_566, %c4_567] : memref<4x20x20xf32, #tpu.memory_space<vmem>>, vector<1x1x4xf32>
    %402 = vector.shape_cast %401 : vector<1x1x4xf32> to vector<1x4xf32>
    %c0_568 = arith.constant 0 : index
    %c10_569 = arith.constant 10 : index
    %c4_570 = arith.constant 4 : index
    %403 = vector.load %arg4[%c0_568, %c10_569, %c4_570] : memref<4x20x20xf32, #tpu.memory_space<vmem>>, vector<1x1x4xf32>
    %404 = vector.shape_cast %403 : vector<1x1x4xf32> to vector<1x4xf32>
    %c0_571 = arith.constant 0 : index
    %c11_572 = arith.constant 11 : index
    %c4_573 = arith.constant 4 : index
    %405 = vector.load %arg4[%c0_571, %c11_572, %c4_573] : memref<4x20x20xf32, #tpu.memory_space<vmem>>, vector<1x1x4xf32>
    %406 = vector.shape_cast %405 : vector<1x1x4xf32> to vector<1x4xf32>
    %c1_574 = arith.constant 1 : index
    %c8_575 = arith.constant 8 : index
    %c4_576 = arith.constant 4 : index
    %407 = vector.load %arg4[%c1_574, %c8_575, %c4_576] : memref<4x20x20xf32, #tpu.memory_space<vmem>>, vector<1x1x4xf32>
    %408 = vector.shape_cast %407 : vector<1x1x4xf32> to vector<1x4xf32>
    %c1_577 = arith.constant 1 : index
    %c9_578 = arith.constant 9 : index
    %c4_579 = arith.constant 4 : index
    %409 = vector.load %arg4[%c1_577, %c9_578, %c4_579] : memref<4x20x20xf32, #tpu.memory_space<vmem>>, vector<1x1x4xf32>
    %410 = vector.shape_cast %409 : vector<1x1x4xf32> to vector<1x4xf32>
    %c1_580 = arith.constant 1 : index
    %c10_581 = arith.constant 10 : index
    %c4_582 = arith.constant 4 : index
    %411 = vector.load %arg4[%c1_580, %c10_581, %c4_582] : memref<4x20x20xf32, #tpu.memory_space<vmem>>, vector<1x1x4xf32>
    %412 = vector.shape_cast %411 : vector<1x1x4xf32> to vector<1x4xf32>
    %c1_583 = arith.constant 1 : index
    %c11_584 = arith.constant 11 : index
    %c4_585 = arith.constant 4 : index
    %413 = vector.load %arg4[%c1_583, %c11_584, %c4_585] : memref<4x20x20xf32, #tpu.memory_space<vmem>>, vector<1x1x4xf32>
    %414 = vector.shape_cast %413 : vector<1x1x4xf32> to vector<1x4xf32>
    %c2_586 = arith.constant 2 : index
    %c8_587 = arith.constant 8 : index
    %c4_588 = arith.constant 4 : index
    %415 = vector.load %arg4[%c2_586, %c8_587, %c4_588] : memref<4x20x20xf32, #tpu.memory_space<vmem>>, vector<1x1x4xf32>
    %416 = vector.shape_cast %415 : vector<1x1x4xf32> to vector<1x4xf32>
    %c2_589 = arith.constant 2 : index
    %c9_590 = arith.constant 9 : index
    %c4_591 = arith.constant 4 : index
    %417 = vector.load %arg4[%c2_589, %c9_590, %c4_591] : memref<4x20x20xf32, #tpu.memory_space<vmem>>, vector<1x1x4xf32>
    %418 = vector.shape_cast %417 : vector<1x1x4xf32> to vector<1x4xf32>
    %c2_592 = arith.constant 2 : index
    %c10_593 = arith.constant 10 : index
    %c4_594 = arith.constant 4 : index
    %419 = vector.load %arg4[%c2_592, %c10_593, %c4_594] : memref<4x20x20xf32, #tpu.memory_space<vmem>>, vector<1x1x4xf32>
    %420 = vector.shape_cast %419 : vector<1x1x4xf32> to vector<1x4xf32>
    %c2_595 = arith.constant 2 : index
    %c11_596 = arith.constant 11 : index
    %c4_597 = arith.constant 4 : index
    %421 = vector.load %arg4[%c2_595, %c11_596, %c4_597] : memref<4x20x20xf32, #tpu.memory_space<vmem>>, vector<1x1x4xf32>
    %422 = vector.shape_cast %421 : vector<1x1x4xf32> to vector<1x4xf32>
    %c3_598 = arith.constant 3 : index
    %c8_599 = arith.constant 8 : index
    %c4_600 = arith.constant 4 : index
    %423 = vector.load %arg4[%c3_598, %c8_599, %c4_600] : memref<4x20x20xf32, #tpu.memory_space<vmem>>, vector<1x1x4xf32>
    %424 = vector.shape_cast %423 : vector<1x1x4xf32> to vector<1x4xf32>
    %c3_601 = arith.constant 3 : index
    %c9_602 = arith.constant 9 : index
    %c4_603 = arith.constant 4 : index
    %425 = vector.load %arg4[%c3_601, %c9_602, %c4_603] : memref<4x20x20xf32, #tpu.memory_space<vmem>>, vector<1x1x4xf32>
    %426 = vector.shape_cast %425 : vector<1x1x4xf32> to vector<1x4xf32>
    %c3_604 = arith.constant 3 : index
    %c10_605 = arith.constant 10 : index
    %c4_606 = arith.constant 4 : index
    %427 = vector.load %arg4[%c3_604, %c10_605, %c4_606] : memref<4x20x20xf32, #tpu.memory_space<vmem>>, vector<1x1x4xf32>
    %428 = vector.shape_cast %427 : vector<1x1x4xf32> to vector<1x4xf32>
    %c3_607 = arith.constant 3 : index
    %c11_608 = arith.constant 11 : index
    %c4_609 = arith.constant 4 : index
    %429 = vector.load %arg4[%c3_607, %c11_608, %c4_609] : memref<4x20x20xf32, #tpu.memory_space<vmem>>, vector<1x1x4xf32>
    %430 = vector.shape_cast %429 : vector<1x1x4xf32> to vector<1x4xf32>
    %431 = tpu.concatenate %400, %402, %404, %406, %408, %410, %412, %414, %416, %418, %420, %422, %424, %426, %428, %430 in 1 : vector<1x4xf32>, vector<1x4xf32>, vector<1x4xf32>, vector<1x4xf32>, vector<1x4xf32>, vector<1x4xf32>, vector<1x4xf32>, vector<1x4xf32>, vector<1x4xf32>, vector<1x4xf32>, vector<1x4xf32>, vector<1x4xf32>, vector<1x4xf32>, vector<1x4xf32>, vector<1x4xf32>, vector<1x4xf32> -> vector<1x64xf32>
    %c0_610 = arith.constant 0 : index
    %c8_611 = arith.constant 8 : index
    %c8_612 = arith.constant 8 : index
    %432 = vector.load %arg4[%c0_610, %c8_611, %c8_612] : memref<4x20x20xf32, #tpu.memory_space<vmem>>, vector<1x1x4xf32>
    %433 = vector.shape_cast %432 : vector<1x1x4xf32> to vector<1x4xf32>
    %c0_613 = arith.constant 0 : index
    %c9_614 = arith.constant 9 : index
    %c8_615 = arith.constant 8 : index
    %434 = vector.load %arg4[%c0_613, %c9_614, %c8_615] : memref<4x20x20xf32, #tpu.memory_space<vmem>>, vector<1x1x4xf32>
    %435 = vector.shape_cast %434 : vector<1x1x4xf32> to vector<1x4xf32>
    %c0_616 = arith.constant 0 : index
    %c10_617 = arith.constant 10 : index
    %c8_618 = arith.constant 8 : index
    %436 = vector.load %arg4[%c0_616, %c10_617, %c8_618] : memref<4x20x20xf32, #tpu.memory_space<vmem>>, vector<1x1x4xf32>
    %437 = vector.shape_cast %436 : vector<1x1x4xf32> to vector<1x4xf32>
    %c0_619 = arith.constant 0 : index
    %c11_620 = arith.constant 11 : index
    %c8_621 = arith.constant 8 : index
    %438 = vector.load %arg4[%c0_619, %c11_620, %c8_621] : memref<4x20x20xf32, #tpu.memory_space<vmem>>, vector<1x1x4xf32>
    %439 = vector.shape_cast %438 : vector<1x1x4xf32> to vector<1x4xf32>
    %c1_622 = arith.constant 1 : index
    %c8_623 = arith.constant 8 : index
    %c8_624 = arith.constant 8 : index
    %440 = vector.load %arg4[%c1_622, %c8_623, %c8_624] : memref<4x20x20xf32, #tpu.memory_space<vmem>>, vector<1x1x4xf32>
    %441 = vector.shape_cast %440 : vector<1x1x4xf32> to vector<1x4xf32>
    %c1_625 = arith.constant 1 : index
    %c9_626 = arith.constant 9 : index
    %c8_627 = arith.constant 8 : index
    %442 = vector.load %arg4[%c1_625, %c9_626, %c8_627] : memref<4x20x20xf32, #tpu.memory_space<vmem>>, vector<1x1x4xf32>
    %443 = vector.shape_cast %442 : vector<1x1x4xf32> to vector<1x4xf32>
    %c1_628 = arith.constant 1 : index
    %c10_629 = arith.constant 10 : index
    %c8_630 = arith.constant 8 : index
    %444 = vector.load %arg4[%c1_628, %c10_629, %c8_630] : memref<4x20x20xf32, #tpu.memory_space<vmem>>, vector<1x1x4xf32>
    %445 = vector.shape_cast %444 : vector<1x1x4xf32> to vector<1x4xf32>
    %c1_631 = arith.constant 1 : index
    %c11_632 = arith.constant 11 : index
    %c8_633 = arith.constant 8 : index
    %446 = vector.load %arg4[%c1_631, %c11_632, %c8_633] : memref<4x20x20xf32, #tpu.memory_space<vmem>>, vector<1x1x4xf32>
    %447 = vector.shape_cast %446 : vector<1x1x4xf32> to vector<1x4xf32>
    %c2_634 = arith.constant 2 : index
    %c8_635 = arith.constant 8 : index
    %c8_636 = arith.constant 8 : index
    %448 = vector.load %arg4[%c2_634, %c8_635, %c8_636] : memref<4x20x20xf32, #tpu.memory_space<vmem>>, vector<1x1x4xf32>
    %449 = vector.shape_cast %448 : vector<1x1x4xf32> to vector<1x4xf32>
    %c2_637 = arith.constant 2 : index
    %c9_638 = arith.constant 9 : index
    %c8_639 = arith.constant 8 : index
    %450 = vector.load %arg4[%c2_637, %c9_638, %c8_639] : memref<4x20x20xf32, #tpu.memory_space<vmem>>, vector<1x1x4xf32>
    %451 = vector.shape_cast %450 : vector<1x1x4xf32> to vector<1x4xf32>
    %c2_640 = arith.constant 2 : index
    %c10_641 = arith.constant 10 : index
    %c8_642 = arith.constant 8 : index
    %452 = vector.load %arg4[%c2_640, %c10_641, %c8_642] : memref<4x20x20xf32, #tpu.memory_space<vmem>>, vector<1x1x4xf32>
    %453 = vector.shape_cast %452 : vector<1x1x4xf32> to vector<1x4xf32>
    %c2_643 = arith.constant 2 : index
    %c11_644 = arith.constant 11 : index
    %c8_645 = arith.constant 8 : index
    %454 = vector.load %arg4[%c2_643, %c11_644, %c8_645] : memref<4x20x20xf32, #tpu.memory_space<vmem>>, vector<1x1x4xf32>
    %455 = vector.shape_cast %454 : vector<1x1x4xf32> to vector<1x4xf32>
    %c3_646 = arith.constant 3 : index
    %c8_647 = arith.constant 8 : index
    %c8_648 = arith.constant 8 : index
    %456 = vector.load %arg4[%c3_646, %c8_647, %c8_648] : memref<4x20x20xf32, #tpu.memory_space<vmem>>, vector<1x1x4xf32>
    %457 = vector.shape_cast %456 : vector<1x1x4xf32> to vector<1x4xf32>
    %c3_649 = arith.constant 3 : index
    %c9_650 = arith.constant 9 : index
    %c8_651 = arith.constant 8 : index
    %458 = vector.load %arg4[%c3_649, %c9_650, %c8_651] : memref<4x20x20xf32, #tpu.memory_space<vmem>>, vector<1x1x4xf32>
    %459 = vector.shape_cast %458 : vector<1x1x4xf32> to vector<1x4xf32>
    %c3_652 = arith.constant 3 : index
    %c10_653 = arith.constant 10 : index
    %c8_654 = arith.constant 8 : index
    %460 = vector.load %arg4[%c3_652, %c10_653, %c8_654] : memref<4x20x20xf32, #tpu.memory_space<vmem>>, vector<1x1x4xf32>
    %461 = vector.shape_cast %460 : vector<1x1x4xf32> to vector<1x4xf32>
    %c3_655 = arith.constant 3 : index
    %c11_656 = arith.constant 11 : index
    %c8_657 = arith.constant 8 : index
    %462 = vector.load %arg4[%c3_655, %c11_656, %c8_657] : memref<4x20x20xf32, #tpu.memory_space<vmem>>, vector<1x1x4xf32>
    %463 = vector.shape_cast %462 : vector<1x1x4xf32> to vector<1x4xf32>
    %464 = tpu.concatenate %433, %435, %437, %439, %441, %443, %445, %447, %449, %451, %453, %455, %457, %459, %461, %463 in 1 : vector<1x4xf32>, vector<1x4xf32>, vector<1x4xf32>, vector<1x4xf32>, vector<1x4xf32>, vector<1x4xf32>, vector<1x4xf32>, vector<1x4xf32>, vector<1x4xf32>, vector<1x4xf32>, vector<1x4xf32>, vector<1x4xf32>, vector<1x4xf32>, vector<1x4xf32>, vector<1x4xf32>, vector<1x4xf32> -> vector<1x64xf32>
    %c0_658 = arith.constant 0 : index
    %c8_659 = arith.constant 8 : index
    %c12_660 = arith.constant 12 : index
    %465 = vector.load %arg4[%c0_658, %c8_659, %c12_660] : memref<4x20x20xf32, #tpu.memory_space<vmem>>, vector<1x1x4xf32>
    %466 = vector.shape_cast %465 : vector<1x1x4xf32> to vector<1x4xf32>
    %c0_661 = arith.constant 0 : index
    %c9_662 = arith.constant 9 : index
    %c12_663 = arith.constant 12 : index
    %467 = vector.load %arg4[%c0_661, %c9_662, %c12_663] : memref<4x20x20xf32, #tpu.memory_space<vmem>>, vector<1x1x4xf32>
    %468 = vector.shape_cast %467 : vector<1x1x4xf32> to vector<1x4xf32>
    %c0_664 = arith.constant 0 : index
    %c10_665 = arith.constant 10 : index
    %c12_666 = arith.constant 12 : index
    %469 = vector.load %arg4[%c0_664, %c10_665, %c12_666] : memref<4x20x20xf32, #tpu.memory_space<vmem>>, vector<1x1x4xf32>
    %470 = vector.shape_cast %469 : vector<1x1x4xf32> to vector<1x4xf32>
    %c0_667 = arith.constant 0 : index
    %c11_668 = arith.constant 11 : index
    %c12_669 = arith.constant 12 : index
    %471 = vector.load %arg4[%c0_667, %c11_668, %c12_669] : memref<4x20x20xf32, #tpu.memory_space<vmem>>, vector<1x1x4xf32>
    %472 = vector.shape_cast %471 : vector<1x1x4xf32> to vector<1x4xf32>
    %c1_670 = arith.constant 1 : index
    %c8_671 = arith.constant 8 : index
    %c12_672 = arith.constant 12 : index
    %473 = vector.load %arg4[%c1_670, %c8_671, %c12_672] : memref<4x20x20xf32, #tpu.memory_space<vmem>>, vector<1x1x4xf32>
    %474 = vector.shape_cast %473 : vector<1x1x4xf32> to vector<1x4xf32>
    %c1_673 = arith.constant 1 : index
    %c9_674 = arith.constant 9 : index
    %c12_675 = arith.constant 12 : index
    %475 = vector.load %arg4[%c1_673, %c9_674, %c12_675] : memref<4x20x20xf32, #tpu.memory_space<vmem>>, vector<1x1x4xf32>
    %476 = vector.shape_cast %475 : vector<1x1x4xf32> to vector<1x4xf32>
    %c1_676 = arith.constant 1 : index
    %c10_677 = arith.constant 10 : index
    %c12_678 = arith.constant 12 : index
    %477 = vector.load %arg4[%c1_676, %c10_677, %c12_678] : memref<4x20x20xf32, #tpu.memory_space<vmem>>, vector<1x1x4xf32>
    %478 = vector.shape_cast %477 : vector<1x1x4xf32> to vector<1x4xf32>
    %c1_679 = arith.constant 1 : index
    %c11_680 = arith.constant 11 : index
    %c12_681 = arith.constant 12 : index
    %479 = vector.load %arg4[%c1_679, %c11_680, %c12_681] : memref<4x20x20xf32, #tpu.memory_space<vmem>>, vector<1x1x4xf32>
    %480 = vector.shape_cast %479 : vector<1x1x4xf32> to vector<1x4xf32>
    %c2_682 = arith.constant 2 : index
    %c8_683 = arith.constant 8 : index
    %c12_684 = arith.constant 12 : index
    %481 = vector.load %arg4[%c2_682, %c8_683, %c12_684] : memref<4x20x20xf32, #tpu.memory_space<vmem>>, vector<1x1x4xf32>
    %482 = vector.shape_cast %481 : vector<1x1x4xf32> to vector<1x4xf32>
    %c2_685 = arith.constant 2 : index
    %c9_686 = arith.constant 9 : index
    %c12_687 = arith.constant 12 : index
    %483 = vector.load %arg4[%c2_685, %c9_686, %c12_687] : memref<4x20x20xf32, #tpu.memory_space<vmem>>, vector<1x1x4xf32>
    %484 = vector.shape_cast %483 : vector<1x1x4xf32> to vector<1x4xf32>
    %c2_688 = arith.constant 2 : index
    %c10_689 = arith.constant 10 : index
    %c12_690 = arith.constant 12 : index
    %485 = vector.load %arg4[%c2_688, %c10_689, %c12_690] : memref<4x20x20xf32, #tpu.memory_space<vmem>>, vector<1x1x4xf32>
    %486 = vector.shape_cast %485 : vector<1x1x4xf32> to vector<1x4xf32>
    %c2_691 = arith.constant 2 : index
    %c11_692 = arith.constant 11 : index
    %c12_693 = arith.constant 12 : index
    %487 = vector.load %arg4[%c2_691, %c11_692, %c12_693] : memref<4x20x20xf32, #tpu.memory_space<vmem>>, vector<1x1x4xf32>
    %488 = vector.shape_cast %487 : vector<1x1x4xf32> to vector<1x4xf32>
    %c3_694 = arith.constant 3 : index
    %c8_695 = arith.constant 8 : index
    %c12_696 = arith.constant 12 : index
    %489 = vector.load %arg4[%c3_694, %c8_695, %c12_696] : memref<4x20x20xf32, #tpu.memory_space<vmem>>, vector<1x1x4xf32>
    %490 = vector.shape_cast %489 : vector<1x1x4xf32> to vector<1x4xf32>
    %c3_697 = arith.constant 3 : index
    %c9_698 = arith.constant 9 : index
    %c12_699 = arith.constant 12 : index
    %491 = vector.load %arg4[%c3_697, %c9_698, %c12_699] : memref<4x20x20xf32, #tpu.memory_space<vmem>>, vector<1x1x4xf32>
    %492 = vector.shape_cast %491 : vector<1x1x4xf32> to vector<1x4xf32>
    %c3_700 = arith.constant 3 : index
    %c10_701 = arith.constant 10 : index
    %c12_702 = arith.constant 12 : index
    %493 = vector.load %arg4[%c3_700, %c10_701, %c12_702] : memref<4x20x20xf32, #tpu.memory_space<vmem>>, vector<1x1x4xf32>
    %494 = vector.shape_cast %493 : vector<1x1x4xf32> to vector<1x4xf32>
    %c3_703 = arith.constant 3 : index
    %c11_704 = arith.constant 11 : index
    %c12_705 = arith.constant 12 : index
    %495 = vector.load %arg4[%c3_703, %c11_704, %c12_705] : memref<4x20x20xf32, #tpu.memory_space<vmem>>, vector<1x1x4xf32>
    %496 = vector.shape_cast %495 : vector<1x1x4xf32> to vector<1x4xf32>
    %497 = tpu.concatenate %466, %468, %470, %472, %474, %476, %478, %480, %482, %484, %486, %488, %490, %492, %494, %496 in 1 : vector<1x4xf32>, vector<1x4xf32>, vector<1x4xf32>, vector<1x4xf32>, vector<1x4xf32>, vector<1x4xf32>, vector<1x4xf32>, vector<1x4xf32>, vector<1x4xf32>, vector<1x4xf32>, vector<1x4xf32>, vector<1x4xf32>, vector<1x4xf32>, vector<1x4xf32>, vector<1x4xf32>, vector<1x4xf32> -> vector<1x64xf32>
    %c0_706 = arith.constant 0 : index
    %c8_707 = arith.constant 8 : index
    %c16_708 = arith.constant 16 : index
    %498 = vector.load %arg4[%c0_706, %c8_707, %c16_708] : memref<4x20x20xf32, #tpu.memory_space<vmem>>, vector<1x1x4xf32>
    %499 = vector.shape_cast %498 : vector<1x1x4xf32> to vector<1x4xf32>
    %c0_709 = arith.constant 0 : index
    %c9_710 = arith.constant 9 : index
    %c16_711 = arith.constant 16 : index
    %500 = vector.load %arg4[%c0_709, %c9_710, %c16_711] : memref<4x20x20xf32, #tpu.memory_space<vmem>>, vector<1x1x4xf32>
    %501 = vector.shape_cast %500 : vector<1x1x4xf32> to vector<1x4xf32>
    %c0_712 = arith.constant 0 : index
    %c10_713 = arith.constant 10 : index
    %c16_714 = arith.constant 16 : index
    %502 = vector.load %arg4[%c0_712, %c10_713, %c16_714] : memref<4x20x20xf32, #tpu.memory_space<vmem>>, vector<1x1x4xf32>
    %503 = vector.shape_cast %502 : vector<1x1x4xf32> to vector<1x4xf32>
    %c0_715 = arith.constant 0 : index
    %c11_716 = arith.constant 11 : index
    %c16_717 = arith.constant 16 : index
    %504 = vector.load %arg4[%c0_715, %c11_716, %c16_717] : memref<4x20x20xf32, #tpu.memory_space<vmem>>, vector<1x1x4xf32>
    %505 = vector.shape_cast %504 : vector<1x1x4xf32> to vector<1x4xf32>
    %c1_718 = arith.constant 1 : index
    %c8_719 = arith.constant 8 : index
    %c16_720 = arith.constant 16 : index
    %506 = vector.load %arg4[%c1_718, %c8_719, %c16_720] : memref<4x20x20xf32, #tpu.memory_space<vmem>>, vector<1x1x4xf32>
    %507 = vector.shape_cast %506 : vector<1x1x4xf32> to vector<1x4xf32>
    %c1_721 = arith.constant 1 : index
    %c9_722 = arith.constant 9 : index
    %c16_723 = arith.constant 16 : index
    %508 = vector.load %arg4[%c1_721, %c9_722, %c16_723] : memref<4x20x20xf32, #tpu.memory_space<vmem>>, vector<1x1x4xf32>
    %509 = vector.shape_cast %508 : vector<1x1x4xf32> to vector<1x4xf32>
    %c1_724 = arith.constant 1 : index
    %c10_725 = arith.constant 10 : index
    %c16_726 = arith.constant 16 : index
    %510 = vector.load %arg4[%c1_724, %c10_725, %c16_726] : memref<4x20x20xf32, #tpu.memory_space<vmem>>, vector<1x1x4xf32>
    %511 = vector.shape_cast %510 : vector<1x1x4xf32> to vector<1x4xf32>
    %c1_727 = arith.constant 1 : index
    %c11_728 = arith.constant 11 : index
    %c16_729 = arith.constant 16 : index
    %512 = vector.load %arg4[%c1_727, %c11_728, %c16_729] : memref<4x20x20xf32, #tpu.memory_space<vmem>>, vector<1x1x4xf32>
    %513 = vector.shape_cast %512 : vector<1x1x4xf32> to vector<1x4xf32>
    %c2_730 = arith.constant 2 : index
    %c8_731 = arith.constant 8 : index
    %c16_732 = arith.constant 16 : index
    %514 = vector.load %arg4[%c2_730, %c8_731, %c16_732] : memref<4x20x20xf32, #tpu.memory_space<vmem>>, vector<1x1x4xf32>
    %515 = vector.shape_cast %514 : vector<1x1x4xf32> to vector<1x4xf32>
    %c2_733 = arith.constant 2 : index
    %c9_734 = arith.constant 9 : index
    %c16_735 = arith.constant 16 : index
    %516 = vector.load %arg4[%c2_733, %c9_734, %c16_735] : memref<4x20x20xf32, #tpu.memory_space<vmem>>, vector<1x1x4xf32>
    %517 = vector.shape_cast %516 : vector<1x1x4xf32> to vector<1x4xf32>
    %c2_736 = arith.constant 2 : index
    %c10_737 = arith.constant 10 : index
    %c16_738 = arith.constant 16 : index
    %518 = vector.load %arg4[%c2_736, %c10_737, %c16_738] : memref<4x20x20xf32, #tpu.memory_space<vmem>>, vector<1x1x4xf32>
    %519 = vector.shape_cast %518 : vector<1x1x4xf32> to vector<1x4xf32>
    %c2_739 = arith.constant 2 : index
    %c11_740 = arith.constant 11 : index
    %c16_741 = arith.constant 16 : index
    %520 = vector.load %arg4[%c2_739, %c11_740, %c16_741] : memref<4x20x20xf32, #tpu.memory_space<vmem>>, vector<1x1x4xf32>
    %521 = vector.shape_cast %520 : vector<1x1x4xf32> to vector<1x4xf32>
    %c3_742 = arith.constant 3 : index
    %c8_743 = arith.constant 8 : index
    %c16_744 = arith.constant 16 : index
    %522 = vector.load %arg4[%c3_742, %c8_743, %c16_744] : memref<4x20x20xf32, #tpu.memory_space<vmem>>, vector<1x1x4xf32>
    %523 = vector.shape_cast %522 : vector<1x1x4xf32> to vector<1x4xf32>
    %c3_745 = arith.constant 3 : index
    %c9_746 = arith.constant 9 : index
    %c16_747 = arith.constant 16 : index
    %524 = vector.load %arg4[%c3_745, %c9_746, %c16_747] : memref<4x20x20xf32, #tpu.memory_space<vmem>>, vector<1x1x4xf32>
    %525 = vector.shape_cast %524 : vector<1x1x4xf32> to vector<1x4xf32>
    %c3_748 = arith.constant 3 : index
    %c10_749 = arith.constant 10 : index
    %c16_750 = arith.constant 16 : index
    %526 = vector.load %arg4[%c3_748, %c10_749, %c16_750] : memref<4x20x20xf32, #tpu.memory_space<vmem>>, vector<1x1x4xf32>
    %527 = vector.shape_cast %526 : vector<1x1x4xf32> to vector<1x4xf32>
    %c3_751 = arith.constant 3 : index
    %c11_752 = arith.constant 11 : index
    %c16_753 = arith.constant 16 : index
    %528 = vector.load %arg4[%c3_751, %c11_752, %c16_753] : memref<4x20x20xf32, #tpu.memory_space<vmem>>, vector<1x1x4xf32>
    %529 = vector.shape_cast %528 : vector<1x1x4xf32> to vector<1x4xf32>
    %530 = tpu.concatenate %499, %501, %503, %505, %507, %509, %511, %513, %515, %517, %519, %521, %523, %525, %527, %529 in 1 : vector<1x4xf32>, vector<1x4xf32>, vector<1x4xf32>, vector<1x4xf32>, vector<1x4xf32>, vector<1x4xf32>, vector<1x4xf32>, vector<1x4xf32>, vector<1x4xf32>, vector<1x4xf32>, vector<1x4xf32>, vector<1x4xf32>, vector<1x4xf32>, vector<1x4xf32>, vector<1x4xf32>, vector<1x4xf32> -> vector<1x64xf32>
    %531 = tpu.concatenate %398, %431, %464, %497, %530 in 0 : vector<1x64xf32>, vector<1x64xf32>, vector<1x64xf32>, vector<1x64xf32>, vector<1x64xf32> -> vector<5x64xf32>
    %c0_754 = arith.constant 0 : index
    %c10_755 = arith.constant 10 : index
    %c0_756 = arith.constant 0 : index
    %532 = vector.load %arg3[%c0_754, %c10_755, %c0_756] : memref<1x25x64xf32, #tpu.memory_space<vmem>>, vector<1x5x64xf32>
    %533 = vector.shape_cast %532 : vector<1x5x64xf32> to vector<5x64xf32>
    %534 = vector.shape_cast %531 : vector<5x64xf32> to vector<1x5x64xf32>
    tpu.vector_store %arg3[%c0_754, %c10_755, %c0_756], %534 {strides = array<i32>} : memref<1x25x64xf32, #tpu.memory_space<vmem>>, vector<1x5x64xf32>,
    %c0_757 = arith.constant 0 : index
    %c12_758 = arith.constant 12 : index
    %c0_759 = arith.constant 0 : index
    %535 = vector.load %arg4[%c0_757, %c12_758, %c0_759] : memref<4x20x20xf32, #tpu.memory_space<vmem>>, vector<1x1x4xf32>
    %536 = vector.shape_cast %535 : vector<1x1x4xf32> to vector<1x4xf32>
    %c0_760 = arith.constant 0 : index
    %c13 = arith.constant 13 : index
    %c0_761 = arith.constant 0 : index
    %537 = vector.load %arg4[%c0_760, %c13, %c0_761] : memref<4x20x20xf32, #tpu.memory_space<vmem>>, vector<1x1x4xf32>
    %538 = vector.shape_cast %537 : vector<1x1x4xf32> to vector<1x4xf32>
    %c0_762 = arith.constant 0 : index
    %c14 = arith.constant 14 : index
    %c0_763 = arith.constant 0 : index
    %539 = vector.load %arg4[%c0_762, %c14, %c0_763] : memref<4x20x20xf32, #tpu.memory_space<vmem>>, vector<1x1x4xf32>
    %540 = vector.shape_cast %539 : vector<1x1x4xf32> to vector<1x4xf32>
    %c0_764 = arith.constant 0 : index
    %c15 = arith.constant 15 : index
    %c0_765 = arith.constant 0 : index
    %541 = vector.load %arg4[%c0_764, %c15, %c0_765] : memref<4x20x20xf32, #tpu.memory_space<vmem>>, vector<1x1x4xf32>
    %542 = vector.shape_cast %541 : vector<1x1x4xf32> to vector<1x4xf32>
    %c1_766 = arith.constant 1 : index
    %c12_767 = arith.constant 12 : index
    %c0_768 = arith.constant 0 : index
    %543 = vector.load %arg4[%c1_766, %c12_767, %c0_768] : memref<4x20x20xf32, #tpu.memory_space<vmem>>, vector<1x1x4xf32>
    %544 = vector.shape_cast %543 : vector<1x1x4xf32> to vector<1x4xf32>
    %c1_769 = arith.constant 1 : index
    %c13_770 = arith.constant 13 : index
    %c0_771 = arith.constant 0 : index
    %545 = vector.load %arg4[%c1_769, %c13_770, %c0_771] : memref<4x20x20xf32, #tpu.memory_space<vmem>>, vector<1x1x4xf32>
    %546 = vector.shape_cast %545 : vector<1x1x4xf32> to vector<1x4xf32>
    %c1_772 = arith.constant 1 : index
    %c14_773 = arith.constant 14 : index
    %c0_774 = arith.constant 0 : index
    %547 = vector.load %arg4[%c1_772, %c14_773, %c0_774] : memref<4x20x20xf32, #tpu.memory_space<vmem>>, vector<1x1x4xf32>
    %548 = vector.shape_cast %547 : vector<1x1x4xf32> to vector<1x4xf32>
    %c1_775 = arith.constant 1 : index
    %c15_776 = arith.constant 15 : index
    %c0_777 = arith.constant 0 : index
    %549 = vector.load %arg4[%c1_775, %c15_776, %c0_777] : memref<4x20x20xf32, #tpu.memory_space<vmem>>, vector<1x1x4xf32>
    %550 = vector.shape_cast %549 : vector<1x1x4xf32> to vector<1x4xf32>
    %c2_778 = arith.constant 2 : index
    %c12_779 = arith.constant 12 : index
    %c0_780 = arith.constant 0 : index
    %551 = vector.load %arg4[%c2_778, %c12_779, %c0_780] : memref<4x20x20xf32, #tpu.memory_space<vmem>>, vector<1x1x4xf32>
    %552 = vector.shape_cast %551 : vector<1x1x4xf32> to vector<1x4xf32>
    %c2_781 = arith.constant 2 : index
    %c13_782 = arith.constant 13 : index
    %c0_783 = arith.constant 0 : index
    %553 = vector.load %arg4[%c2_781, %c13_782, %c0_783] : memref<4x20x20xf32, #tpu.memory_space<vmem>>, vector<1x1x4xf32>
    %554 = vector.shape_cast %553 : vector<1x1x4xf32> to vector<1x4xf32>
    %c2_784 = arith.constant 2 : index
    %c14_785 = arith.constant 14 : index
    %c0_786 = arith.constant 0 : index
    %555 = vector.load %arg4[%c2_784, %c14_785, %c0_786] : memref<4x20x20xf32, #tpu.memory_space<vmem>>, vector<1x1x4xf32>
    %556 = vector.shape_cast %555 : vector<1x1x4xf32> to vector<1x4xf32>
    %c2_787 = arith.constant 2 : index
    %c15_788 = arith.constant 15 : index
    %c0_789 = arith.constant 0 : index
    %557 = vector.load %arg4[%c2_787, %c15_788, %c0_789] : memref<4x20x20xf32, #tpu.memory_space<vmem>>, vector<1x1x4xf32>
    %558 = vector.shape_cast %557 : vector<1x1x4xf32> to vector<1x4xf32>
    %c3_790 = arith.constant 3 : index
    %c12_791 = arith.constant 12 : index
    %c0_792 = arith.constant 0 : index
    %559 = vector.load %arg4[%c3_790, %c12_791, %c0_792] : memref<4x20x20xf32, #tpu.memory_space<vmem>>, vector<1x1x4xf32>
    %560 = vector.shape_cast %559 : vector<1x1x4xf32> to vector<1x4xf32>
    %c3_793 = arith.constant 3 : index
    %c13_794 = arith.constant 13 : index
    %c0_795 = arith.constant 0 : index
    %561 = vector.load %arg4[%c3_793, %c13_794, %c0_795] : memref<4x20x20xf32, #tpu.memory_space<vmem>>, vector<1x1x4xf32>
    %562 = vector.shape_cast %561 : vector<1x1x4xf32> to vector<1x4xf32>
    %c3_796 = arith.constant 3 : index
    %c14_797 = arith.constant 14 : index
    %c0_798 = arith.constant 0 : index
    %563 = vector.load %arg4[%c3_796, %c14_797, %c0_798] : memref<4x20x20xf32, #tpu.memory_space<vmem>>, vector<1x1x4xf32>
    %564 = vector.shape_cast %563 : vector<1x1x4xf32> to vector<1x4xf32>
    %c3_799 = arith.constant 3 : index
    %c15_800 = arith.constant 15 : index
    %c0_801 = arith.constant 0 : index
    %565 = vector.load %arg4[%c3_799, %c15_800, %c0_801] : memref<4x20x20xf32, #tpu.memory_space<vmem>>, vector<1x1x4xf32>
    %566 = vector.shape_cast %565 : vector<1x1x4xf32> to vector<1x4xf32>
    %567 = tpu.concatenate %536, %538, %540, %542, %544, %546, %548, %550, %552, %554, %556, %558, %560, %562, %564, %566 in 1 : vector<1x4xf32>, vector<1x4xf32>, vector<1x4xf32>, vector<1x4xf32>, vector<1x4xf32>, vector<1x4xf32>, vector<1x4xf32>, vector<1x4xf32>, vector<1x4xf32>, vector<1x4xf32>, vector<1x4xf32>, vector<1x4xf32>, vector<1x4xf32>, vector<1x4xf32>, vector<1x4xf32>, vector<1x4xf32> -> vector<1x64xf32>
    %c0_802 = arith.constant 0 : index
    %c12_803 = arith.constant 12 : index
    %c4_804 = arith.constant 4 : index
    %568 = vector.load %arg4[%c0_802, %c12_803, %c4_804] : memref<4x20x20xf32, #tpu.memory_space<vmem>>, vector<1x1x4xf32>
    %569 = vector.shape_cast %568 : vector<1x1x4xf32> to vector<1x4xf32>
    %c0_805 = arith.constant 0 : index
    %c13_806 = arith.constant 13 : index
    %c4_807 = arith.constant 4 : index
    %570 = vector.load %arg4[%c0_805, %c13_806, %c4_807] : memref<4x20x20xf32, #tpu.memory_space<vmem>>, vector<1x1x4xf32>
    %571 = vector.shape_cast %570 : vector<1x1x4xf32> to vector<1x4xf32>
    %c0_808 = arith.constant 0 : index
    %c14_809 = arith.constant 14 : index
    %c4_810 = arith.constant 4 : index
    %572 = vector.load %arg4[%c0_808, %c14_809, %c4_810] : memref<4x20x20xf32, #tpu.memory_space<vmem>>, vector<1x1x4xf32>
    %573 = vector.shape_cast %572 : vector<1x1x4xf32> to vector<1x4xf32>
    %c0_811 = arith.constant 0 : index
    %c15_812 = arith.constant 15 : index
    %c4_813 = arith.constant 4 : index
    %574 = vector.load %arg4[%c0_811, %c15_812, %c4_813] : memref<4x20x20xf32, #tpu.memory_space<vmem>>, vector<1x1x4xf32>
    %575 = vector.shape_cast %574 : vector<1x1x4xf32> to vector<1x4xf32>
    %c1_814 = arith.constant 1 : index
    %c12_815 = arith.constant 12 : index
    %c4_816 = arith.constant 4 : index
    %576 = vector.load %arg4[%c1_814, %c12_815, %c4_816] : memref<4x20x20xf32, #tpu.memory_space<vmem>>, vector<1x1x4xf32>
    %577 = vector.shape_cast %576 : vector<1x1x4xf32> to vector<1x4xf32>
    %c1_817 = arith.constant 1 : index
    %c13_818 = arith.constant 13 : index
    %c4_819 = arith.constant 4 : index
    %578 = vector.load %arg4[%c1_817, %c13_818, %c4_819] : memref<4x20x20xf32, #tpu.memory_space<vmem>>, vector<1x1x4xf32>
    %579 = vector.shape_cast %578 : vector<1x1x4xf32> to vector<1x4xf32>
    %c1_820 = arith.constant 1 : index
    %c14_821 = arith.constant 14 : index
    %c4_822 = arith.constant 4 : index
    %580 = vector.load %arg4[%c1_820, %c14_821, %c4_822] : memref<4x20x20xf32, #tpu.memory_space<vmem>>, vector<1x1x4xf32>
    %581 = vector.shape_cast %580 : vector<1x1x4xf32> to vector<1x4xf32>
    %c1_823 = arith.constant 1 : index
    %c15_824 = arith.constant 15 : index
    %c4_825 = arith.constant 4 : index
    %582 = vector.load %arg4[%c1_823, %c15_824, %c4_825] : memref<4x20x20xf32, #tpu.memory_space<vmem>>, vector<1x1x4xf32>
    %583 = vector.shape_cast %582 : vector<1x1x4xf32> to vector<1x4xf32>
    %c2_826 = arith.constant 2 : index
    %c12_827 = arith.constant 12 : index
    %c4_828 = arith.constant 4 : index
    %584 = vector.load %arg4[%c2_826, %c12_827, %c4_828] : memref<4x20x20xf32, #tpu.memory_space<vmem>>, vector<1x1x4xf32>
    %585 = vector.shape_cast %584 : vector<1x1x4xf32> to vector<1x4xf32>
    %c2_829 = arith.constant 2 : index
    %c13_830 = arith.constant 13 : index
    %c4_831 = arith.constant 4 : index
    %586 = vector.load %arg4[%c2_829, %c13_830, %c4_831] : memref<4x20x20xf32, #tpu.memory_space<vmem>>, vector<1x1x4xf32>
    %587 = vector.shape_cast %586 : vector<1x1x4xf32> to vector<1x4xf32>
    %c2_832 = arith.constant 2 : index
    %c14_833 = arith.constant 14 : index
    %c4_834 = arith.constant 4 : index
    %588 = vector.load %arg4[%c2_832, %c14_833, %c4_834] : memref<4x20x20xf32, #tpu.memory_space<vmem>>, vector<1x1x4xf32>
    %589 = vector.shape_cast %588 : vector<1x1x4xf32> to vector<1x4xf32>
    %c2_835 = arith.constant 2 : index
    %c15_836 = arith.constant 15 : index
    %c4_837 = arith.constant 4 : index
    %590 = vector.load %arg4[%c2_835, %c15_836, %c4_837] : memref<4x20x20xf32, #tpu.memory_space<vmem>>, vector<1x1x4xf32>
    %591 = vector.shape_cast %590 : vector<1x1x4xf32> to vector<1x4xf32>
    %c3_838 = arith.constant 3 : index
    %c12_839 = arith.constant 12 : index
    %c4_840 = arith.constant 4 : index
    %592 = vector.load %arg4[%c3_838, %c12_839, %c4_840] : memref<4x20x20xf32, #tpu.memory_space<vmem>>, vector<1x1x4xf32>
    %593 = vector.shape_cast %592 : vector<1x1x4xf32> to vector<1x4xf32>
    %c3_841 = arith.constant 3 : index
    %c13_842 = arith.constant 13 : index
    %c4_843 = arith.constant 4 : index
    %594 = vector.load %arg4[%c3_841, %c13_842, %c4_843] : memref<4x20x20xf32, #tpu.memory_space<vmem>>, vector<1x1x4xf32>
    %595 = vector.shape_cast %594 : vector<1x1x4xf32> to vector<1x4xf32>
    %c3_844 = arith.constant 3 : index
    %c14_845 = arith.constant 14 : index
    %c4_846 = arith.constant 4 : index
    %596 = vector.load %arg4[%c3_844, %c14_845, %c4_846] : memref<4x20x20xf32, #tpu.memory_space<vmem>>, vector<1x1x4xf32>
    %597 = vector.shape_cast %596 : vector<1x1x4xf32> to vector<1x4xf32>
    %c3_847 = arith.constant 3 : index
    %c15_848 = arith.constant 15 : index
    %c4_849 = arith.constant 4 : index
    %598 = vector.load %arg4[%c3_847, %c15_848, %c4_849] : memref<4x20x20xf32, #tpu.memory_space<vmem>>, vector<1x1x4xf32>
    %599 = vector.shape_cast %598 : vector<1x1x4xf32> to vector<1x4xf32>
    %600 = tpu.concatenate %569, %571, %573, %575, %577, %579, %581, %583, %585, %587, %589, %591, %593, %595, %597, %599 in 1 : vector<1x4xf32>, vector<1x4xf32>, vector<1x4xf32>, vector<1x4xf32>, vector<1x4xf32>, vector<1x4xf32>, vector<1x4xf32>, vector<1x4xf32>, vector<1x4xf32>, vector<1x4xf32>, vector<1x4xf32>, vector<1x4xf32>, vector<1x4xf32>, vector<1x4xf32>, vector<1x4xf32>, vector<1x4xf32> -> vector<1x64xf32>
    %c0_850 = arith.constant 0 : index
    %c12_851 = arith.constant 12 : index
    %c8_852 = arith.constant 8 : index
    %601 = vector.load %arg4[%c0_850, %c12_851, %c8_852] : memref<4x20x20xf32, #tpu.memory_space<vmem>>, vector<1x1x4xf32>
    %602 = vector.shape_cast %601 : vector<1x1x4xf32> to vector<1x4xf32>
    %c0_853 = arith.constant 0 : index
    %c13_854 = arith.constant 13 : index
    %c8_855 = arith.constant 8 : index
    %603 = vector.load %arg4[%c0_853, %c13_854, %c8_855] : memref<4x20x20xf32, #tpu.memory_space<vmem>>, vector<1x1x4xf32>
    %604 = vector.shape_cast %603 : vector<1x1x4xf32> to vector<1x4xf32>
    %c0_856 = arith.constant 0 : index
    %c14_857 = arith.constant 14 : index
    %c8_858 = arith.constant 8 : index
    %605 = vector.load %arg4[%c0_856, %c14_857, %c8_858] : memref<4x20x20xf32, #tpu.memory_space<vmem>>, vector<1x1x4xf32>
    %606 = vector.shape_cast %605 : vector<1x1x4xf32> to vector<1x4xf32>
    %c0_859 = arith.constant 0 : index
    %c15_860 = arith.constant 15 : index
    %c8_861 = arith.constant 8 : index
    %607 = vector.load %arg4[%c0_859, %c15_860, %c8_861] : memref<4x20x20xf32, #tpu.memory_space<vmem>>, vector<1x1x4xf32>
    %608 = vector.shape_cast %607 : vector<1x1x4xf32> to vector<1x4xf32>
    %c1_862 = arith.constant 1 : index
    %c12_863 = arith.constant 12 : index
    %c8_864 = arith.constant 8 : index
    %609 = vector.load %arg4[%c1_862, %c12_863, %c8_864] : memref<4x20x20xf32, #tpu.memory_space<vmem>>, vector<1x1x4xf32>
    %610 = vector.shape_cast %609 : vector<1x1x4xf32> to vector<1x4xf32>
    %c1_865 = arith.constant 1 : index
    %c13_866 = arith.constant 13 : index
    %c8_867 = arith.constant 8 : index
    %611 = vector.load %arg4[%c1_865, %c13_866, %c8_867] : memref<4x20x20xf32, #tpu.memory_space<vmem>>, vector<1x1x4xf32>
    %612 = vector.shape_cast %611 : vector<1x1x4xf32> to vector<1x4xf32>
    %c1_868 = arith.constant 1 : index
    %c14_869 = arith.constant 14 : index
    %c8_870 = arith.constant 8 : index
    %613 = vector.load %arg4[%c1_868, %c14_869, %c8_870] : memref<4x20x20xf32, #tpu.memory_space<vmem>>, vector<1x1x4xf32>
    %614 = vector.shape_cast %613 : vector<1x1x4xf32> to vector<1x4xf32>
    %c1_871 = arith.constant 1 : index
    %c15_872 = arith.constant 15 : index
    %c8_873 = arith.constant 8 : index
    %615 = vector.load %arg4[%c1_871, %c15_872, %c8_873] : memref<4x20x20xf32, #tpu.memory_space<vmem>>, vector<1x1x4xf32>
    %616 = vector.shape_cast %615 : vector<1x1x4xf32> to vector<1x4xf32>
    %c2_874 = arith.constant 2 : index
    %c12_875 = arith.constant 12 : index
    %c8_876 = arith.constant 8 : index
    %617 = vector.load %arg4[%c2_874, %c12_875, %c8_876] : memref<4x20x20xf32, #tpu.memory_space<vmem>>, vector<1x1x4xf32>
    %618 = vector.shape_cast %617 : vector<1x1x4xf32> to vector<1x4xf32>
    %c2_877 = arith.constant 2 : index
    %c13_878 = arith.constant 13 : index
    %c8_879 = arith.constant 8 : index
    %619 = vector.load %arg4[%c2_877, %c13_878, %c8_879] : memref<4x20x20xf32, #tpu.memory_space<vmem>>, vector<1x1x4xf32>
    %620 = vector.shape_cast %619 : vector<1x1x4xf32> to vector<1x4xf32>
    %c2_880 = arith.constant 2 : index
    %c14_881 = arith.constant 14 : index
    %c8_882 = arith.constant 8 : index
    %621 = vector.load %arg4[%c2_880, %c14_881, %c8_882] : memref<4x20x20xf32, #tpu.memory_space<vmem>>, vector<1x1x4xf32>
    %622 = vector.shape_cast %621 : vector<1x1x4xf32> to vector<1x4xf32>
    %c2_883 = arith.constant 2 : index
    %c15_884 = arith.constant 15 : index
    %c8_885 = arith.constant 8 : index
    %623 = vector.load %arg4[%c2_883, %c15_884, %c8_885] : memref<4x20x20xf32, #tpu.memory_space<vmem>>, vector<1x1x4xf32>
    %624 = vector.shape_cast %623 : vector<1x1x4xf32> to vector<1x4xf32>
    %c3_886 = arith.constant 3 : index
    %c12_887 = arith.constant 12 : index
    %c8_888 = arith.constant 8 : index
    %625 = vector.load %arg4[%c3_886, %c12_887, %c8_888] : memref<4x20x20xf32, #tpu.memory_space<vmem>>, vector<1x1x4xf32>
    %626 = vector.shape_cast %625 : vector<1x1x4xf32> to vector<1x4xf32>
    %c3_889 = arith.constant 3 : index
    %c13_890 = arith.constant 13 : index
    %c8_891 = arith.constant 8 : index
    %627 = vector.load %arg4[%c3_889, %c13_890, %c8_891] : memref<4x20x20xf32, #tpu.memory_space<vmem>>, vector<1x1x4xf32>
    %628 = vector.shape_cast %627 : vector<1x1x4xf32> to vector<1x4xf32>
    %c3_892 = arith.constant 3 : index
    %c14_893 = arith.constant 14 : index
    %c8_894 = arith.constant 8 : index
    %629 = vector.load %arg4[%c3_892, %c14_893, %c8_894] : memref<4x20x20xf32, #tpu.memory_space<vmem>>, vector<1x1x4xf32>
    %630 = vector.shape_cast %629 : vector<1x1x4xf32> to vector<1x4xf32>
    %c3_895 = arith.constant 3 : index
    %c15_896 = arith.constant 15 : index
    %c8_897 = arith.constant 8 : index
    %631 = vector.load %arg4[%c3_895, %c15_896, %c8_897] : memref<4x20x20xf32, #tpu.memory_space<vmem>>, vector<1x1x4xf32>
    %632 = vector.shape_cast %631 : vector<1x1x4xf32> to vector<1x4xf32>
    %633 = tpu.concatenate %602, %604, %606, %608, %610, %612, %614, %616, %618, %620, %622, %624, %626, %628, %630, %632 in 1 : vector<1x4xf32>, vector<1x4xf32>, vector<1x4xf32>, vector<1x4xf32>, vector<1x4xf32>, vector<1x4xf32>, vector<1x4xf32>, vector<1x4xf32>, vector<1x4xf32>, vector<1x4xf32>, vector<1x4xf32>, vector<1x4xf32>, vector<1x4xf32>, vector<1x4xf32>, vector<1x4xf32>, vector<1x4xf32> -> vector<1x64xf32>
    %c0_898 = arith.constant 0 : index
    %c12_899 = arith.constant 12 : index
    %c12_900 = arith.constant 12 : index
    %634 = vector.load %arg4[%c0_898, %c12_899, %c12_900] : memref<4x20x20xf32, #tpu.memory_space<vmem>>, vector<1x1x4xf32>
    %635 = vector.shape_cast %634 : vector<1x1x4xf32> to vector<1x4xf32>
    %c0_901 = arith.constant 0 : index
    %c13_902 = arith.constant 13 : index
    %c12_903 = arith.constant 12 : index
    %636 = vector.load %arg4[%c0_901, %c13_902, %c12_903] : memref<4x20x20xf32, #tpu.memory_space<vmem>>, vector<1x1x4xf32>
    %637 = vector.shape_cast %636 : vector<1x1x4xf32> to vector<1x4xf32>
    %c0_904 = arith.constant 0 : index
    %c14_905 = arith.constant 14 : index
    %c12_906 = arith.constant 12 : index
    %638 = vector.load %arg4[%c0_904, %c14_905, %c12_906] : memref<4x20x20xf32, #tpu.memory_space<vmem>>, vector<1x1x4xf32>
    %639 = vector.shape_cast %638 : vector<1x1x4xf32> to vector<1x4xf32>
    %c0_907 = arith.constant 0 : index
    %c15_908 = arith.constant 15 : index
    %c12_909 = arith.constant 12 : index
    %640 = vector.load %arg4[%c0_907, %c15_908, %c12_909] : memref<4x20x20xf32, #tpu.memory_space<vmem>>, vector<1x1x4xf32>
    %641 = vector.shape_cast %640 : vector<1x1x4xf32> to vector<1x4xf32>
    %c1_910 = arith.constant 1 : index
    %c12_911 = arith.constant 12 : index
    %c12_912 = arith.constant 12 : index
    %642 = vector.load %arg4[%c1_910, %c12_911, %c12_912] : memref<4x20x20xf32, #tpu.memory_space<vmem>>, vector<1x1x4xf32>
    %643 = vector.shape_cast %642 : vector<1x1x4xf32> to vector<1x4xf32>
    %c1_913 = arith.constant 1 : index
    %c13_914 = arith.constant 13 : index
    %c12_915 = arith.constant 12 : index
    %644 = vector.load %arg4[%c1_913, %c13_914, %c12_915] : memref<4x20x20xf32, #tpu.memory_space<vmem>>, vector<1x1x4xf32>
    %645 = vector.shape_cast %644 : vector<1x1x4xf32> to vector<1x4xf32>
    %c1_916 = arith.constant 1 : index
    %c14_917 = arith.constant 14 : index
    %c12_918 = arith.constant 12 : index
    %646 = vector.load %arg4[%c1_916, %c14_917, %c12_918] : memref<4x20x20xf32, #tpu.memory_space<vmem>>, vector<1x1x4xf32>
    %647 = vector.shape_cast %646 : vector<1x1x4xf32> to vector<1x4xf32>
    %c1_919 = arith.constant 1 : index
    %c15_920 = arith.constant 15 : index
    %c12_921 = arith.constant 12 : index
    %648 = vector.load %arg4[%c1_919, %c15_920, %c12_921] : memref<4x20x20xf32, #tpu.memory_space<vmem>>, vector<1x1x4xf32>
    %649 = vector.shape_cast %648 : vector<1x1x4xf32> to vector<1x4xf32>
    %c2_922 = arith.constant 2 : index
    %c12_923 = arith.constant 12 : index
    %c12_924 = arith.constant 12 : index
    %650 = vector.load %arg4[%c2_922, %c12_923, %c12_924] : memref<4x20x20xf32, #tpu.memory_space<vmem>>, vector<1x1x4xf32>
    %651 = vector.shape_cast %650 : vector<1x1x4xf32> to vector<1x4xf32>
    %c2_925 = arith.constant 2 : index
    %c13_926 = arith.constant 13 : index
    %c12_927 = arith.constant 12 : index
    %652 = vector.load %arg4[%c2_925, %c13_926, %c12_927] : memref<4x20x20xf32, #tpu.memory_space<vmem>>, vector<1x1x4xf32>
    %653 = vector.shape_cast %652 : vector<1x1x4xf32> to vector<1x4xf32>
    %c2_928 = arith.constant 2 : index
    %c14_929 = arith.constant 14 : index
    %c12_930 = arith.constant 12 : index
    %654 = vector.load %arg4[%c2_928, %c14_929, %c12_930] : memref<4x20x20xf32, #tpu.memory_space<vmem>>, vector<1x1x4xf32>
    %655 = vector.shape_cast %654 : vector<1x1x4xf32> to vector<1x4xf32>
    %c2_931 = arith.constant 2 : index
    %c15_932 = arith.constant 15 : index
    %c12_933 = arith.constant 12 : index
    %656 = vector.load %arg4[%c2_931, %c15_932, %c12_933] : memref<4x20x20xf32, #tpu.memory_space<vmem>>, vector<1x1x4xf32>
    %657 = vector.shape_cast %656 : vector<1x1x4xf32> to vector<1x4xf32>
    %c3_934 = arith.constant 3 : index
    %c12_935 = arith.constant 12 : index
    %c12_936 = arith.constant 12 : index
    %658 = vector.load %arg4[%c3_934, %c12_935, %c12_936] : memref<4x20x20xf32, #tpu.memory_space<vmem>>, vector<1x1x4xf32>
    %659 = vector.shape_cast %658 : vector<1x1x4xf32> to vector<1x4xf32>
    %c3_937 = arith.constant 3 : index
    %c13_938 = arith.constant 13 : index
    %c12_939 = arith.constant 12 : index
    %660 = vector.load %arg4[%c3_937, %c13_938, %c12_939] : memref<4x20x20xf32, #tpu.memory_space<vmem>>, vector<1x1x4xf32>
    %661 = vector.shape_cast %660 : vector<1x1x4xf32> to vector<1x4xf32>
    %c3_940 = arith.constant 3 : index
    %c14_941 = arith.constant 14 : index
    %c12_942 = arith.constant 12 : index
    %662 = vector.load %arg4[%c3_940, %c14_941, %c12_942] : memref<4x20x20xf32, #tpu.memory_space<vmem>>, vector<1x1x4xf32>
    %663 = vector.shape_cast %662 : vector<1x1x4xf32> to vector<1x4xf32>
    %c3_943 = arith.constant 3 : index
    %c15_944 = arith.constant 15 : index
    %c12_945 = arith.constant 12 : index
    %664 = vector.load %arg4[%c3_943, %c15_944, %c12_945] : memref<4x20x20xf32, #tpu.memory_space<vmem>>, vector<1x1x4xf32>
    %665 = vector.shape_cast %664 : vector<1x1x4xf32> to vector<1x4xf32>
    %666 = tpu.concatenate %635, %637, %639, %641, %643, %645, %647, %649, %651, %653, %655, %657, %659, %661, %663, %665 in 1 : vector<1x4xf32>, vector<1x4xf32>, vector<1x4xf32>, vector<1x4xf32>, vector<1x4xf32>, vector<1x4xf32>, vector<1x4xf32>, vector<1x4xf32>, vector<1x4xf32>, vector<1x4xf32>, vector<1x4xf32>, vector<1x4xf32>, vector<1x4xf32>, vector<1x4xf32>, vector<1x4xf32>, vector<1x4xf32> -> vector<1x64xf32>
    %c0_946 = arith.constant 0 : index
    %c12_947 = arith.constant 12 : index
    %c16_948 = arith.constant 16 : index
    %667 = vector.load %arg4[%c0_946, %c12_947, %c16_948] : memref<4x20x20xf32, #tpu.memory_space<vmem>>, vector<1x1x4xf32>
    %668 = vector.shape_cast %667 : vector<1x1x4xf32> to vector<1x4xf32>
    %c0_949 = arith.constant 0 : index
    %c13_950 = arith.constant 13 : index
    %c16_951 = arith.constant 16 : index
    %669 = vector.load %arg4[%c0_949, %c13_950, %c16_951] : memref<4x20x20xf32, #tpu.memory_space<vmem>>, vector<1x1x4xf32>
    %670 = vector.shape_cast %669 : vector<1x1x4xf32> to vector<1x4xf32>
    %c0_952 = arith.constant 0 : index
    %c14_953 = arith.constant 14 : index
    %c16_954 = arith.constant 16 : index
    %671 = vector.load %arg4[%c0_952, %c14_953, %c16_954] : memref<4x20x20xf32, #tpu.memory_space<vmem>>, vector<1x1x4xf32>
    %672 = vector.shape_cast %671 : vector<1x1x4xf32> to vector<1x4xf32>
    %c0_955 = arith.constant 0 : index
    %c15_956 = arith.constant 15 : index
    %c16_957 = arith.constant 16 : index
    %673 = vector.load %arg4[%c0_955, %c15_956, %c16_957] : memref<4x20x20xf32, #tpu.memory_space<vmem>>, vector<1x1x4xf32>
    %674 = vector.shape_cast %673 : vector<1x1x4xf32> to vector<1x4xf32>
    %c1_958 = arith.constant 1 : index
    %c12_959 = arith.constant 12 : index
    %c16_960 = arith.constant 16 : index
    %675 = vector.load %arg4[%c1_958, %c12_959, %c16_960] : memref<4x20x20xf32, #tpu.memory_space<vmem>>, vector<1x1x4xf32>
    %676 = vector.shape_cast %675 : vector<1x1x4xf32> to vector<1x4xf32>
    %c1_961 = arith.constant 1 : index
    %c13_962 = arith.constant 13 : index
    %c16_963 = arith.constant 16 : index
    %677 = vector.load %arg4[%c1_961, %c13_962, %c16_963] : memref<4x20x20xf32, #tpu.memory_space<vmem>>, vector<1x1x4xf32>
    %678 = vector.shape_cast %677 : vector<1x1x4xf32> to vector<1x4xf32>
    %c1_964 = arith.constant 1 : index
    %c14_965 = arith.constant 14 : index
    %c16_966 = arith.constant 16 : index
    %679 = vector.load %arg4[%c1_964, %c14_965, %c16_966] : memref<4x20x20xf32, #tpu.memory_space<vmem>>, vector<1x1x4xf32>
    %680 = vector.shape_cast %679 : vector<1x1x4xf32> to vector<1x4xf32>
    %c1_967 = arith.constant 1 : index
    %c15_968 = arith.constant 15 : index
    %c16_969 = arith.constant 16 : index
    %681 = vector.load %arg4[%c1_967, %c15_968, %c16_969] : memref<4x20x20xf32, #tpu.memory_space<vmem>>, vector<1x1x4xf32>
    %682 = vector.shape_cast %681 : vector<1x1x4xf32> to vector<1x4xf32>
    %c2_970 = arith.constant 2 : index
    %c12_971 = arith.constant 12 : index
    %c16_972 = arith.constant 16 : index
    %683 = vector.load %arg4[%c2_970, %c12_971, %c16_972] : memref<4x20x20xf32, #tpu.memory_space<vmem>>, vector<1x1x4xf32>
    %684 = vector.shape_cast %683 : vector<1x1x4xf32> to vector<1x4xf32>
    %c2_973 = arith.constant 2 : index
    %c13_974 = arith.constant 13 : index
    %c16_975 = arith.constant 16 : index
    %685 = vector.load %arg4[%c2_973, %c13_974, %c16_975] : memref<4x20x20xf32, #tpu.memory_space<vmem>>, vector<1x1x4xf32>
    %686 = vector.shape_cast %685 : vector<1x1x4xf32> to vector<1x4xf32>
    %c2_976 = arith.constant 2 : index
    %c14_977 = arith.constant 14 : index
    %c16_978 = arith.constant 16 : index
    %687 = vector.load %arg4[%c2_976, %c14_977, %c16_978] : memref<4x20x20xf32, #tpu.memory_space<vmem>>, vector<1x1x4xf32>
    %688 = vector.shape_cast %687 : vector<1x1x4xf32> to vector<1x4xf32>
    %c2_979 = arith.constant 2 : index
    %c15_980 = arith.constant 15 : index
    %c16_981 = arith.constant 16 : index
    %689 = vector.load %arg4[%c2_979, %c15_980, %c16_981] : memref<4x20x20xf32, #tpu.memory_space<vmem>>, vector<1x1x4xf32>
    %690 = vector.shape_cast %689 : vector<1x1x4xf32> to vector<1x4xf32>
    %c3_982 = arith.constant 3 : index
    %c12_983 = arith.constant 12 : index
    %c16_984 = arith.constant 16 : index
    %691 = vector.load %arg4[%c3_982, %c12_983, %c16_984] : memref<4x20x20xf32, #tpu.memory_space<vmem>>, vector<1x1x4xf32>
    %692 = vector.shape_cast %691 : vector<1x1x4xf32> to vector<1x4xf32>
    %c3_985 = arith.constant 3 : index
    %c13_986 = arith.constant 13 : index
    %c16_987 = arith.constant 16 : index
    %693 = vector.load %arg4[%c3_985, %c13_986, %c16_987] : memref<4x20x20xf32, #tpu.memory_space<vmem>>, vector<1x1x4xf32>
    %694 = vector.shape_cast %693 : vector<1x1x4xf32> to vector<1x4xf32>
    %c3_988 = arith.constant 3 : index
    %c14_989 = arith.constant 14 : index
    %c16_990 = arith.constant 16 : index
    %695 = vector.load %arg4[%c3_988, %c14_989, %c16_990] : memref<4x20x20xf32, #tpu.memory_space<vmem>>, vector<1x1x4xf32>
    %696 = vector.shape_cast %695 : vector<1x1x4xf32> to vector<1x4xf32>
    %c3_991 = arith.constant 3 : index
    %c15_992 = arith.constant 15 : index
    %c16_993 = arith.constant 16 : index
    %697 = vector.load %arg4[%c3_991, %c15_992, %c16_993] : memref<4x20x20xf32, #tpu.memory_space<vmem>>, vector<1x1x4xf32>
    %698 = vector.shape_cast %697 : vector<1x1x4xf32> to vector<1x4xf32>
    %699 = tpu.concatenate %668, %670, %672, %674, %676, %678, %680, %682, %684, %686, %688, %690, %692, %694, %696, %698 in 1 : vector<1x4xf32>, vector<1x4xf32>, vector<1x4xf32>, vector<1x4xf32>, vector<1x4xf32>, vector<1x4xf32>, vector<1x4xf32>, vector<1x4xf32>, vector<1x4xf32>, vector<1x4xf32>, vector<1x4xf32>, vector<1x4xf32>, vector<1x4xf32>, vector<1x4xf32>, vector<1x4xf32>, vector<1x4xf32> -> vector<1x64xf32>
    %700 = tpu.concatenate %567, %600, %633, %666, %699 in 0 : vector<1x64xf32>, vector<1x64xf32>, vector<1x64xf32>, vector<1x64xf32>, vector<1x64xf32> -> vector<5x64xf32>
    %c0_994 = arith.constant 0 : index
    %c15_995 = arith.constant 15 : index
    %c0_996 = arith.constant 0 : index
    %701 = vector.load %arg3[%c0_994, %c15_995, %c0_996] : memref<1x25x64xf32, #tpu.memory_space<vmem>>, vector<1x5x64xf32>
    %702 = vector.shape_cast %701 : vector<1x5x64xf32> to vector<5x64xf32>
    %703 = vector.shape_cast %700 : vector<5x64xf32> to vector<1x5x64xf32>
    tpu.vector_store %arg3[%c0_994, %c15_995, %c0_996], %703 {strides = array<i32>} : memref<1x25x64xf32, #tpu.memory_space<vmem>>, vector<1x5x64xf32>,
    %c0_997 = arith.constant 0 : index
    %c16_998 = arith.constant 16 : index
    %c0_999 = arith.constant 0 : index
    %704 = vector.load %arg4[%c0_997, %c16_998, %c0_999] : memref<4x20x20xf32, #tpu.memory_space<vmem>>, vector<1x1x4xf32>
    %705 = vector.shape_cast %704 : vector<1x1x4xf32> to vector<1x4xf32>
    %c0_1000 = arith.constant 0 : index
    %c17 = arith.constant 17 : index
    %c0_1001 = arith.constant 0 : index
    %706 = vector.load %arg4[%c0_1000, %c17, %c0_1001] : memref<4x20x20xf32, #tpu.memory_space<vmem>>, vector<1x1x4xf32>
    %707 = vector.shape_cast %706 : vector<1x1x4xf32> to vector<1x4xf32>
    %c0_1002 = arith.constant 0 : index
    %c18_1003 = arith.constant 18 : index
    %c0_1004 = arith.constant 0 : index
    %708 = vector.load %arg4[%c0_1002, %c18_1003, %c0_1004] : memref<4x20x20xf32, #tpu.memory_space<vmem>>, vector<1x1x4xf32>
    %709 = vector.shape_cast %708 : vector<1x1x4xf32> to vector<1x4xf32>
    %c0_1005 = arith.constant 0 : index
    %c19 = arith.constant 19 : index
    %c0_1006 = arith.constant 0 : index
    %710 = vector.load %arg4[%c0_1005, %c19, %c0_1006] : memref<4x20x20xf32, #tpu.memory_space<vmem>>, vector<1x1x4xf32>
    %711 = vector.shape_cast %710 : vector<1x1x4xf32> to vector<1x4xf32>
    %c1_1007 = arith.constant 1 : index
    %c16_1008 = arith.constant 16 : index
    %c0_1009 = arith.constant 0 : index
    %712 = vector.load %arg4[%c1_1007, %c16_1008, %c0_1009] : memref<4x20x20xf32, #tpu.memory_space<vmem>>, vector<1x1x4xf32>
    %713 = vector.shape_cast %712 : vector<1x1x4xf32> to vector<1x4xf32>
    %c1_1010 = arith.constant 1 : index
    %c17_1011 = arith.constant 17 : index
    %c0_1012 = arith.constant 0 : index
    %714 = vector.load %arg4[%c1_1010, %c17_1011, %c0_1012] : memref<4x20x20xf32, #tpu.memory_space<vmem>>, vector<1x1x4xf32>
    %715 = vector.shape_cast %714 : vector<1x1x4xf32> to vector<1x4xf32>
    %c1_1013 = arith.constant 1 : index
    %c18_1014 = arith.constant 18 : index
    %c0_1015 = arith.constant 0 : index
    %716 = vector.load %arg4[%c1_1013, %c18_1014, %c0_1015] : memref<4x20x20xf32, #tpu.memory_space<vmem>>, vector<1x1x4xf32>
    %717 = vector.shape_cast %716 : vector<1x1x4xf32> to vector<1x4xf32>
    %c1_1016 = arith.constant 1 : index
    %c19_1017 = arith.constant 19 : index
    %c0_1018 = arith.constant 0 : index
    %718 = vector.load %arg4[%c1_1016, %c19_1017, %c0_1018] : memref<4x20x20xf32, #tpu.memory_space<vmem>>, vector<1x1x4xf32>
    %719 = vector.shape_cast %718 : vector<1x1x4xf32> to vector<1x4xf32>
    %c2_1019 = arith.constant 2 : index
    %c16_1020 = arith.constant 16 : index
    %c0_1021 = arith.constant 0 : index
    %720 = vector.load %arg4[%c2_1019, %c16_1020, %c0_1021] : memref<4x20x20xf32, #tpu.memory_space<vmem>>, vector<1x1x4xf32>
    %721 = vector.shape_cast %720 : vector<1x1x4xf32> to vector<1x4xf32>
    %c2_1022 = arith.constant 2 : index
    %c17_1023 = arith.constant 17 : index
    %c0_1024 = arith.constant 0 : index
    %722 = vector.load %arg4[%c2_1022, %c17_1023, %c0_1024] : memref<4x20x20xf32, #tpu.memory_space<vmem>>, vector<1x1x4xf32>
    %723 = vector.shape_cast %722 : vector<1x1x4xf32> to vector<1x4xf32>
    %c2_1025 = arith.constant 2 : index
    %c18_1026 = arith.constant 18 : index
    %c0_1027 = arith.constant 0 : index
    %724 = vector.load %arg4[%c2_1025, %c18_1026, %c0_1027] : memref<4x20x20xf32, #tpu.memory_space<vmem>>, vector<1x1x4xf32>
    %725 = vector.shape_cast %724 : vector<1x1x4xf32> to vector<1x4xf32>
    %c2_1028 = arith.constant 2 : index
    %c19_1029 = arith.constant 19 : index
    %c0_1030 = arith.constant 0 : index
    %726 = vector.load %arg4[%c2_1028, %c19_1029, %c0_1030] : memref<4x20x20xf32, #tpu.memory_space<vmem>>, vector<1x1x4xf32>
    %727 = vector.shape_cast %726 : vector<1x1x4xf32> to vector<1x4xf32>
    %c3_1031 = arith.constant 3 : index
    %c16_1032 = arith.constant 16 : index
    %c0_1033 = arith.constant 0 : index
    %728 = vector.load %arg4[%c3_1031, %c16_1032, %c0_1033] : memref<4x20x20xf32, #tpu.memory_space<vmem>>, vector<1x1x4xf32>
    %729 = vector.shape_cast %728 : vector<1x1x4xf32> to vector<1x4xf32>
    %c3_1034 = arith.constant 3 : index
    %c17_1035 = arith.constant 17 : index
    %c0_1036 = arith.constant 0 : index
    %730 = vector.load %arg4[%c3_1034, %c17_1035, %c0_1036] : memref<4x20x20xf32, #tpu.memory_space<vmem>>, vector<1x1x4xf32>
    %731 = vector.shape_cast %730 : vector<1x1x4xf32> to vector<1x4xf32>
    %c3_1037 = arith.constant 3 : index
    %c18_1038 = arith.constant 18 : index
    %c0_1039 = arith.constant 0 : index
    %732 = vector.load %arg4[%c3_1037, %c18_1038, %c0_1039] : memref<4x20x20xf32, #tpu.memory_space<vmem>>, vector<1x1x4xf32>
    %733 = vector.shape_cast %732 : vector<1x1x4xf32> to vector<1x4xf32>
    %c3_1040 = arith.constant 3 : index
    %c19_1041 = arith.constant 19 : index
    %c0_1042 = arith.constant 0 : index
    %734 = vector.load %arg4[%c3_1040, %c19_1041, %c0_1042] : memref<4x20x20xf32, #tpu.memory_space<vmem>>, vector<1x1x4xf32>
    %735 = vector.shape_cast %734 : vector<1x1x4xf32> to vector<1x4xf32>
    %736 = tpu.concatenate %705, %707, %709, %711, %713, %715, %717, %719, %721, %723, %725, %727, %729, %731, %733, %735 in 1 : vector<1x4xf32>, vector<1x4xf32>, vector<1x4xf32>, vector<1x4xf32>, vector<1x4xf32>, vector<1x4xf32>, vector<1x4xf32>, vector<1x4xf32>, vector<1x4xf32>, vector<1x4xf32>, vector<1x4xf32>, vector<1x4xf32>, vector<1x4xf32>, vector<1x4xf32>, vector<1x4xf32>, vector<1x4xf32> -> vector<1x64xf32>
    %c0_1043 = arith.constant 0 : index
    %c16_1044 = arith.constant 16 : index
    %c4_1045 = arith.constant 4 : index
    %737 = vector.load %arg4[%c0_1043, %c16_1044, %c4_1045] : memref<4x20x20xf32, #tpu.memory_space<vmem>>, vector<1x1x4xf32>
    %738 = vector.shape_cast %737 : vector<1x1x4xf32> to vector<1x4xf32>
    %c0_1046 = arith.constant 0 : index
    %c17_1047 = arith.constant 17 : index
    %c4_1048 = arith.constant 4 : index
    %739 = vector.load %arg4[%c0_1046, %c17_1047, %c4_1048] : memref<4x20x20xf32, #tpu.memory_space<vmem>>, vector<1x1x4xf32>
    %740 = vector.shape_cast %739 : vector<1x1x4xf32> to vector<1x4xf32>
    %c0_1049 = arith.constant 0 : index
    %c18_1050 = arith.constant 18 : index
    %c4_1051 = arith.constant 4 : index
    %741 = vector.load %arg4[%c0_1049, %c18_1050, %c4_1051] : memref<4x20x20xf32, #tpu.memory_space<vmem>>, vector<1x1x4xf32>
    %742 = vector.shape_cast %741 : vector<1x1x4xf32> to vector<1x4xf32>
    %c0_1052 = arith.constant 0 : index
    %c19_1053 = arith.constant 19 : index
    %c4_1054 = arith.constant 4 : index
    %743 = vector.load %arg4[%c0_1052, %c19_1053, %c4_1054] : memref<4x20x20xf32, #tpu.memory_space<vmem>>, vector<1x1x4xf32>
    %744 = vector.shape_cast %743 : vector<1x1x4xf32> to vector<1x4xf32>
    %c1_1055 = arith.constant 1 : index
    %c16_1056 = arith.constant 16 : index
    %c4_1057 = arith.constant 4 : index
    %745 = vector.load %arg4[%c1_1055, %c16_1056, %c4_1057] : memref<4x20x20xf32, #tpu.memory_space<vmem>>, vector<1x1x4xf32>
    %746 = vector.shape_cast %745 : vector<1x1x4xf32> to vector<1x4xf32>
    %c1_1058 = arith.constant 1 : index
    %c17_1059 = arith.constant 17 : index
    %c4_1060 = arith.constant 4 : index
    %747 = vector.load %arg4[%c1_1058, %c17_1059, %c4_1060] : memref<4x20x20xf32, #tpu.memory_space<vmem>>, vector<1x1x4xf32>
    %748 = vector.shape_cast %747 : vector<1x1x4xf32> to vector<1x4xf32>
    %c1_1061 = arith.constant 1 : index
    %c18_1062 = arith.constant 18 : index
    %c4_1063 = arith.constant 4 : index
    %749 = vector.load %arg4[%c1_1061, %c18_1062, %c4_1063] : memref<4x20x20xf32, #tpu.memory_space<vmem>>, vector<1x1x4xf32>
    %750 = vector.shape_cast %749 : vector<1x1x4xf32> to vector<1x4xf32>
    %c1_1064 = arith.constant 1 : index
    %c19_1065 = arith.constant 19 : index
    %c4_1066 = arith.constant 4 : index
    %751 = vector.load %arg4[%c1_1064, %c19_1065, %c4_1066] : memref<4x20x20xf32, #tpu.memory_space<vmem>>, vector<1x1x4xf32>
    %752 = vector.shape_cast %751 : vector<1x1x4xf32> to vector<1x4xf32>
    %c2_1067 = arith.constant 2 : index
    %c16_1068 = arith.constant 16 : index
    %c4_1069 = arith.constant 4 : index
    %753 = vector.load %arg4[%c2_1067, %c16_1068, %c4_1069] : memref<4x20x20xf32, #tpu.memory_space<vmem>>, vector<1x1x4xf32>
    %754 = vector.shape_cast %753 : vector<1x1x4xf32> to vector<1x4xf32>
    %c2_1070 = arith.constant 2 : index
    %c17_1071 = arith.constant 17 : index
    %c4_1072 = arith.constant 4 : index
    %755 = vector.load %arg4[%c2_1070, %c17_1071, %c4_1072] : memref<4x20x20xf32, #tpu.memory_space<vmem>>, vector<1x1x4xf32>
    %756 = vector.shape_cast %755 : vector<1x1x4xf32> to vector<1x4xf32>
    %c2_1073 = arith.constant 2 : index
    %c18_1074 = arith.constant 18 : index
    %c4_1075 = arith.constant 4 : index
    %757 = vector.load %arg4[%c2_1073, %c18_1074, %c4_1075] : memref<4x20x20xf32, #tpu.memory_space<vmem>>, vector<1x1x4xf32>
    %758 = vector.shape_cast %757 : vector<1x1x4xf32> to vector<1x4xf32>
    %c2_1076 = arith.constant 2 : index
    %c19_1077 = arith.constant 19 : index
    %c4_1078 = arith.constant 4 : index
    %759 = vector.load %arg4[%c2_1076, %c19_1077, %c4_1078] : memref<4x20x20xf32, #tpu.memory_space<vmem>>, vector<1x1x4xf32>
    %760 = vector.shape_cast %759 : vector<1x1x4xf32> to vector<1x4xf32>
    %c3_1079 = arith.constant 3 : index
    %c16_1080 = arith.constant 16 : index
    %c4_1081 = arith.constant 4 : index
    %761 = vector.load %arg4[%c3_1079, %c16_1080, %c4_1081] : memref<4x20x20xf32, #tpu.memory_space<vmem>>, vector<1x1x4xf32>
    %762 = vector.shape_cast %761 : vector<1x1x4xf32> to vector<1x4xf32>
    %c3_1082 = arith.constant 3 : index
    %c17_1083 = arith.constant 17 : index
    %c4_1084 = arith.constant 4 : index
    %763 = vector.load %arg4[%c3_1082, %c17_1083, %c4_1084] : memref<4x20x20xf32, #tpu.memory_space<vmem>>, vector<1x1x4xf32>
    %764 = vector.shape_cast %763 : vector<1x1x4xf32> to vector<1x4xf32>
    %c3_1085 = arith.constant 3 : index
    %c18_1086 = arith.constant 18 : index
    %c4_1087 = arith.constant 4 : index
    %765 = vector.load %arg4[%c3_1085, %c18_1086, %c4_1087] : memref<4x20x20xf32, #tpu.memory_space<vmem>>, vector<1x1x4xf32>
    %766 = vector.shape_cast %765 : vector<1x1x4xf32> to vector<1x4xf32>
    %c3_1088 = arith.constant 3 : index
    %c19_1089 = arith.constant 19 : index
    %c4_1090 = arith.constant 4 : index
    %767 = vector.load %arg4[%c3_1088, %c19_1089, %c4_1090] : memref<4x20x20xf32, #tpu.memory_space<vmem>>, vector<1x1x4xf32>
    %768 = vector.shape_cast %767 : vector<1x1x4xf32> to vector<1x4xf32>
    %769 = tpu.concatenate %738, %740, %742, %744, %746, %748, %750, %752, %754, %756, %758, %760, %762, %764, %766, %768 in 1 : vector<1x4xf32>, vector<1x4xf32>, vector<1x4xf32>, vector<1x4xf32>, vector<1x4xf32>, vector<1x4xf32>, vector<1x4xf32>, vector<1x4xf32>, vector<1x4xf32>, vector<1x4xf32>, vector<1x4xf32>, vector<1x4xf32>, vector<1x4xf32>, vector<1x4xf32>, vector<1x4xf32>, vector<1x4xf32> -> vector<1x64xf32>
    %c0_1091 = arith.constant 0 : index
    %c16_1092 = arith.constant 16 : index
    %c8_1093 = arith.constant 8 : index
    %770 = vector.load %arg4[%c0_1091, %c16_1092, %c8_1093] : memref<4x20x20xf32, #tpu.memory_space<vmem>>, vector<1x1x4xf32>
    %771 = vector.shape_cast %770 : vector<1x1x4xf32> to vector<1x4xf32>
    %c0_1094 = arith.constant 0 : index
    %c17_1095 = arith.constant 17 : index
    %c8_1096 = arith.constant 8 : index
    %772 = vector.load %arg4[%c0_1094, %c17_1095, %c8_1096] : memref<4x20x20xf32, #tpu.memory_space<vmem>>, vector<1x1x4xf32>
    %773 = vector.shape_cast %772 : vector<1x1x4xf32> to vector<1x4xf32>
    %c0_1097 = arith.constant 0 : index
    %c18_1098 = arith.constant 18 : index
    %c8_1099 = arith.constant 8 : index
    %774 = vector.load %arg4[%c0_1097, %c18_1098, %c8_1099] : memref<4x20x20xf32, #tpu.memory_space<vmem>>, vector<1x1x4xf32>
    %775 = vector.shape_cast %774 : vector<1x1x4xf32> to vector<1x4xf32>
    %c0_1100 = arith.constant 0 : index
    %c19_1101 = arith.constant 19 : index
    %c8_1102 = arith.constant 8 : index
    %776 = vector.load %arg4[%c0_1100, %c19_1101, %c8_1102] : memref<4x20x20xf32, #tpu.memory_space<vmem>>, vector<1x1x4xf32>
    %777 = vector.shape_cast %776 : vector<1x1x4xf32> to vector<1x4xf32>
    %c1_1103 = arith.constant 1 : index
    %c16_1104 = arith.constant 16 : index
    %c8_1105 = arith.constant 8 : index
    %778 = vector.load %arg4[%c1_1103, %c16_1104, %c8_1105] : memref<4x20x20xf32, #tpu.memory_space<vmem>>, vector<1x1x4xf32>
    %779 = vector.shape_cast %778 : vector<1x1x4xf32> to vector<1x4xf32>
    %c1_1106 = arith.constant 1 : index
    %c17_1107 = arith.constant 17 : index
    %c8_1108 = arith.constant 8 : index
    %780 = vector.load %arg4[%c1_1106, %c17_1107, %c8_1108] : memref<4x20x20xf32, #tpu.memory_space<vmem>>, vector<1x1x4xf32>
    %781 = vector.shape_cast %780 : vector<1x1x4xf32> to vector<1x4xf32>
    %c1_1109 = arith.constant 1 : index
    %c18_1110 = arith.constant 18 : index
    %c8_1111 = arith.constant 8 : index
    %782 = vector.load %arg4[%c1_1109, %c18_1110, %c8_1111] : memref<4x20x20xf32, #tpu.memory_space<vmem>>, vector<1x1x4xf32>
    %783 = vector.shape_cast %782 : vector<1x1x4xf32> to vector<1x4xf32>
    %c1_1112 = arith.constant 1 : index
    %c19_1113 = arith.constant 19 : index
    %c8_1114 = arith.constant 8 : index
    %784 = vector.load %arg4[%c1_1112, %c19_1113, %c8_1114] : memref<4x20x20xf32, #tpu.memory_space<vmem>>, vector<1x1x4xf32>
    %785 = vector.shape_cast %784 : vector<1x1x4xf32> to vector<1x4xf32>
    %c2_1115 = arith.constant 2 : index
    %c16_1116 = arith.constant 16 : index
    %c8_1117 = arith.constant 8 : index
    %786 = vector.load %arg4[%c2_1115, %c16_1116, %c8_1117] : memref<4x20x20xf32, #tpu.memory_space<vmem>>, vector<1x1x4xf32>
    %787 = vector.shape_cast %786 : vector<1x1x4xf32> to vector<1x4xf32>
    %c2_1118 = arith.constant 2 : index
    %c17_1119 = arith.constant 17 : index
    %c8_1120 = arith.constant 8 : index
    %788 = vector.load %arg4[%c2_1118, %c17_1119, %c8_1120] : memref<4x20x20xf32, #tpu.memory_space<vmem>>, vector<1x1x4xf32>
    %789 = vector.shape_cast %788 : vector<1x1x4xf32> to vector<1x4xf32>
    %c2_1121 = arith.constant 2 : index
    %c18_1122 = arith.constant 18 : index
    %c8_1123 = arith.constant 8 : index
    %790 = vector.load %arg4[%c2_1121, %c18_1122, %c8_1123] : memref<4x20x20xf32, #tpu.memory_space<vmem>>, vector<1x1x4xf32>
    %791 = vector.shape_cast %790 : vector<1x1x4xf32> to vector<1x4xf32>
    %c2_1124 = arith.constant 2 : index
    %c19_1125 = arith.constant 19 : index
    %c8_1126 = arith.constant 8 : index
    %792 = vector.load %arg4[%c2_1124, %c19_1125, %c8_1126] : memref<4x20x20xf32, #tpu.memory_space<vmem>>, vector<1x1x4xf32>
    %793 = vector.shape_cast %792 : vector<1x1x4xf32> to vector<1x4xf32>
    %c3_1127 = arith.constant 3 : index
    %c16_1128 = arith.constant 16 : index
    %c8_1129 = arith.constant 8 : index
    %794 = vector.load %arg4[%c3_1127, %c16_1128, %c8_1129] : memref<4x20x20xf32, #tpu.memory_space<vmem>>, vector<1x1x4xf32>
    %795 = vector.shape_cast %794 : vector<1x1x4xf32> to vector<1x4xf32>
    %c3_1130 = arith.constant 3 : index
    %c17_1131 = arith.constant 17 : index
    %c8_1132 = arith.constant 8 : index
    %796 = vector.load %arg4[%c3_1130, %c17_1131, %c8_1132] : memref<4x20x20xf32, #tpu.memory_space<vmem>>, vector<1x1x4xf32>
    %797 = vector.shape_cast %796 : vector<1x1x4xf32> to vector<1x4xf32>
    %c3_1133 = arith.constant 3 : index
    %c18_1134 = arith.constant 18 : index
    %c8_1135 = arith.constant 8 : index
    %798 = vector.load %arg4[%c3_1133, %c18_1134, %c8_1135] : memref<4x20x20xf32, #tpu.memory_space<vmem>>, vector<1x1x4xf32>
    %799 = vector.shape_cast %798 : vector<1x1x4xf32> to vector<1x4xf32>
    %c3_1136 = arith.constant 3 : index
    %c19_1137 = arith.constant 19 : index
    %c8_1138 = arith.constant 8 : index
    %800 = vector.load %arg4[%c3_1136, %c19_1137, %c8_1138] : memref<4x20x20xf32, #tpu.memory_space<vmem>>, vector<1x1x4xf32>
    %801 = vector.shape_cast %800 : vector<1x1x4xf32> to vector<1x4xf32>
    %802 = tpu.concatenate %771, %773, %775, %777, %779, %781, %783, %785, %787, %789, %791, %793, %795, %797, %799, %801 in 1 : vector<1x4xf32>, vector<1x4xf32>, vector<1x4xf32>, vector<1x4xf32>, vector<1x4xf32>, vector<1x4xf32>, vector<1x4xf32>, vector<1x4xf32>, vector<1x4xf32>, vector<1x4xf32>, vector<1x4xf32>, vector<1x4xf32>, vector<1x4xf32>, vector<1x4xf32>, vector<1x4xf32>, vector<1x4xf32> -> vector<1x64xf32>
    %c0_1139 = arith.constant 0 : index
    %c16_1140 = arith.constant 16 : index
    %c12_1141 = arith.constant 12 : index
    %803 = vector.load %arg4[%c0_1139, %c16_1140, %c12_1141] : memref<4x20x20xf32, #tpu.memory_space<vmem>>, vector<1x1x4xf32>
    %804 = vector.shape_cast %803 : vector<1x1x4xf32> to vector<1x4xf32>
    %c0_1142 = arith.constant 0 : index
    %c17_1143 = arith.constant 17 : index
    %c12_1144 = arith.constant 12 : index
    %805 = vector.load %arg4[%c0_1142, %c17_1143, %c12_1144] : memref<4x20x20xf32, #tpu.memory_space<vmem>>, vector<1x1x4xf32>
    %806 = vector.shape_cast %805 : vector<1x1x4xf32> to vector<1x4xf32>
    %c0_1145 = arith.constant 0 : index
    %c18_1146 = arith.constant 18 : index
    %c12_1147 = arith.constant 12 : index
    %807 = vector.load %arg4[%c0_1145, %c18_1146, %c12_1147] : memref<4x20x20xf32, #tpu.memory_space<vmem>>, vector<1x1x4xf32>
    %808 = vector.shape_cast %807 : vector<1x1x4xf32> to vector<1x4xf32>
    %c0_1148 = arith.constant 0 : index
    %c19_1149 = arith.constant 19 : index
    %c12_1150 = arith.constant 12 : index
    %809 = vector.load %arg4[%c0_1148, %c19_1149, %c12_1150] : memref<4x20x20xf32, #tpu.memory_space<vmem>>, vector<1x1x4xf32>
    %810 = vector.shape_cast %809 : vector<1x1x4xf32> to vector<1x4xf32>
    %c1_1151 = arith.constant 1 : index
    %c16_1152 = arith.constant 16 : index
    %c12_1153 = arith.constant 12 : index
    %811 = vector.load %arg4[%c1_1151, %c16_1152, %c12_1153] : memref<4x20x20xf32, #tpu.memory_space<vmem>>, vector<1x1x4xf32>
    %812 = vector.shape_cast %811 : vector<1x1x4xf32> to vector<1x4xf32>
    %c1_1154 = arith.constant 1 : index
    %c17_1155 = arith.constant 17 : index
    %c12_1156 = arith.constant 12 : index
    %813 = vector.load %arg4[%c1_1154, %c17_1155, %c12_1156] : memref<4x20x20xf32, #tpu.memory_space<vmem>>, vector<1x1x4xf32>
    %814 = vector.shape_cast %813 : vector<1x1x4xf32> to vector<1x4xf32>
    %c1_1157 = arith.constant 1 : index
    %c18_1158 = arith.constant 18 : index
    %c12_1159 = arith.constant 12 : index
    %815 = vector.load %arg4[%c1_1157, %c18_1158, %c12_1159] : memref<4x20x20xf32, #tpu.memory_space<vmem>>, vector<1x1x4xf32>
    %816 = vector.shape_cast %815 : vector<1x1x4xf32> to vector<1x4xf32>
    %c1_1160 = arith.constant 1 : index
    %c19_1161 = arith.constant 19 : index
    %c12_1162 = arith.constant 12 : index
    %817 = vector.load %arg4[%c1_1160, %c19_1161, %c12_1162] : memref<4x20x20xf32, #tpu.memory_space<vmem>>, vector<1x1x4xf32>
    %818 = vector.shape_cast %817 : vector<1x1x4xf32> to vector<1x4xf32>
    %c2_1163 = arith.constant 2 : index
    %c16_1164 = arith.constant 16 : index
    %c12_1165 = arith.constant 12 : index
    %819 = vector.load %arg4[%c2_1163, %c16_1164, %c12_1165] : memref<4x20x20xf32, #tpu.memory_space<vmem>>, vector<1x1x4xf32>
    %820 = vector.shape_cast %819 : vector<1x1x4xf32> to vector<1x4xf32>
    %c2_1166 = arith.constant 2 : index
    %c17_1167 = arith.constant 17 : index
    %c12_1168 = arith.constant 12 : index
    %821 = vector.load %arg4[%c2_1166, %c17_1167, %c12_1168] : memref<4x20x20xf32, #tpu.memory_space<vmem>>, vector<1x1x4xf32>
    %822 = vector.shape_cast %821 : vector<1x1x4xf32> to vector<1x4xf32>
    %c2_1169 = arith.constant 2 : index
    %c18_1170 = arith.constant 18 : index
    %c12_1171 = arith.constant 12 : index
    %823 = vector.load %arg4[%c2_1169, %c18_1170, %c12_1171] : memref<4x20x20xf32, #tpu.memory_space<vmem>>, vector<1x1x4xf32>
    %824 = vector.shape_cast %823 : vector<1x1x4xf32> to vector<1x4xf32>
    %c2_1172 = arith.constant 2 : index
    %c19_1173 = arith.constant 19 : index
    %c12_1174 = arith.constant 12 : index
    %825 = vector.load %arg4[%c2_1172, %c19_1173, %c12_1174] : memref<4x20x20xf32, #tpu.memory_space<vmem>>, vector<1x1x4xf32>
    %826 = vector.shape_cast %825 : vector<1x1x4xf32> to vector<1x4xf32>
    %c3_1175 = arith.constant 3 : index
    %c16_1176 = arith.constant 16 : index
    %c12_1177 = arith.constant 12 : index
    %827 = vector.load %arg4[%c3_1175, %c16_1176, %c12_1177] : memref<4x20x20xf32, #tpu.memory_space<vmem>>, vector<1x1x4xf32>
    %828 = vector.shape_cast %827 : vector<1x1x4xf32> to vector<1x4xf32>
    %c3_1178 = arith.constant 3 : index
    %c17_1179 = arith.constant 17 : index
    %c12_1180 = arith.constant 12 : index
    %829 = vector.load %arg4[%c3_1178, %c17_1179, %c12_1180] : memref<4x20x20xf32, #tpu.memory_space<vmem>>, vector<1x1x4xf32>
    %830 = vector.shape_cast %829 : vector<1x1x4xf32> to vector<1x4xf32>
    %c3_1181 = arith.constant 3 : index
    %c18_1182 = arith.constant 18 : index
    %c12_1183 = arith.constant 12 : index
    %831 = vector.load %arg4[%c3_1181, %c18_1182, %c12_1183] : memref<4x20x20xf32, #tpu.memory_space<vmem>>, vector<1x1x4xf32>
    %832 = vector.shape_cast %831 : vector<1x1x4xf32> to vector<1x4xf32>
    %c3_1184 = arith.constant 3 : index
    %c19_1185 = arith.constant 19 : index
    %c12_1186 = arith.constant 12 : index
    %833 = vector.load %arg4[%c3_1184, %c19_1185, %c12_1186] : memref<4x20x20xf32, #tpu.memory_space<vmem>>, vector<1x1x4xf32>
    %834 = vector.shape_cast %833 : vector<1x1x4xf32> to vector<1x4xf32>
    %835 = tpu.concatenate %804, %806, %808, %810, %812, %814, %816, %818, %820, %822, %824, %826, %828, %830, %832, %834 in 1 : vector<1x4xf32>, vector<1x4xf32>, vector<1x4xf32>, vector<1x4xf32>, vector<1x4xf32>, vector<1x4xf32>, vector<1x4xf32>, vector<1x4xf32>, vector<1x4xf32>, vector<1x4xf32>, vector<1x4xf32>, vector<1x4xf32>, vector<1x4xf32>, vector<1x4xf32>, vector<1x4xf32>, vector<1x4xf32> -> vector<1x64xf32>
    %c0_1187 = arith.constant 0 : index
    %c16_1188 = arith.constant 16 : index
    %c16_1189 = arith.constant 16 : index
    %836 = vector.load %arg4[%c0_1187, %c16_1188, %c16_1189] : memref<4x20x20xf32, #tpu.memory_space<vmem>>, vector<1x1x4xf32>
    %837 = vector.shape_cast %836 : vector<1x1x4xf32> to vector<1x4xf32>
    %c0_1190 = arith.constant 0 : index
    %c17_1191 = arith.constant 17 : index
    %c16_1192 = arith.constant 16 : index
    %838 = vector.load %arg4[%c0_1190, %c17_1191, %c16_1192] : memref<4x20x20xf32, #tpu.memory_space<vmem>>, vector<1x1x4xf32>
    %839 = vector.shape_cast %838 : vector<1x1x4xf32> to vector<1x4xf32>
    %c0_1193 = arith.constant 0 : index
    %c18_1194 = arith.constant 18 : index
    %c16_1195 = arith.constant 16 : index
    %840 = vector.load %arg4[%c0_1193, %c18_1194, %c16_1195] : memref<4x20x20xf32, #tpu.memory_space<vmem>>, vector<1x1x4xf32>
    %841 = vector.shape_cast %840 : vector<1x1x4xf32> to vector<1x4xf32>
    %c0_1196 = arith.constant 0 : index
    %c19_1197 = arith.constant 19 : index
    %c16_1198 = arith.constant 16 : index
    %842 = vector.load %arg4[%c0_1196, %c19_1197, %c16_1198] : memref<4x20x20xf32, #tpu.memory_space<vmem>>, vector<1x1x4xf32>
    %843 = vector.shape_cast %842 : vector<1x1x4xf32> to vector<1x4xf32>
    %c1_1199 = arith.constant 1 : index
    %c16_1200 = arith.constant 16 : index
    %c16_1201 = arith.constant 16 : index
    %844 = vector.load %arg4[%c1_1199, %c16_1200, %c16_1201] : memref<4x20x20xf32, #tpu.memory_space<vmem>>, vector<1x1x4xf32>
    %845 = vector.shape_cast %844 : vector<1x1x4xf32> to vector<1x4xf32>
    %c1_1202 = arith.constant 1 : index
    %c17_1203 = arith.constant 17 : index
    %c16_1204 = arith.constant 16 : index
    %846 = vector.load %arg4[%c1_1202, %c17_1203, %c16_1204] : memref<4x20x20xf32, #tpu.memory_space<vmem>>, vector<1x1x4xf32>
    %847 = vector.shape_cast %846 : vector<1x1x4xf32> to vector<1x4xf32>
    %c1_1205 = arith.constant 1 : index
    %c18_1206 = arith.constant 18 : index
    %c16_1207 = arith.constant 16 : index
    %848 = vector.load %arg4[%c1_1205, %c18_1206, %c16_1207] : memref<4x20x20xf32, #tpu.memory_space<vmem>>, vector<1x1x4xf32>
    %849 = vector.shape_cast %848 : vector<1x1x4xf32> to vector<1x4xf32>
    %c1_1208 = arith.constant 1 : index
    %c19_1209 = arith.constant 19 : index
    %c16_1210 = arith.constant 16 : index
    %850 = vector.load %arg4[%c1_1208, %c19_1209, %c16_1210] : memref<4x20x20xf32, #tpu.memory_space<vmem>>, vector<1x1x4xf32>
    %851 = vector.shape_cast %850 : vector<1x1x4xf32> to vector<1x4xf32>
    %c2_1211 = arith.constant 2 : index
    %c16_1212 = arith.constant 16 : index
    %c16_1213 = arith.constant 16 : index
    %852 = vector.load %arg4[%c2_1211, %c16_1212, %c16_1213] : memref<4x20x20xf32, #tpu.memory_space<vmem>>, vector<1x1x4xf32>
    %853 = vector.shape_cast %852 : vector<1x1x4xf32> to vector<1x4xf32>
    %c2_1214 = arith.constant 2 : index
    %c17_1215 = arith.constant 17 : index
    %c16_1216 = arith.constant 16 : index
    %854 = vector.load %arg4[%c2_1214, %c17_1215, %c16_1216] : memref<4x20x20xf32, #tpu.memory_space<vmem>>, vector<1x1x4xf32>
    %855 = vector.shape_cast %854 : vector<1x1x4xf32> to vector<1x4xf32>
    %c2_1217 = arith.constant 2 : index
    %c18_1218 = arith.constant 18 : index
    %c16_1219 = arith.constant 16 : index
    %856 = vector.load %arg4[%c2_1217, %c18_1218, %c16_1219] : memref<4x20x20xf32, #tpu.memory_space<vmem>>, vector<1x1x4xf32>
    %857 = vector.shape_cast %856 : vector<1x1x4xf32> to vector<1x4xf32>
    %c2_1220 = arith.constant 2 : index
    %c19_1221 = arith.constant 19 : index
    %c16_1222 = arith.constant 16 : index
    %858 = vector.load %arg4[%c2_1220, %c19_1221, %c16_1222] : memref<4x20x20xf32, #tpu.memory_space<vmem>>, vector<1x1x4xf32>
    %859 = vector.shape_cast %858 : vector<1x1x4xf32> to vector<1x4xf32>
    %c3_1223 = arith.constant 3 : index
    %c16_1224 = arith.constant 16 : index
    %c16_1225 = arith.constant 16 : index
    %860 = vector.load %arg4[%c3_1223, %c16_1224, %c16_1225] : memref<4x20x20xf32, #tpu.memory_space<vmem>>, vector<1x1x4xf32>
    %861 = vector.shape_cast %860 : vector<1x1x4xf32> to vector<1x4xf32>
    %c3_1226 = arith.constant 3 : index
    %c17_1227 = arith.constant 17 : index
    %c16_1228 = arith.constant 16 : index
    %862 = vector.load %arg4[%c3_1226, %c17_1227, %c16_1228] : memref<4x20x20xf32, #tpu.memory_space<vmem>>, vector<1x1x4xf32>
    %863 = vector.shape_cast %862 : vector<1x1x4xf32> to vector<1x4xf32>
    %c3_1229 = arith.constant 3 : index
    %c18_1230 = arith.constant 18 : index
    %c16_1231 = arith.constant 16 : index
    %864 = vector.load %arg4[%c3_1229, %c18_1230, %c16_1231] : memref<4x20x20xf32, #tpu.memory_space<vmem>>, vector<1x1x4xf32>
    %865 = vector.shape_cast %864 : vector<1x1x4xf32> to vector<1x4xf32>
    %c3_1232 = arith.constant 3 : index
    %c19_1233 = arith.constant 19 : index
    %c16_1234 = arith.constant 16 : index
    %866 = vector.load %arg4[%c3_1232, %c19_1233, %c16_1234] : memref<4x20x20xf32, #tpu.memory_space<vmem>>, vector<1x1x4xf32>
    %867 = vector.shape_cast %866 : vector<1x1x4xf32> to vector<1x4xf32>
    %868 = tpu.concatenate %837, %839, %841, %843, %845, %847, %849, %851, %853, %855, %857, %859, %861, %863, %865, %867 in 1 : vector<1x4xf32>, vector<1x4xf32>, vector<1x4xf32>, vector<1x4xf32>, vector<1x4xf32>, vector<1x4xf32>, vector<1x4xf32>, vector<1x4xf32>, vector<1x4xf32>, vector<1x4xf32>, vector<1x4xf32>, vector<1x4xf32>, vector<1x4xf32>, vector<1x4xf32>, vector<1x4xf32>, vector<1x4xf32> -> vector<1x64xf32>
    %869 = tpu.concatenate %736, %769, %802, %835, %868 in 0 : vector<1x64xf32>, vector<1x64xf32>, vector<1x64xf32>, vector<1x64xf32>, vector<1x64xf32> -> vector<5x64xf32>
    %c0_1235 = arith.constant 0 : index
    %c20 = arith.constant 20 : index
    %c0_1236 = arith.constant 0 : index
    %870 = vector.load %arg3[%c0_1235, %c20, %c0_1236] : memref<1x25x64xf32, #tpu.memory_space<vmem>>, vector<1x5x64xf32>
    %871 = vector.shape_cast %870 : vector<1x5x64xf32> to vector<5x64xf32>
    %872 = vector.shape_cast %869 : vector<5x64xf32> to vector<1x5x64xf32>
    tpu.vector_store %arg3[%c0_1235, %c20, %c0_1236], %872 {strides = array<i32>} : memref<1x25x64xf32, #tpu.memory_space<vmem>>, vector<1x5x64xf32>,
    return
  }
  func.func @transform_0(%arg0: i32, %arg1: i32) -> (i32, i32, i32, i32) {
    %c0_i32 = arith.constant 0 : i32
    %c0_i32_0 = arith.constant 0 : i32
    %c0_i32_1 = arith.constant 0 : i32
    return %arg0, %arg1, %c0_i32, %c0_i32_0 : i32, i32, i32, i32
  }
  func.func @transform_1(%arg0: i32, %arg1: i32) -> (i32, i32, i32) {
    %c0_i32 = arith.constant 0 : i32
    %c0_i32_0 = arith.constant 0 : i32
    return %arg0, %c0_i32, %arg1 : i32, i32, i32
  }
}

</mosaic_0001>

<llo_original>
// kernel: tpu_custom_call.1
$region0: #{tpu_custom_call.1}
  #allocation0 [shape = 'u32[]', space=smem, size = 0x4, offset = 0x4, fixed_abs, tag = 'smem constant byte address 0x4 - core index']
  #allocation1 [shape = 'u32[72,128]{1,0:T(1,128)}', space=vmem, size = 0x9000, scoped, tag = 'internal scratch']
  #allocation2 [shape = 'f32[4,20,20]{2,1,0:T(8,128)}', space=vmem, size = 0xc000, scoped, tag = 'scratch operand']
  %s0 = inlined_call_operand.hbm [shape: f32[2,4,16,16], index: 0, kind: input, shape index: {}]
  %s1 = inlined_call_operand.vmem [shape: f32[2,25,64], index: 1, kind: output, shape index: {}]
  %s2 = sld [smem:[#allocation0]]
  $region41: #{tpu_custom_call.1} parent=0
    _
  %s4 = ssub.s32 1, %s2
  %s5 = scalar_select 0, %s4, %s2
  $region1: #{tpu_custom_call.1} parent=0
    #allocation3 [shape = 'u8[65536]{0}', space=vmem, size = 0x10000, scoped, tag = 'input window, operand 0']
    #allocation4 [shape = 's32[2]{0}', space=sflag, size = 0x8, scoped, tag = 'scoped memory for tpu_custom_call.1']
    %6 = vsyncpa [#allocation4], 0
    %s7 = scalar_lea.sflag [#allocation4], 1
    %8 = vsyncpa %s7, 0
    loop: start=0, step=1, limit=4
    $region2: #{tpu_custom_call.1} parent=1 // loop_pre_header
      _
    $region3: #{tpu_custom_call.1} parent=1 // loop_header
      %s10 = sphi 0, %s14
      %p11 = scmp.ge.s32.totalorder %s10, 4
      %s17 = sphi 0, %s29
      %s18 = sphi 0, %s25
      %s19 = sphi 0, %s17
      %s20 = sphi 0, %s18
      %s21 = sphi 0, %s19
      %s22 = sphi 0, %s20
      %s34 = sphi 0, %s36
      %s37 = sphi 0, %s34
      %s38 = sphi 0, %s37
      %s54 = sphi 0, %s38
      %s62 = sphi 0, %s64
      %s65 = sphi 0, %s62
      %s66 = sphi 0, %s65
      %s82 = sphi 0, %s66
    $region4: #{tpu_custom_call.1} parent=1 // loop_header_branch
      %13 = sbr.rel (%p11) target = $region8
    $region5: #{tpu_custom_call.1} parent=1 // loop_body
      %s15 = ssub.s32 %s10, 1
      %s16 = ssub.s32 %s10, 2
      %s23 = sadd.s32 1, %s18
      %p24 = scmp.ge.s32.totalorder %s23, 1
      %s25 = scalar_select %p24, 0, %s23
      %s26 = sadd.s32 1, %s17
      %s27 = scalar_select %p24, %s26, %s17
      %p28 = scmp.ge.s32.totalorder %s27, 2
      %s29 = scalar_select %p28, 0, %s27
      %s30 = ssub.s32 %s17, %s29
      %s31 = ssub.s32 %s18, %s25
      %s32 = sor.u32 %s30, %s31
      %p33 = scmp.eq.s32.totalorder %s32, 0
      %s35 = sadd.s32 %s34, 1
      %s36 = scalar_select %p33, %s34, %s35
      %p39 = pneg %p33
      %p40 = scmp.eq.s32.totalorder %s10, 1
      %p41 = por %p39, %p40
      %p42 = scmp.ne.s32.totalorder %s34, %s37
      %p43 = scmp.eq.s32.totalorder %s10, 0
      %p44 = por %p42, %p43
      %p45 = scmp.ne.s32.totalorder %s34, %s37
      %p46 = scmp.eq.s32.totalorder %s15, 1
      %p47 = por %p45, %p46
      %p48 = scmp.ne.s32.totalorder %s37, %s38
      %p49 = scmp.eq.s32.totalorder %s15, 0
      %p50 = por %p48, %p49
      %p51 = scmp.ne.s32.totalorder %s37, %s38
      %p52 = scmp.eq.s32.totalorder %s16, 1
      %p53 = por %p51, %p52
      %p55 = scmp.ne.s32.totalorder %s38, %s54
      %p56 = scmp.eq.s32.totalorder %s16, 0
      %p57 = por %p55, %p56
      %s58 = ssub.s32 %s17, %s29
      %s59 = ssub.s32 %s18, %s25
      %s60 = sor.u32 %s58, %s59
      %p61 = scmp.eq.s32.totalorder %s60, 0
      %s63 = sadd.s32 %s62, 1
      %s64 = scalar_select %p61, %s62, %s63
      %p67 = pneg %p61
      %p68 = scmp.eq.s32.totalorder %s10, 1
      %p69 = por %p67, %p68
      %p70 = scmp.ne.s32.totalorder %s62, %s65
      %p71 = scmp.eq.s32.totalorder %s10, 0
      %p72 = por %p70, %p71
      %p73 = scmp.ne.s32.totalorder %s62, %s65
      %p74 = scmp.eq.s32.totalorder %s15, 1
      %p75 = por %p73, %p74
      %p76 = scmp.ne.s32.totalorder %s65, %s66
      %p77 = scmp.eq.s32.totalorder %s15, 0
      %p78 = por %p76, %p77
      %p79 = scmp.ne.s32.totalorder %s65, %s66
      %p80 = scmp.eq.s32.totalorder %s16, 1
      %p81 = por %p79, %p80
      %p83 = scmp.ne.s32.totalorder %s66, %s82
      %p84 = scmp.eq.s32.totalorder %s16, 0
      %p85 = por %p83, %p84
      %p86 = scmp.le.s32.totalorder 1, %s10
      %p87 = scmp.lt.s32.totalorder %s10, 3
      %p88 = pnand %p86, %p87
      %p89 = pneg %p88
      // Predicated region
      $region9: #{tpu_custom_call.1} parent=5 // pred_check
        _
      $region10: #{tpu_custom_call.1} parent=5 // pred_check_branch
        %91 = sbr.rel (%p88) target = $region12
      $region11: #{tpu_custom_call.1} parent=5 // pred_region
        %s92 = ssub.s32 %s10, 1
      $region12: #{tpu_custom_call.1} parent=5 // pred_fallthru
        _
      %p93 = scmp.lt.s32.totalorder %s10, 2
      // Predicated region
      $region13: #{tpu_custom_call.1} parent=5 // pred_check
        %p94 = pneg %p93
      $region14: #{tpu_custom_call.1} parent=5 // pred_check_branch
        %96 = sbr.rel (%p94) target = $region16
      $region15: #{tpu_custom_call.1} parent=5 // pred_region
        // Predicated region
        $region17: #{tpu_custom_call.1} parent=15 // pred_check
          %p97 = pneg %p44
        $region18: #{tpu_custom_call.1} parent=15 // pred_check_branch
          %99 = sbr.rel (%p97) target = $region20
        $region19: #{tpu_custom_call.1} parent=15 // pred_region
          %s100 = sand.u32 %s34, 1
          %s101 = scalar_lea.sflag [#allocation4], %s100
          %s102 = sand.u32 %s34, 1
          %s103 = smul.addr %s102, 64
          %s104 = scalar_lea.vmem [#allocation3], %s103
          %s105 = smul.u32 4, %s18
          %107 = vsyncadd %s101, 0
          %s108 = smul.addr %s105, 2
          %s109 = smul.addr %s17, 8
          %s110 = sadd.s32 %s108, %s109
          %s111 = smul.addr %s110, 8
          %s112 = scalar_lea.hbm %s0, %s111
          %s113 = sshll.u32 %s112, 4
          %s114 = int_to_ptr.hbm [resolvable:$true] %s113
          %s115 = sshll.u32 %s104, 4
          %s116 = int_to_ptr.vmem [resolvable:$true] %s115
          %121 = dma.hbm_to_vmem [thread:$0]  %s114, 1024, %s116, %s101, 128, 128, 8
        $region20: #{tpu_custom_call.1} parent=15 // pred_fallthru
          _
      $region16: #{tpu_custom_call.1} parent=5 // pred_fallthru
        _
      %p122 = scmp.le.s32.totalorder 1, %s10
      %p123 = scmp.lt.s32.totalorder %s10, 3
      %p124 = pnand %p122, %p123
      %p125 = pneg %p124
      // Predicated region
      $region21: #{tpu_custom_call.1} parent=5 // pred_check
        _
      $region22: #{tpu_custom_call.1} parent=5 // pred_check_branch
        %127 = sbr.rel (%p124) target = $region24
      $region23: #{tpu_custom_call.1} parent=5 // pred_region
        %s128 = ssub.s32 %s10, 1
        %s129 = sand.u32 %s37, 1
        %s130 = scalar_lea.sflag [#allocation4], %s129
        %s131 = sand.u32 %s37, 1
        %s132 = smul.addr %s131, 64
        %s133 = scalar_lea.vmem [#allocation3], %s132
        // Predicated region
        $region25: #{tpu_custom_call.1} parent=23 // pred_check
          %p134 = pneg %p50
        $region26: #{tpu_custom_call.1} parent=23 // pred_check_branch
          %136 = sbr.rel (%p134) target = $region28
        $region27: #{tpu_custom_call.1} parent=23 // pred_region
          %138 = dma.done %s130, 1024
        $region28: #{tpu_custom_call.1} parent=23 // pred_fallthru
          _
        %s139 = sand.u32 %s37, 1
        %s140 = scalar_lea.sflag [#allocation4], %s139
        %s141 = sand.u32 %s37, 1
        %s142 = smul.addr %s141, 64
        %s143 = scalar_lea.vmem [#allocation3], %s142
        %p144 = pneg %p50
        %p145 = pneg %p47
        %p146 = pneg %p78
        %p147 = pneg %p75
        %p148 = scmp.lt.s32.totalorder %s19, 1
        %s149 = scalar_select %p148, %s19, 1
        %p150 = scmp.lt.s32.totalorder %s20, 0
        %s151 = scalar_select %p150, %s20, 0
        %s152 = smul.addr %s149, 4
        %s153 = sadd.s32 %s151, %s152
        %s154 = smul.addr %s153, 8
        %s155 = scalar_lea.vmem %s1, %s154
        %s156 = smul.u32 4, %s20
        %p157 = scmp.lt.s32.totalorder %s19, 1
        %s158 = scalar_select %p157, %s19, 1
        %p159 = scmp.lt.s32.totalorder %s20, 0
        %s160 = scalar_select %p159, %s20, 0
        %s161 = smul.addr %s158, 4
        %s162 = sadd.s32 %s160, %s161
        %s163 = smul.addr %s162, 8
        %s164 = scalar_lea.vmem %s1, %s163
        %vm165 = vcmask 156672
        %166 = vst.msk [vmem:[#allocation2] sm:$0x3] %vm165, 0.0
        %167 = vst.msk [vmem:[#allocation2 + $0x18] sm:$0x3] %vm165, 0.0
        %168 = vst.msk [vmem:[#allocation2 + $0x30] sm:$0x3] %vm165, 0.0
        %169 = vst.msk [vmem:[#allocation2 + $0x48] sm:$0x3] %vm165, 0.0
        %170 = vst.msk [vmem:[#allocation2 + $0x12] sm:$0x3] %vm165, 0.0
        %171 = vst.msk [vmem:[#allocation2 + $0x2a] sm:$0x3] %vm165, 0.0
        %172 = vst.msk [vmem:[#allocation2 + $0x42] sm:$0x3] %vm165, 0.0
        %173 = vst.msk [vmem:[#allocation2 + $0x5a] sm:$0x3] %vm165, 0.0
        %vm174 = vcmask 15360
        %175 = vst.msk [vmem:[#allocation2 + $0x2] sm:$0xff] %vm174, 0.0
        %176 = vst.msk [vmem:[#allocation2 + $0xa] sm:$0xff] %vm174, 0.0
        %177 = vst.msk [vmem:[#allocation2 + $0x1a] sm:$0xff] %vm174, 0.0
        %178 = vst.msk [vmem:[#allocation2 + $0x22] sm:$0xff] %vm174, 0.0
        %179 = vst.msk [vmem:[#allocation2 + $0x32] sm:$0xff] %vm174, 0.0
        %180 = vst.msk [vmem:[#allocation2 + $0x3a] sm:$0xff] %vm174, 0.0
        %181 = vst.msk [vmem:[#allocation2 + $0x4a] sm:$0xff] %vm174, 0.0
        %182 = vst.msk [vmem:[#allocation2 + $0x52] sm:$0xff] %vm174, 0.0
        %vm183 = vcmask 162960
        %184 = vst.msk [vmem:[#allocation2 + $0x2] sm:$0xff] %vm183, 0.0
        %185 = vst.msk [vmem:[#allocation2 + $0xa] sm:$0xff] %vm183, 0.0
        %186 = vst.msk [vmem:[#allocation2 + $0x1a] sm:$0xff] %vm183, 0.0
        %187 = vst.msk [vmem:[#allocation2 + $0x22] sm:$0xff] %vm183, 0.0
        %188 = vst.msk [vmem:[#allocation2 + $0x32] sm:$0xff] %vm183, 0.0
        %189 = vst.msk [vmem:[#allocation2 + $0x3a] sm:$0xff] %vm183, 0.0
        %190 = vst.msk [vmem:[#allocation2 + $0x4a] sm:$0xff] %vm183, 0.0
        %191 = vst.msk [vmem:[#allocation2 + $0x52] sm:$0xff] %vm183, 0.0
        %v192 = vld [vmem:[%s133] sm:$0xff]
        %v193 = vld [vmem:[%s133 + $0x8] sm:$0xff]
        %196 = vrot.lane.b32.xlu0 %v192, 2
        %v197 = vpop.permute.xlu0 %196
        %198 = vrot.lane.b32.xlu0 %v193, 2
        %v199 = vpop.permute.xlu0 %198
        %vm202 = vcmask 146448
        %203 = vst.msk [vmem:[#allocation2 + $0x2] sm:$0xff] %vm202, %v197
        %204 = vst.msk [vmem:[#allocation2 + $0xa] sm:$0xff] %vm202, %v199
        %s205 = scalar_lea.vmem %s133, 16 [#allocation3]
        %v206 = vld [vmem:[%s205] sm:$0xff]
        %v207 = vld [vmem:[%s205 + $0x8] sm:$0xff]
        %210 = vrot.lane.b32.xlu0 %v206, 2
        %v211 = vpop.permute.xlu0 %210
        %212 = vrot.lane.b32.xlu0 %v207, 2
        %v213 = vpop.permute.xlu0 %212
        %s216 = scalar_lea.vmem [#allocation2], 24
        %217 = vst.msk [vmem:[%s216 + $0x2] sm:$0xff] %vm202, %v211
        %218 = vst.msk [vmem:[%s216 + $0xa] sm:$0xff] %vm202, %v213
        %s219 = scalar_lea.vmem %s133, 32 [#allocation3]
        %v220 = vld [vmem:[%s219] sm:$0xff]
        %v221 = vld [vmem:[%s219 + $0x8] sm:$0xff]
        %224 = vrot.lane.b32.xlu0 %v220, 2
        %v225 = vpop.permute.xlu0 %224
        %226 = vrot.lane.b32.xlu0 %v221, 2
        %v227 = vpop.permute.xlu0 %226
        %s230 = scalar_lea.vmem [#allocation2], 48
        %231 = vst.msk [vmem:[%s230 + $0x2] sm:$0xff] %vm202, %v225
        %232 = vst.msk [vmem:[%s230 + $0xa] sm:$0xff] %vm202, %v227
        %s233 = scalar_lea.vmem %s133, 48 [#allocation3]
        %v234 = vld [vmem:[%s233] sm:$0xff]
        %v235 = vld [vmem:[%s233 + $0x8] sm:$0xff]
        %238 = vrot.lane.b32.xlu0 %v234, 2
        %v239 = vpop.permute.xlu0 %238
        %240 = vrot.lane.b32.xlu0 %v235, 2
        %v241 = vpop.permute.xlu0 %240
        %s244 = scalar_lea.vmem [#allocation2], 72
        %245 = vst.msk [vmem:[%s244 + $0x2] sm:$0xff] %vm202, %v239
        %246 = vst.msk [vmem:[%s244 + $0xa] sm:$0xff] %vm202, %v241
        %v247 = vld [vmem:[#allocation2] sm:$0x1]
        %v248 = vld [vmem:[#allocation2 + $0x1] sm:$0x1]
        %v249 = vld [vmem:[#allocation2 + $0x2] sm:$0x1]
        %v250 = vld [vmem:[#allocation2 + $0x3] sm:$0x1]
        %v251 = vld [vmem:[%s216] sm:$0x1]
        %v252 = vld [vmem:[%s216 + $0x1] sm:$0x1]
        %v253 = vld [vmem:[%s216 + $0x2] sm:$0x1]
        %v254 = vld [vmem:[%s216 + $0x3] sm:$0x1]
        %v255 = vld [vmem:[%s230] sm:$0x1]
        %v256 = vld [vmem:[%s230 + $0x1] sm:$0x1]
        %v257 = vld [vmem:[%s230 + $0x2] sm:$0x1]
        %v258 = vld [vmem:[%s230 + $0x3] sm:$0x1]
        %v259 = vld [vmem:[%s244] sm:$0x1]
        %v260 = vld [vmem:[%s244 + $0x1] sm:$0x1]
        %v261 = vld [vmem:[%s244 + $0x2] sm:$0x1]
        %v262 = vld [vmem:[%s244 + $0x3] sm:$0x1]
        %264 = vrot.lane.b32.xlu0 %v248, 4
        %v265 = vpop.permute.xlu0 %264
        %268 = vrot.lane.b32.xlu0 %v249, 8
        %v269 = vpop.permute.xlu0 %268
        %272 = vrot.lane.b32.xlu0 %v250, 12
        %v273 = vpop.permute.xlu0 %272
        %276 = vrot.lane.b32.xlu0 %v251, 16
        %v277 = vpop.permute.xlu0 %276
        %280 = vrot.lane.b32.xlu0 %v252, 20
        %v281 = vpop.permute.xlu0 %280
        %284 = vrot.lane.b32.xlu0 %v253, 24
        %v285 = vpop.permute.xlu0 %284
        %288 = vrot.lane.b32.xlu0 %v254, 28
        %v289 = vpop.permute.xlu0 %288
        %292 = vrot.lane.b32.xlu0 %v255, 32
        %v293 = vpop.permute.xlu0 %292
        %296 = vrot.lane.b32.xlu0 %v256, 36
        %v297 = vpop.permute.xlu0 %296
        %300 = vrot.lane.b32.xlu0 %v257, 40
        %v301 = vpop.permute.xlu0 %300
        %304 = vrot.lane.b32.xlu0 %v258, 44
        %v305 = vpop.permute.xlu0 %304
        %308 = vrot.lane.b32.xlu0 %v259, 48
        %v309 = vpop.permute.xlu0 %308
        %312 = vrot.lane.b32.xlu0 %v260, 52
        %v313 = vpop.permute.xlu0 %312
        %316 = vrot.lane.b32.xlu0 %v261, 56
        %v317 = vpop.permute.xlu0 %316
        %320 = vrot.lane.b32.xlu0 %v262, 60
        %v321 = vpop.permute.xlu0 %320
        %vm323 = vcmask 31744
        %v324 = vsel %vm323, %v247, %v265
        %vm325 = vcmask 64512
        %v326 = vsel %vm325, %v324, %v269
        %vm327 = vcmask 97280
        %v328 = vsel %vm327, %v326, %v273
        %vm329 = vcmask 130048
        %v330 = vsel %vm329, %v328, %v277
        %vm331 = vcmask 162816
        %v332 = vsel %vm331, %v330, %v281
        %vm333 = vcmask 195584
        %v334 = vsel %vm333, %v332, %v285
        %vm335 = vcmask 228352
        %v336 = vsel %vm335, %v334, %v289
        %vm337 = vcmask 261120
        %v338 = vsel %vm337, %v336, %v293
        %vm339 = vcmask 293888
        %v340 = vsel %vm339, %v338, %v297
        %vm341 = vcmask 326656
        %v342 = vsel %vm341, %v340, %v301
        %vm343 = vcmask 359424
        %v344 = vsel %vm343, %v342, %v305
        %vm345 = vcmask 392192
        %v346 = vsel %vm345, %v344, %v309
        %vm347 = vcmask 424960
        %v348 = vsel %vm347, %v346, %v313
        %vm349 = vcmask 457728
        %v350 = vsel %vm349, %v348, %v317
        %vm351 = vcmask 490496
        %v352 = vsel %vm351, %v350, %v321
        %354 = vrot.lane.b32.xlu0 %v247, 124
        %v355 = vpop.permute.xlu0 %354
        %357 = vrot.lane.b32.xlu0 %v249, 4
        %v358 = vpop.permute.xlu0 %357
        %360 = vrot.lane.b32.xlu0 %v250, 8
        %v361 = vpop.permute.xlu0 %360
        %363 = vrot.lane.b32.xlu0 %v251, 12
        %v364 = vpop.permute.xlu0 %363
        %366 = vrot.lane.b32.xlu0 %v252, 16
        %v367 = vpop.permute.xlu0 %366
        %369 = vrot.lane.b32.xlu0 %v253, 20
        %v370 = vpop.permute.xlu0 %369
        %372 = vrot.lane.b32.xlu0 %v254, 24
        %v373 = vpop.permute.xlu0 %372
        %375 = vrot.lane.b32.xlu0 %v255, 28
        %v376 = vpop.permute.xlu0 %375
        %378 = vrot.lane.b32.xlu0 %v256, 32
        %v379 = vpop.permute.xlu0 %378
        %381 = vrot.lane.b32.xlu0 %v257, 36
        %v382 = vpop.permute.xlu0 %381
        %384 = vrot.lane.b32.xlu0 %v258, 40
        %v385 = vpop.permute.xlu0 %384
        %387 = vrot.lane.b32.xlu0 %v259, 44
        %v388 = vpop.permute.xlu0 %387
        %390 = vrot.lane.b32.xlu0 %v260, 48
        %v391 = vpop.permute.xlu0 %390
        %393 = vrot.lane.b32.xlu0 %v261, 52
        %v394 = vpop.permute.xlu0 %393
        %396 = vrot.lane.b32.xlu0 %v262, 56
        %v397 = vpop.permute.xlu0 %396
        %v399 = vsel %vm323, %v355, %v248
        %v400 = vsel %vm325, %v399, %v358
        %v401 = vsel %vm327, %v400, %v361
        %v402 = vsel %vm329, %v401, %v364
        %v403 = vsel %vm331, %v402, %v367
        %v404 = vsel %vm333, %v403, %v370
        %v405 = vsel %vm335, %v404, %v373
        %v406 = vsel %vm337, %v405, %v376
        %v407 = vsel %vm339, %v406, %v379
        %v408 = vsel %vm341, %v407, %v382
        %v409 = vsel %vm343, %v408, %v385
        %v410 = vsel %vm345, %v409, %v388
        %v411 = vsel %vm347, %v410, %v391
        %v412 = vsel %vm349, %v411, %v394
        %v413 = vsel %vm351, %v412, %v397
        %414 = vrot.lane.b32.xlu0 %v247, 120
        %v415 = vpop.permute.xlu0 %414
        %417 = vrot.lane.b32.xlu0 %v248, 124
        %v418 = vpop.permute.xlu0 %417
        %420 = vrot.lane.b32.xlu0 %v250, 4
        %v421 = vpop.permute.xlu0 %420
        %423 = vrot.lane.b32.xlu0 %v251, 8
        %v424 = vpop.permute.xlu0 %423
        %426 = vrot.lane.b32.xlu0 %v252, 12
        %v427 = vpop.permute.xlu0 %426
        %429 = vrot.lane.b32.xlu0 %v253, 16
        %v430 = vpop.permute.xlu0 %429
        %432 = vrot.lane.b32.xlu0 %v254, 20
        %v433 = vpop.permute.xlu0 %432
        %435 = vrot.lane.b32.xlu0 %v255, 24
        %v436 = vpop.permute.xlu0 %435
        %438 = vrot.lane.b32.xlu0 %v256, 28
        %v439 = vpop.permute.xlu0 %438
        %441 = vrot.lane.b32.xlu0 %v257, 32
        %v442 = vpop.permute.xlu0 %441
        %444 = vrot.lane.b32.xlu0 %v258, 36
        %v445 = vpop.permute.xlu0 %444
        %447 = vrot.lane.b32.xlu0 %v259, 40
        %v448 = vpop.permute.xlu0 %447
        %450 = vrot.lane.b32.xlu0 %v260, 44
        %v451 = vpop.permute.xlu0 %450
        %453 = vrot.lane.b32.xlu0 %v261, 48
        %v454 = vpop.permute.xlu0 %453
        %456 = vrot.lane.b32.xlu0 %v262, 52
        %v457 = vpop.permute.xlu0 %456
        %v459 = vsel %vm323, %v415, %v418
        %v460 = vsel %vm325, %v459, %v249
        %v461 = vsel %vm327, %v460, %v421
        %v462 = vsel %vm329, %v461, %v424
        %v463 = vsel %vm331, %v462, %v427
        %v464 = vsel %vm333, %v463, %v430
        %v465 = vsel %vm335, %v464, %v433
        %v466 = vsel %vm337, %v465, %v436
        %v467 = vsel %vm339, %v466, %v439
        %v468 = vsel %vm341, %v467, %v442
        %v469 = vsel %vm343, %v468, %v445
        %v470 = vsel %vm345, %v469, %v448
        %v471 = vsel %vm347, %v470, %v451
        %v472 = vsel %vm349, %v471, %v454
        %v473 = vsel %vm351, %v472, %v457
        %474 = vrot.lane.b32.xlu0 %v247, 116
        %v475 = vpop.permute.xlu0 %474
        %477 = vrot.lane.b32.xlu0 %v248, 120
        %v478 = vpop.permute.xlu0 %477
        %480 = vrot.lane.b32.xlu0 %v249, 124
        %v481 = vpop.permute.xlu0 %480
        %483 = vrot.lane.b32.xlu0 %v251, 4
        %v484 = vpop.permute.xlu0 %483
        %486 = vrot.lane.b32.xlu0 %v252, 8
        %v487 = vpop.permute.xlu0 %486
        %489 = vrot.lane.b32.xlu0 %v253, 12
        %v490 = vpop.permute.xlu0 %489
        %492 = vrot.lane.b32.xlu0 %v254, 16
        %v493 = vpop.permute.xlu0 %492
        %495 = vrot.lane.b32.xlu0 %v255, 20
        %v496 = vpop.permute.xlu0 %495
        %498 = vrot.lane.b32.xlu0 %v256, 24
        %v499 = vpop.permute.xlu0 %498
        %501 = vrot.lane.b32.xlu0 %v257, 28
        %v502 = vpop.permute.xlu0 %501
        %504 = vrot.lane.b32.xlu0 %v258, 32
        %v505 = vpop.permute.xlu0 %504
        %507 = vrot.lane.b32.xlu0 %v259, 36
        %v508 = vpop.permute.xlu0 %507
        %510 = vrot.lane.b32.xlu0 %v260, 40
        %v511 = vpop.permute.xlu0 %510
        %513 = vrot.lane.b32.xlu0 %v261, 44
        %v514 = vpop.permute.xlu0 %513
        %516 = vrot.lane.b32.xlu0 %v262, 48
        %v517 = vpop.permute.xlu0 %516
        %v519 = vsel %vm323, %v475, %v478
        %v520 = vsel %vm325, %v519, %v481
        %v521 = vsel %vm327, %v520, %v250
        %v522 = vsel %vm329, %v521, %v484
        %v523 = vsel %vm331, %v522, %v487
        %v524 = vsel %vm333, %v523, %v490
        %v525 = vsel %vm335, %v524, %v493
        %v526 = vsel %vm337, %v525, %v496
        %v527 = vsel %vm339, %v526, %v499
        %v528 = vsel %vm341, %v527, %v502
        %v529 = vsel %vm343, %v528, %v505
        %v530 = vsel %vm345, %v529, %v508
        %v531 = vsel %vm347, %v530, %v511
        %v532 = vsel %vm349, %v531, %v514
        %v533 = vsel %vm351, %v532, %v517
        %534 = vrot.lane.b32.xlu0 %v247, 112
        %v535 = vpop.permute.xlu0 %534
        %537 = vrot.lane.b32.xlu0 %v248, 116
        %v538 = vpop.permute.xlu0 %537
        %540 = vrot.lane.b32.xlu0 %v249, 120
        %v541 = vpop.permute.xlu0 %540
        %543 = vrot.lane.b32.xlu0 %v250, 124
        %v544 = vpop.permute.xlu0 %543
        %546 = vrot.lane.b32.xlu0 %v252, 4
        %v547 = vpop.permute.xlu0 %546
        %549 = vrot.lane.b32.xlu0 %v253, 8
        %v550 = vpop.permute.xlu0 %549
        %552 = vrot.lane.b32.xlu0 %v254, 12
        %v553 = vpop.permute.xlu0 %552
        %555 = vrot.lane.b32.xlu0 %v255, 16
        %v556 = vpop.permute.xlu0 %555
        %558 = vrot.lane.b32.xlu0 %v256, 20
        %v559 = vpop.permute.xlu0 %558
        %561 = vrot.lane.b32.xlu0 %v257, 24
        %v562 = vpop.permute.xlu0 %561
        %564 = vrot.lane.b32.xlu0 %v258, 28
        %v565 = vpop.permute.xlu0 %564
        %567 = vrot.lane.b32.xlu0 %v259, 32
        %v568 = vpop.permute.xlu0 %567
        %570 = vrot.lane.b32.xlu0 %v260, 36
        %v571 = vpop.permute.xlu0 %570
        %573 = vrot.lane.b32.xlu0 %v261, 40
        %v574 = vpop.permute.xlu0 %573
        %576 = vrot.lane.b32.xlu0 %v262, 44
        %v577 = vpop.permute.xlu0 %576
        %v579 = vsel %vm323, %v535, %v538
        %v580 = vsel %vm325, %v579, %v541
        %v581 = vsel %vm327, %v580, %v544
        %v582 = vsel %vm329, %v581, %v251
        %v583 = vsel %vm331, %v582, %v547
        %v584 = vsel %vm333, %v583, %v550
        %v585 = vsel %vm335, %v584, %v553
        %v586 = vsel %vm337, %v585, %v556
        %v587 = vsel %vm339, %v586, %v559
        %v588 = vsel %vm341, %v587, %v562
        %v589 = vsel %vm343, %v588, %v565
        %v590 = vsel %vm345, %v589, %v568
        %v591 = vsel %vm347, %v590, %v571
        %v592 = vsel %vm349, %v591, %v574
        %v593 = vsel %vm351, %v592, %v577
        %v595 = vrot.slane %v413, 7
        %v598 = vrot.slane %v473, 6
        %v601 = vrot.slane %v533, 5
        %v604 = vrot.slane %v593, 4
        %vm606 = vcmask 1040384
        %v607 = vsel %vm606, %v352, %v595
        %vm608 = vcmask 1041408
        %v609 = vsel %vm608, %v607, %v598
        %vm610 = vcmask 1042432
        %v611 = vsel %vm610, %v609, %v601
        %vm612 = vcmask 1043456
        %v613 = vsel %vm612, %v611, %v604
        %vm614 = vcmask 520192
        %615 = vst.msk [vmem:[%s164] sm:$0x1f] %vm614, %v613
        %v616 = vld [vmem:[#allocation2 + $0x4] sm:$0x1]
        %v617 = vld [vmem:[#allocation2 + $0x5] sm:$0x1]
        %v618 = vld [vmem:[#allocation2 + $0x6] sm:$0x1]
        %v619 = vld [vmem:[#allocation2 + $0x7] sm:$0x1]
        %v620 = vld [vmem:[%s216 + $0x4] sm:$0x1]
        %v621 = vld [vmem:[%s216 + $0x5] sm:$0x1]
        %v622 = vld [vmem:[%s216 + $0x6] sm:$0x1]
        %v623 = vld [vmem:[%s216 + $0x7] sm:$0x1]
        %v624 = vld [vmem:[%s230 + $0x4] sm:$0x1]
        %v625 = vld [vmem:[%s230 + $0x5] sm:$0x1]
        %v626 = vld [vmem:[%s230 + $0x6] sm:$0x1]
        %v627 = vld [vmem:[%s230 + $0x7] sm:$0x1]
        %v628 = vld [vmem:[%s244 + $0x4] sm:$0x1]
        %v629 = vld [vmem:[%s244 + $0x5] sm:$0x1]
        %v630 = vld [vmem:[%s244 + $0x6] sm:$0x1]
        %v631 = vld [vmem:[%s244 + $0x7] sm:$0x1]
        %633 = vrot.lane.b32.xlu0 %v617, 4
        %v634 = vpop.permute.xlu0 %633
        %637 = vrot.lane.b32.xlu0 %v618, 8
        %v638 = vpop.permute.xlu0 %637
        %641 = vrot.lane.b32.xlu0 %v619, 12
        %v642 = vpop.permute.xlu0 %641
        %645 = vrot.lane.b32.xlu0 %v620, 16
        %v646 = vpop.permute.xlu0 %645
        %649 = vrot.lane.b32.xlu0 %v621, 20
        %v650 = vpop.permute.xlu0 %649
        %653 = vrot.lane.b32.xlu0 %v622, 24
        %v654 = vpop.permute.xlu0 %653
        %657 = vrot.lane.b32.xlu0 %v623, 28
        %v658 = vpop.permute.xlu0 %657
        %661 = vrot.lane.b32.xlu0 %v624, 32
        %v662 = vpop.permute.xlu0 %661
        %665 = vrot.lane.b32.xlu0 %v625, 36
        %v666 = vpop.permute.xlu0 %665
        %669 = vrot.lane.b32.xlu0 %v626, 40
        %v670 = vpop.permute.xlu0 %669
        %673 = vrot.lane.b32.xlu0 %v627, 44
        %v674 = vpop.permute.xlu0 %673
        %677 = vrot.lane.b32.xlu0 %v628, 48
        %v678 = vpop.permute.xlu0 %677
        %681 = vrot.lane.b32.xlu0 %v629, 52
        %v682 = vpop.permute.xlu0 %681
        %685 = vrot.lane.b32.xlu0 %v630, 56
        %v686 = vpop.permute.xlu0 %685
        %689 = vrot.lane.b32.xlu0 %v631, 60
        %v690 = vpop.permute.xlu0 %689
        %v692 = vsel %vm323, %v616, %v634
        %v693 = vsel %vm325, %v692, %v638
        %v694 = vsel %vm327, %v693, %v642
        %v695 = vsel %vm329, %v694, %v646
        %v696 = vsel %vm331, %v695, %v650
        %v697 = vsel %vm333, %v696, %v654
        %v698 = vsel %vm335, %v697, %v658
        %v699 = vsel %vm337, %v698, %v662
        %v700 = vsel %vm339, %v699, %v666
        %v701 = vsel %vm341, %v700, %v670
        %v702 = vsel %vm343, %v701, %v674
        %v703 = vsel %vm345, %v702, %v678
        %v704 = vsel %vm347, %v703, %v682
        %v705 = vsel %vm349, %v704, %v686
        %v706 = vsel %vm351, %v705, %v690
        %708 = vrot.lane.b32.xlu0 %v616, 124
        %v709 = vpop.permute.xlu0 %708
        %711 = vrot.lane.b32.xlu0 %v618, 4
        %v712 = vpop.permute.xlu0 %711
        %714 = vrot.lane.b32.xlu0 %v619, 8
        %v715 = vpop.permute.xlu0 %714
        %717 = vrot.lane.b32.xlu0 %v620, 12
        %v718 = vpop.permute.xlu0 %717
        %720 = vrot.lane.b32.xlu0 %v621, 16
        %v721 = vpop.permute.xlu0 %720
        %723 = vrot.lane.b32.xlu0 %v622, 20
        %v724 = vpop.permute.xlu0 %723
        %726 = vrot.lane.b32.xlu0 %v623, 24
        %v727 = vpop.permute.xlu0 %726
        %729 = vrot.lane.b32.xlu0 %v624, 28
        %v730 = vpop.permute.xlu0 %729
        %732 = vrot.lane.b32.xlu0 %v625, 32
        %v733 = vpop.permute.xlu0 %732
        %735 = vrot.lane.b32.xlu0 %v626, 36
        %v736 = vpop.permute.xlu0 %735
        %738 = vrot.lane.b32.xlu0 %v627, 40
        %v739 = vpop.permute.xlu0 %738
        %741 = vrot.lane.b32.xlu0 %v628, 44
        %v742 = vpop.permute.xlu0 %741
        %744 = vrot.lane.b32.xlu0 %v629, 48
        %v745 = vpop.permute.xlu0 %744
        %747 = vrot.lane.b32.xlu0 %v630, 52
        %v748 = vpop.permute.xlu0 %747
        %750 = vrot.lane.b32.xlu0 %v631, 56
        %v751 = vpop.permute.xlu0 %750
        %v753 = vsel %vm323, %v709, %v617
        %v754 = vsel %vm325, %v753, %v712
        %v755 = vsel %vm327, %v754, %v715
        %v756 = vsel %vm329, %v755, %v718
        %v757 = vsel %vm331, %v756, %v721
        %v758 = vsel %vm333, %v757, %v724
        %v759 = vsel %vm335, %v758, %v727
        %v760 = vsel %vm337, %v759, %v730
        %v761 = vsel %vm339, %v760, %v733
        %v762 = vsel %vm341, %v761, %v736
        %v763 = vsel %vm343, %v762, %v739
        %v764 = vsel %vm345, %v763, %v742
        %v765 = vsel %vm347, %v764, %v745
        %v766 = vsel %vm349, %v765, %v748
        %v767 = vsel %vm351, %v766, %v751
        %768 = vrot.lane.b32.xlu0 %v616, 120
        %v769 = vpop.permute.xlu0 %768
        %771 = vrot.lane.b32.xlu0 %v617, 124
        %v772 = vpop.permute.xlu0 %771
        %774 = vrot.lane.b32.xlu0 %v619, 4
        %v775 = vpop.permute.xlu0 %774
        %777 = vrot.lane.b32.xlu0 %v620, 8
        %v778 = vpop.permute.xlu0 %777
        %780 = vrot.lane.b32.xlu0 %v621, 12
        %v781 = vpop.permute.xlu0 %780
        %783 = vrot.lane.b32.xlu0 %v622, 16
        %v784 = vpop.permute.xlu0 %783
        %786 = vrot.lane.b32.xlu0 %v623, 20
        %v787 = vpop.permute.xlu0 %786
        %789 = vrot.lane.b32.xlu0 %v624, 24
        %v790 = vpop.permute.xlu0 %789
        %792 = vrot.lane.b32.xlu0 %v625, 28
        %v793 = vpop.permute.xlu0 %792
        %795 = vrot.lane.b32.xlu0 %v626, 32
        %v796 = vpop.permute.xlu0 %795
        %798 = vrot.lane.b32.xlu0 %v627, 36
        %v799 = vpop.permute.xlu0 %798
        %801 = vrot.lane.b32.xlu0 %v628, 40
        %v802 = vpop.permute.xlu0 %801
        %804 = vrot.lane.b32.xlu0 %v629, 44
        %v805 = vpop.permute.xlu0 %804
        %807 = vrot.lane.b32.xlu0 %v630, 48
        %v808 = vpop.permute.xlu0 %807
        %810 = vrot.lane.b32.xlu0 %v631, 52
        %v811 = vpop.permute.xlu0 %810
        %v813 = vsel %vm323, %v769, %v772
        %v814 = vsel %vm325, %v813, %v618
        %v815 = vsel %vm327, %v814, %v775
        %v816 = vsel %vm329, %v815, %v778
        %v817 = vsel %vm331, %v816, %v781
        %v818 = vsel %vm333, %v817, %v784
        %v819 = vsel %vm335, %v818, %v787
        %v820 = vsel %vm337, %v819, %v790
        %v821 = vsel %vm339, %v820, %v793
        %v822 = vsel %vm341, %v821, %v796
        %v823 = vsel %vm343, %v822, %v799
        %v824 = vsel %vm345, %v823, %v802
        %v825 = vsel %vm347, %v824, %v805
        %v826 = vsel %vm349, %v825, %v808
        %v827 = vsel %vm351, %v826, %v811
        %828 = vrot.lane.b32.xlu0 %v616, 116
        %v829 = vpop.permute.xlu0 %828
        %831 = vrot.lane.b32.xlu0 %v617, 120
        %v832 = vpop.permute.xlu0 %831
        %834 = vrot.lane.b32.xlu0 %v618, 124
        %v835 = vpop.permute.xlu0 %834
        %837 = vrot.lane.b32.xlu0 %v620, 4
        %v838 = vpop.permute.xlu0 %837
        %840 = vrot.lane.b32.xlu0 %v621, 8
        %v841 = vpop.permute.xlu0 %840
        %843 = vrot.lane.b32.xlu0 %v622, 12
        %v844 = vpop.permute.xlu0 %843
        %846 = vrot.lane.b32.xlu0 %v623, 16
        %v847 = vpop.permute.xlu0 %846
        %849 = vrot.lane.b32.xlu0 %v624, 20
        %v850 = vpop.permute.xlu0 %849
        %852 = vrot.lane.b32.xlu0 %v625, 24
        %v853 = vpop.permute.xlu0 %852
        %855 = vrot.lane.b32.xlu0 %v626, 28
        %v856 = vpop.permute.xlu0 %855
        %858 = vrot.lane.b32.xlu0 %v627, 32
        %v859 = vpop.permute.xlu0 %858
        %861 = vrot.lane.b32.xlu0 %v628, 36
        %v862 = vpop.permute.xlu0 %861
        %864 = vrot.lane.b32.xlu0 %v629, 40
        %v865 = vpop.permute.xlu0 %864
        %867 = vrot.lane.b32.xlu0 %v630, 44
        %v868 = vpop.permute.xlu0 %867
        %870 = vrot.lane.b32.xlu0 %v631, 48
        %v871 = vpop.permute.xlu0 %870
        %v873 = vsel %vm323, %v829, %v832
        %v874 = vsel %vm325, %v873, %v835
        %v875 = vsel %vm327, %v874, %v619
        %v876 = vsel %vm329, %v875, %v838
        %v877 = vsel %vm331, %v876, %v841
        %v878 = vsel %vm333, %v877, %v844
        %v879 = vsel %vm335, %v878, %v847
        %v880 = vsel %vm337, %v879, %v850
        %v881 = vsel %vm339, %v880, %v853
        %v882 = vsel %vm341, %v881, %v856
        %v883 = vsel %vm343, %v882, %v859
        %v884 = vsel %vm345, %v883, %v862
        %v885 = vsel %vm347, %v884, %v865
        %v886 = vsel %vm349, %v885, %v868
        %v887 = vsel %vm351, %v886, %v871
        %888 = vrot.lane.b32.xlu0 %v616, 112
        %v889 = vpop.permute.xlu0 %888
        %891 = vrot.lane.b32.xlu0 %v617, 116
        %v892 = vpop.permute.xlu0 %891
        %894 = vrot.lane.b32.xlu0 %v618, 120
        %v895 = vpop.permute.xlu0 %894
        %897 = vrot.lane.b32.xlu0 %v619, 124
        %v898 = vpop.permute.xlu0 %897
        %900 = vrot.lane.b32.xlu0 %v621, 4
        %v901 = vpop.permute.xlu0 %900
        %903 = vrot.lane.b32.xlu0 %v622, 8
        %v904 = vpop.permute.xlu0 %903
        %906 = vrot.lane.b32.xlu0 %v623, 12
        %v907 = vpop.permute.xlu0 %906
        %909 = vrot.lane.b32.xlu0 %v624, 16
        %v910 = vpop.permute.xlu0 %909
        %912 = vrot.lane.b32.xlu0 %v625, 20
        %v913 = vpop.permute.xlu0 %912
        %915 = vrot.lane.b32.xlu0 %v626, 24
        %v916 = vpop.permute.xlu0 %915
        %918 = vrot.lane.b32.xlu0 %v627, 28
        %v919 = vpop.permute.xlu0 %918
        %921 = vrot.lane.b32.xlu0 %v628, 32
        %v922 = vpop.permute.xlu0 %921
        %924 = vrot.lane.b32.xlu0 %v629, 36
        %v925 = vpop.permute.xlu0 %924
        %927 = vrot.lane.b32.xlu0 %v630, 40
        %v928 = vpop.permute.xlu0 %927
        %930 = vrot.lane.b32.xlu0 %v631, 44
        %v931 = vpop.permute.xlu0 %930
        %v933 = vsel %vm323, %v889, %v892
        %v934 = vsel %vm325, %v933, %v895
        %v935 = vsel %vm327, %v934, %v898
        %v936 = vsel %vm329, %v935, %v620
        %v937 = vsel %vm331, %v936, %v901
        %v938 = vsel %vm333, %v937, %v904
        %v939 = vsel %vm335, %v938, %v907
        %v940 = vsel %vm337, %v939, %v910
        %v941 = vsel %vm339, %v940, %v913
        %v942 = vsel %vm341, %v941, %v916
        %v943 = vsel %vm343, %v942, %v919
        %v944 = vsel %vm345, %v943, %v922
        %v945 = vsel %vm347, %v944, %v925
        %v946 = vsel %vm349, %v945, %v928
        %v947 = vsel %vm351, %v946, %v931
        %v949 = vrot.slane %v767, 7
        %v952 = vrot.slane %v827, 6
        %v955 = vrot.slane %v887, 5
        %v958 = vrot.slane %v947, 4
        %v960 = vsel %vm606, %v706, %v949
        %v961 = vsel %vm608, %v960, %v952
        %v962 = vsel %vm610, %v961, %v955
        %v963 = vsel %vm612, %v962, %v958
        %964 = vst.msk [vmem:[%s164 + $0x5] sm:$0x1f] %vm614, %v963
        %v965 = vld [vmem:[#allocation2 + $0x8] sm:$0x1]
        %v966 = vld [vmem:[#allocation2 + $0x9] sm:$0x1]
        %v967 = vld [vmem:[#allocation2 + $0xa] sm:$0x1]
        %v968 = vld [vmem:[#allocation2 + $0xb] sm:$0x1]
        %v969 = vld [vmem:[%s216 + $0x8] sm:$0x1]
        %v970 = vld [vmem:[%s216 + $0x9] sm:$0x1]
        %v971 = vld [vmem:[%s216 + $0xa] sm:$0x1]
        %v972 = vld [vmem:[%s216 + $0xb] sm:$0x1]
        %v973 = vld [vmem:[%s230 + $0x8] sm:$0x1]
        %v974 = vld [vmem:[%s230 + $0x9] sm:$0x1]
        %v975 = vld [vmem:[%s230 + $0xa] sm:$0x1]
        %v976 = vld [vmem:[%s230 + $0xb] sm:$0x1]
        %v977 = vld [vmem:[%s244 + $0x8] sm:$0x1]
        %v978 = vld [vmem:[%s244 + $0x9] sm:$0x1]
        %v979 = vld [vmem:[%s244 + $0xa] sm:$0x1]
        %v980 = vld [vmem:[%s244 + $0xb] sm:$0x1]
        %982 = vrot.lane.b32.xlu0 %v966, 4
        %v983 = vpop.permute.xlu0 %982
        %986 = vrot.lane.b32.xlu0 %v967, 8
        %v987 = vpop.permute.xlu0 %986
        %990 = vrot.lane.b32.xlu0 %v968, 12
        %v991 = vpop.permute.xlu0 %990
        %994 = vrot.lane.b32.xlu0 %v969, 16
        %v995 = vpop.permute.xlu0 %994
        %998 = vrot.lane.b32.xlu0 %v970, 20
        %v999 = vpop.permute.xlu0 %998
        %1002 = vrot.lane.b32.xlu0 %v971, 24
        %v1003 = vpop.permute.xlu0 %1002
        %1006 = vrot.lane.b32.xlu0 %v972, 28
        %v1007 = vpop.permute.xlu0 %1006
        %1010 = vrot.lane.b32.xlu0 %v973, 32
        %v1011 = vpop.permute.xlu0 %1010
        %1014 = vrot.lane.b32.xlu0 %v974, 36
        %v1015 = vpop.permute.xlu0 %1014
        %1018 = vrot.lane.b32.xlu0 %v975, 40
        %v1019 = vpop.permute.xlu0 %1018
        %1022 = vrot.lane.b32.xlu0 %v976, 44
        %v1023 = vpop.permute.xlu0 %1022
        %1026 = vrot.lane.b32.xlu0 %v977, 48
        %v1027 = vpop.permute.xlu0 %1026
        %1030 = vrot.lane.b32.xlu0 %v978, 52
        %v1031 = vpop.permute.xlu0 %1030
        %1034 = vrot.lane.b32.xlu0 %v979, 56
        %v1035 = vpop.permute.xlu0 %1034
        %1038 = vrot.lane.b32.xlu0 %v980, 60
        %v1039 = vpop.permute.xlu0 %1038
        %v1041 = vsel %vm323, %v965, %v983
        %v1042 = vsel %vm325, %v1041, %v987
        %v1043 = vsel %vm327, %v1042, %v991
        %v1044 = vsel %vm329, %v1043, %v995
        %v1045 = vsel %vm331, %v1044, %v999
        %v1046 = vsel %vm333, %v1045, %v1003
        %v1047 = vsel %vm335, %v1046, %v1007
        %v1048 = vsel %vm337, %v1047, %v1011
        %v1049 = vsel %vm339, %v1048, %v1015
        %v1050 = vsel %vm341, %v1049, %v1019
        %v1051 = vsel %vm343, %v1050, %v1023
        %v1052 = vsel %vm345, %v1051, %v1027
        %v1053 = vsel %vm347, %v1052, %v1031
        %v1054 = vsel %vm349, %v1053, %v1035
        %v1055 = vsel %vm351, %v1054, %v1039
        %1057 = vrot.lane.b32.xlu0 %v965, 124
        %v1058 = vpop.permute.xlu0 %1057
        %1060 = vrot.lane.b32.xlu0 %v967, 4
        %v1061 = vpop.permute.xlu0 %1060
        %1063 = vrot.lane.b32.xlu0 %v968, 8
        %v1064 = vpop.permute.xlu0 %1063
        %1066 = vrot.lane.b32.xlu0 %v969, 12
        %v1067 = vpop.permute.xlu0 %1066
        %1069 = vrot.lane.b32.xlu0 %v970, 16
        %v1070 = vpop.permute.xlu0 %1069
        %1072 = vrot.lane.b32.xlu0 %v971, 20
        %v1073 = vpop.permute.xlu0 %1072
        %1075 = vrot.lane.b32.xlu0 %v972, 24
        %v1076 = vpop.permute.xlu0 %1075
        %1078 = vrot.lane.b32.xlu0 %v973, 28
        %v1079 = vpop.permute.xlu0 %1078
        %1081 = vrot.lane.b32.xlu0 %v974, 32
        %v1082 = vpop.permute.xlu0 %1081
        %1084 = vrot.lane.b32.xlu0 %v975, 36
        %v1085 = vpop.permute.xlu0 %1084
        %1087 = vrot.lane.b32.xlu0 %v976, 40
        %v1088 = vpop.permute.xlu0 %1087
        %1090 = vrot.lane.b32.xlu0 %v977, 44
        %v1091 = vpop.permute.xlu0 %1090
        %1093 = vrot.lane.b32.xlu0 %v978, 48
        %v1094 = vpop.permute.xlu0 %1093
        %1096 = vrot.lane.b32.xlu0 %v979, 52
        %v1097 = vpop.permute.xlu0 %1096
        %1099 = vrot.lane.b32.xlu0 %v980, 56
        %v1100 = vpop.permute.xlu0 %1099
        %v1102 = vsel %vm323, %v1058, %v966
        %v1103 = vsel %vm325, %v1102, %v1061
        %v1104 = vsel %vm327, %v1103, %v1064
        %v1105 = vsel %vm329, %v1104, %v1067
        %v1106 = vsel %vm331, %v1105, %v1070
        %v1107 = vsel %vm333, %v1106, %v1073
        %v1108 = vsel %vm335, %v1107, %v1076
        %v1109 = vsel %vm337, %v1108, %v1079
        %v1110 = vsel %vm339, %v1109, %v1082
        %v1111 = vsel %vm341, %v1110, %v1085
        %v1112 = vsel %vm343, %v1111, %v1088
        %v1113 = vsel %vm345, %v1112, %v1091
        %v1114 = vsel %vm347, %v1113, %v1094
        %v1115 = vsel %vm349, %v1114, %v1097
        %v1116 = vsel %vm351, %v1115, %v1100
        %1117 = vrot.lane.b32.xlu0 %v965, 120
        %v1118 = vpop.permute.xlu0 %1117
        %1120 = vrot.lane.b32.xlu0 %v966, 124
        %v1121 = vpop.permute.xlu0 %1120
        %1123 = vrot.lane.b32.xlu0 %v968, 4
        %v1124 = vpop.permute.xlu0 %1123
        %1126 = vrot.lane.b32.xlu0 %v969, 8
        %v1127 = vpop.permute.xlu0 %1126
        %1129 = vrot.lane.b32.xlu0 %v970, 12
        %v1130 = vpop.permute.xlu0 %1129
        %1132 = vrot.lane.b32.xlu0 %v971, 16
        %v1133 = vpop.permute.xlu0 %1132
        %1135 = vrot.lane.b32.xlu0 %v972, 20
        %v1136 = vpop.permute.xlu0 %1135
        %1138 = vrot.lane.b32.xlu0 %v973, 24
        %v1139 = vpop.permute.xlu0 %1138
        %1141 = vrot.lane.b32.xlu0 %v974, 28
        %v1142 = vpop.permute.xlu0 %1141
        %1144 = vrot.lane.b32.xlu0 %v975, 32
        %v1145 = vpop.permute.xlu0 %1144
        %1147 = vrot.lane.b32.xlu0 %v976, 36
        %v1148 = vpop.permute.xlu0 %1147
        %1150 = vrot.lane.b32.xlu0 %v977, 40
        %v1151 = vpop.permute.xlu0 %1150
        %1153 = vrot.lane.b32.xlu0 %v978, 44
        %v1154 = vpop.permute.xlu0 %1153
        %1156 = vrot.lane.b32.xlu0 %v979, 48
        %v1157 = vpop.permute.xlu0 %1156
        %1159 = vrot.lane.b32.xlu0 %v980, 52
        %v1160 = vpop.permute.xlu0 %1159
        %v1162 = vsel %vm323, %v1118, %v1121
        %v1163 = vsel %vm325, %v1162, %v967
        %v1164 = vsel %vm327, %v1163, %v1124
        %v1165 = vsel %vm329, %v1164, %v1127
        %v1166 = vsel %vm331, %v1165, %v1130
        %v1167 = vsel %vm333, %v1166, %v1133
        %v1168 = vsel %vm335, %v1167, %v1136
        %v1169 = vsel %vm337, %v1168, %v1139
        %v1170 = vsel %vm339, %v1169, %v1142
        %v1171 = vsel %vm341, %v1170, %v1145
        %v1172 = vsel %vm343, %v1171, %v1148
        %v1173 = vsel %vm345, %v1172, %v1151
        %v1174 = vsel %vm347, %v1173, %v1154
        %v1175 = vsel %vm349, %v1174, %v1157
        %v1176 = vsel %vm351, %v1175, %v1160
        %1177 = vrot.lane.b32.xlu0 %v965, 116
        %v1178 = vpop.permute.xlu0 %1177
        %1180 = vrot.lane.b32.xlu0 %v966, 120
        %v1181 = vpop.permute.xlu0 %1180
        %1183 = vrot.lane.b32.xlu0 %v967, 124
        %v1184 = vpop.permute.xlu0 %1183
        %1186 = vrot.lane.b32.xlu0 %v969, 4
        %v1187 = vpop.permute.xlu0 %1186
        %1189 = vrot.lane.b32.xlu0 %v970, 8
        %v1190 = vpop.permute.xlu0 %1189
        %1192 = vrot.lane.b32.xlu0 %v971, 12
        %v1193 = vpop.permute.xlu0 %1192
        %1195 = vrot.lane.b32.xlu0 %v972, 16
        %v1196 = vpop.permute.xlu0 %1195
        %1198 = vrot.lane.b32.xlu0 %v973, 20
        %v1199 = vpop.permute.xlu0 %1198
        %1201 = vrot.lane.b32.xlu0 %v974, 24
        %v1202 = vpop.permute.xlu0 %1201
        %1204 = vrot.lane.b32.xlu0 %v975, 28
        %v1205 = vpop.permute.xlu0 %1204
        %1207 = vrot.lane.b32.xlu0 %v976, 32
        %v1208 = vpop.permute.xlu0 %1207
        %1210 = vrot.lane.b32.xlu0 %v977, 36
        %v1211 = vpop.permute.xlu0 %1210
        %1213 = vrot.lane.b32.xlu0 %v978, 40
        %v1214 = vpop.permute.xlu0 %1213
        %1216 = vrot.lane.b32.xlu0 %v979, 44
        %v1217 = vpop.permute.xlu0 %1216
        %1219 = vrot.lane.b32.xlu0 %v980, 48
        %v1220 = vpop.permute.xlu0 %1219
        %v1222 = vsel %vm323, %v1178, %v1181
        %v1223 = vsel %vm325, %v1222, %v1184
        %v1224 = vsel %vm327, %v1223, %v968
        %v1225 = vsel %vm329, %v1224, %v1187
        %v1226 = vsel %vm331, %v1225, %v1190
        %v1227 = vsel %vm333, %v1226, %v1193
        %v1228 = vsel %vm335, %v1227, %v1196
        %v1229 = vsel %vm337, %v1228, %v1199
        %v1230 = vsel %vm339, %v1229, %v1202
        %v1231 = vsel %vm341, %v1230, %v1205
        %v1232 = vsel %vm343, %v1231, %v1208
        %v1233 = vsel %vm345, %v1232, %v1211
        %v1234 = vsel %vm347, %v1233, %v1214
        %v1235 = vsel %vm349, %v1234, %v1217
        %v1236 = vsel %vm351, %v1235, %v1220
        %1237 = vrot.lane.b32.xlu0 %v965, 112
        %v1238 = vpop.permute.xlu0 %1237
        %1240 = vrot.lane.b32.xlu0 %v966, 116
        %v1241 = vpop.permute.xlu0 %1240
        %1243 = vrot.lane.b32.xlu0 %v967, 120
        %v1244 = vpop.permute.xlu0 %1243
        %1246 = vrot.lane.b32.xlu0 %v968, 124
        %v1247 = vpop.permute.xlu0 %1246
        %1249 = vrot.lane.b32.xlu0 %v970, 4
        %v1250 = vpop.permute.xlu0 %1249
        %1252 = vrot.lane.b32.xlu0 %v971, 8
        %v1253 = vpop.permute.xlu0 %1252
        %1255 = vrot.lane.b32.xlu0 %v972, 12
        %v1256 = vpop.permute.xlu0 %1255
        %1258 = vrot.lane.b32.xlu0 %v973, 16
        %v1259 = vpop.permute.xlu0 %1258
        %1261 = vrot.lane.b32.xlu0 %v974, 20
        %v1262 = vpop.permute.xlu0 %1261
        %1264 = vrot.lane.b32.xlu0 %v975, 24
        %v1265 = vpop.permute.xlu0 %1264
        %1267 = vrot.lane.b32.xlu0 %v976, 28
        %v1268 = vpop.permute.xlu0 %1267
        %1270 = vrot.lane.b32.xlu0 %v977, 32
        %v1271 = vpop.permute.xlu0 %1270
        %1273 = vrot.lane.b32.xlu0 %v978, 36
        %v1274 = vpop.permute.xlu0 %1273
        %1276 = vrot.lane.b32.xlu0 %v979, 40
        %v1277 = vpop.permute.xlu0 %1276
        %1279 = vrot.lane.b32.xlu0 %v980, 44
        %v1280 = vpop.permute.xlu0 %1279
        %v1282 = vsel %vm323, %v1238, %v1241
        %v1283 = vsel %vm325, %v1282, %v1244
        %v1284 = vsel %vm327, %v1283, %v1247
        %v1285 = vsel %vm329, %v1284, %v969
        %v1286 = vsel %vm331, %v1285, %v1250
        %v1287 = vsel %vm333, %v1286, %v1253
        %v1288 = vsel %vm335, %v1287, %v1256
        %v1289 = vsel %vm337, %v1288, %v1259
        %v1290 = vsel %vm339, %v1289, %v1262
        %v1291 = vsel %vm341, %v1290, %v1265
        %v1292 = vsel %vm343, %v1291, %v1268
        %v1293 = vsel %vm345, %v1292, %v1271
        %v1294 = vsel %vm347, %v1293, %v1274
        %v1295 = vsel %vm349, %v1294, %v1277
        %v1296 = vsel %vm351, %v1295, %v1280
        %v1298 = vrot.slane %v1116, 7
        %v1301 = vrot.slane %v1176, 6
        %v1304 = vrot.slane %v1236, 5
        %v1307 = vrot.slane %v1296, 4
        %v1309 = vsel %vm606, %v1055, %v1298
        %v1310 = vsel %vm608, %v1309, %v1301
        %v1311 = vsel %vm610, %v1310, %v1304
        %v1312 = vsel %vm612, %v1311, %v1307
        %1313 = vst.msk [vmem:[%s164 + $0xa] sm:$0x1f] %vm614, %v1312
        %v1314 = vld [vmem:[#allocation2 + $0xc] sm:$0x1]
        %v1315 = vld [vmem:[#allocation2 + $0xd] sm:$0x1]
        %v1316 = vld [vmem:[#allocation2 + $0xe] sm:$0x1]
        %v1317 = vld [vmem:[#allocation2 + $0xf] sm:$0x1]
        %v1318 = vld [vmem:[%s216 + $0xc] sm:$0x1]
        %v1319 = vld [vmem:[%s216 + $0xd] sm:$0x1]
        %v1320 = vld [vmem:[%s216 + $0xe] sm:$0x1]
        %v1321 = vld [vmem:[%s216 + $0xf] sm:$0x1]
        %v1322 = vld [vmem:[%s230 + $0xc] sm:$0x1]
        %v1323 = vld [vmem:[%s230 + $0xd] sm:$0x1]
        %v1324 = vld [vmem:[%s230 + $0xe] sm:$0x1]
        %v1325 = vld [vmem:[%s230 + $0xf] sm:$0x1]
        %v1326 = vld [vmem:[%s244 + $0xc] sm:$0x1]
        %v1327 = vld [vmem:[%s244 + $0xd] sm:$0x1]
        %v1328 = vld [vmem:[%s244 + $0xe] sm:$0x1]
        %v1329 = vld [vmem:[%s244 + $0xf] sm:$0x1]
        %1331 = vrot.lane.b32.xlu0 %v1315, 4
        %v1332 = vpop.permute.xlu0 %1331
        %1335 = vrot.lane.b32.xlu0 %v1316, 8
        %v1336 = vpop.permute.xlu0 %1335
        %1339 = vrot.lane.b32.xlu0 %v1317, 12
        %v1340 = vpop.permute.xlu0 %1339
        %1343 = vrot.lane.b32.xlu0 %v1318, 16
        %v1344 = vpop.permute.xlu0 %1343
        %1347 = vrot.lane.b32.xlu0 %v1319, 20
        %v1348 = vpop.permute.xlu0 %1347
        %1351 = vrot.lane.b32.xlu0 %v1320, 24
        %v1352 = vpop.permute.xlu0 %1351
        %1355 = vrot.lane.b32.xlu0 %v1321, 28
        %v1356 = vpop.permute.xlu0 %1355
        %1359 = vrot.lane.b32.xlu0 %v1322, 32
        %v1360 = vpop.permute.xlu0 %1359
        %1363 = vrot.lane.b32.xlu0 %v1323, 36
        %v1364 = vpop.permute.xlu0 %1363
        %1367 = vrot.lane.b32.xlu0 %v1324, 40
        %v1368 = vpop.permute.xlu0 %1367
        %1371 = vrot.lane.b32.xlu0 %v1325, 44
        %v1372 = vpop.permute.xlu0 %1371
        %1375 = vrot.lane.b32.xlu0 %v1326, 48
        %v1376 = vpop.permute.xlu0 %1375
        %1379 = vrot.lane.b32.xlu0 %v1327, 52
        %v1380 = vpop.permute.xlu0 %1379
        %1383 = vrot.lane.b32.xlu0 %v1328, 56
        %v1384 = vpop.permute.xlu0 %1383
        %1387 = vrot.lane.b32.xlu0 %v1329, 60
        %v1388 = vpop.permute.xlu0 %1387
        %v1390 = vsel %vm323, %v1314, %v1332
        %v1391 = vsel %vm325, %v1390, %v1336
        %v1392 = vsel %vm327, %v1391, %v1340
        %v1393 = vsel %vm329, %v1392, %v1344
        %v1394 = vsel %vm331, %v1393, %v1348
        %v1395 = vsel %vm333, %v1394, %v1352
        %v1396 = vsel %vm335, %v1395, %v1356
        %v1397 = vsel %vm337, %v1396, %v1360
        %v1398 = vsel %vm339, %v1397, %v1364
        %v1399 = vsel %vm341, %v1398, %v1368
        %v1400 = vsel %vm343, %v1399, %v1372
        %v1401 = vsel %vm345, %v1400, %v1376
        %v1402 = vsel %vm347, %v1401, %v1380
        %v1403 = vsel %vm349, %v1402, %v1384
        %v1404 = vsel %vm351, %v1403, %v1388
        %1406 = vrot.lane.b32.xlu0 %v1314, 124
        %v1407 = vpop.permute.xlu0 %1406
        %1409 = vrot.lane.b32.xlu0 %v1316, 4
        %v1410 = vpop.permute.xlu0 %1409
        %1412 = vrot.lane.b32.xlu0 %v1317, 8
        %v1413 = vpop.permute.xlu0 %1412
        %1415 = vrot.lane.b32.xlu0 %v1318, 12
        %v1416 = vpop.permute.xlu0 %1415
        %1418 = vrot.lane.b32.xlu0 %v1319, 16
        %v1419 = vpop.permute.xlu0 %1418
        %1421 = vrot.lane.b32.xlu0 %v1320, 20
        %v1422 = vpop.permute.xlu0 %1421
        %1424 = vrot.lane.b32.xlu0 %v1321, 24
        %v1425 = vpop.permute.xlu0 %1424
        %1427 = vrot.lane.b32.xlu0 %v1322, 28
        %v1428 = vpop.permute.xlu0 %1427
        %1430 = vrot.lane.b32.xlu0 %v1323, 32
        %v1431 = vpop.permute.xlu0 %1430
        %1433 = vrot.lane.b32.xlu0 %v1324, 36
        %v1434 = vpop.permute.xlu0 %1433
        %1436 = vrot.lane.b32.xlu0 %v1325, 40
        %v1437 = vpop.permute.xlu0 %1436
        %1439 = vrot.lane.b32.xlu0 %v1326, 44
        %v1440 = vpop.permute.xlu0 %1439
        %1442 = vrot.lane.b32.xlu0 %v1327, 48
        %v1443 = vpop.permute.xlu0 %1442
        %1445 = vrot.lane.b32.xlu0 %v1328, 52
        %v1446 = vpop.permute.xlu0 %1445
        %1448 = vrot.lane.b32.xlu0 %v1329, 56
        %v1449 = vpop.permute.xlu0 %1448
        %v1451 = vsel %vm323, %v1407, %v1315
        %v1452 = vsel %vm325, %v1451, %v1410
        %v1453 = vsel %vm327, %v1452, %v1413
        %v1454 = vsel %vm329, %v1453, %v1416
        %v1455 = vsel %vm331, %v1454, %v1419
        %v1456 = vsel %vm333, %v1455, %v1422
        %v1457 = vsel %vm335, %v1456, %v1425
        %v1458 = vsel %vm337, %v1457, %v1428
        %v1459 = vsel %vm339, %v1458, %v1431
        %v1460 = vsel %vm341, %v1459, %v1434
        %v1461 = vsel %vm343, %v1460, %v1437
        %v1462 = vsel %vm345, %v1461, %v1440
        %v1463 = vsel %vm347, %v1462, %v1443
        %v1464 = vsel %vm349, %v1463, %v1446
        %v1465 = vsel %vm351, %v1464, %v1449
        %1466 = vrot.lane.b32.xlu0 %v1314, 120
        %v1467 = vpop.permute.xlu0 %1466
        %1469 = vrot.lane.b32.xlu0 %v1315, 124
        %v1470 = vpop.permute.xlu0 %1469
        %1472 = vrot.lane.b32.xlu0 %v1317, 4
        %v1473 = vpop.permute.xlu0 %1472
        %1475 = vrot.lane.b32.xlu0 %v1318, 8
        %v1476 = vpop.permute.xlu0 %1475
        %1478 = vrot.lane.b32.xlu0 %v1319, 12
        %v1479 = vpop.permute.xlu0 %1478
        %1481 = vrot.lane.b32.xlu0 %v1320, 16
        %v1482 = vpop.permute.xlu0 %1481
        %1484 = vrot.lane.b32.xlu0 %v1321, 20
        %v1485 = vpop.permute.xlu0 %1484
        %1487 = vrot.lane.b32.xlu0 %v1322, 24
        %v1488 = vpop.permute.xlu0 %1487
        %1490 = vrot.lane.b32.xlu0 %v1323, 28
        %v1491 = vpop.permute.xlu0 %1490
        %1493 = vrot.lane.b32.xlu0 %v1324, 32
        %v1494 = vpop.permute.xlu0 %1493
        %1496 = vrot.lane.b32.xlu0 %v1325, 36
        %v1497 = vpop.permute.xlu0 %1496
        %1499 = vrot.lane.b32.xlu0 %v1326, 40
        %v1500 = vpop.permute.xlu0 %1499
        %1502 = vrot.lane.b32.xlu0 %v1327, 44
        %v1503 = vpop.permute.xlu0 %1502
        %1505 = vrot.lane.b32.xlu0 %v1328, 48
        %v1506 = vpop.permute.xlu0 %1505
        %1508 = vrot.lane.b32.xlu0 %v1329, 52
        %v1509 = vpop.permute.xlu0 %1508
        %v1511 = vsel %vm323, %v1467, %v1470
        %v1512 = vsel %vm325, %v1511, %v1316
        %v1513 = vsel %vm327, %v1512, %v1473
        %v1514 = vsel %vm329, %v1513, %v1476
        %v1515 = vsel %vm331, %v1514, %v1479
        %v1516 = vsel %vm333, %v1515, %v1482
        %v1517 = vsel %vm335, %v1516, %v1485
        %v1518 = vsel %vm337, %v1517, %v1488
        %v1519 = vsel %vm339, %v1518, %v1491
        %v1520 = vsel %vm341, %v1519, %v1494
        %v1521 = vsel %vm343, %v1520, %v1497
        %v1522 = vsel %vm345, %v1521, %v1500
        %v1523 = vsel %vm347, %v1522, %v1503
        %v1524 = vsel %vm349, %v1523, %v1506
        %v1525 = vsel %vm351, %v1524, %v1509
        %1526 = vrot.lane.b32.xlu0 %v1314, 116
        %v1527 = vpop.permute.xlu0 %1526
        %1529 = vrot.lane.b32.xlu0 %v1315, 120
        %v1530 = vpop.permute.xlu0 %1529
        %1532 = vrot.lane.b32.xlu0 %v1316, 124
        %v1533 = vpop.permute.xlu0 %1532
        %1535 = vrot.lane.b32.xlu0 %v1318, 4
        %v1536 = vpop.permute.xlu0 %1535
        %1538 = vrot.lane.b32.xlu0 %v1319, 8
        %v1539 = vpop.permute.xlu0 %1538
        %1541 = vrot.lane.b32.xlu0 %v1320, 12
        %v1542 = vpop.permute.xlu0 %1541
        %1544 = vrot.lane.b32.xlu0 %v1321, 16
        %v1545 = vpop.permute.xlu0 %1544
        %1547 = vrot.lane.b32.xlu0 %v1322, 20
        %v1548 = vpop.permute.xlu0 %1547
        %1550 = vrot.lane.b32.xlu0 %v1323, 24
        %v1551 = vpop.permute.xlu0 %1550
        %1553 = vrot.lane.b32.xlu0 %v1324, 28
        %v1554 = vpop.permute.xlu0 %1553
        %1556 = vrot.lane.b32.xlu0 %v1325, 32
        %v1557 = vpop.permute.xlu0 %1556
        %1559 = vrot.lane.b32.xlu0 %v1326, 36
        %v1560 = vpop.permute.xlu0 %1559
        %1562 = vrot.lane.b32.xlu0 %v1327, 40
        %v1563 = vpop.permute.xlu0 %1562
        %1565 = vrot.lane.b32.xlu0 %v1328, 44
        %v1566 = vpop.permute.xlu0 %1565
        %1568 = vrot.lane.b32.xlu0 %v1329, 48
        %v1569 = vpop.permute.xlu0 %1568
        %v1571 = vsel %vm323, %v1527, %v1530
        %v1572 = vsel %vm325, %v1571, %v1533
        %v1573 = vsel %vm327, %v1572, %v1317
        %v1574 = vsel %vm329, %v1573, %v1536
        %v1575 = vsel %vm331, %v1574, %v1539
        %v1576 = vsel %vm333, %v1575, %v1542
        %v1577 = vsel %vm335, %v1576, %v1545
        %v1578 = vsel %vm337, %v1577, %v1548
        %v1579 = vsel %vm339, %v1578, %v1551
        %v1580 = vsel %vm341, %v1579, %v1554
        %v1581 = vsel %vm343, %v1580, %v1557
        %v1582 = vsel %vm345, %v1581, %v1560
        %v1583 = vsel %vm347, %v1582, %v1563
        %v1584 = vsel %vm349, %v1583, %v1566
        %v1585 = vsel %vm351, %v1584, %v1569
        %1586 = vrot.lane.b32.xlu0 %v1314, 112
        %v1587 = vpop.permute.xlu0 %1586
        %1589 = vrot.lane.b32.xlu0 %v1315, 116
        %v1590 = vpop.permute.xlu0 %1589
        %1592 = vrot.lane.b32.xlu0 %v1316, 120
        %v1593 = vpop.permute.xlu0 %1592
        %1595 = vrot.lane.b32.xlu0 %v1317, 124
        %v1596 = vpop.permute.xlu0 %1595
        %1598 = vrot.lane.b32.xlu0 %v1319, 4
        %v1599 = vpop.permute.xlu0 %1598
        %1601 = vrot.lane.b32.xlu0 %v1320, 8
        %v1602 = vpop.permute.xlu0 %1601
        %1604 = vrot.lane.b32.xlu0 %v1321, 12
        %v1605 = vpop.permute.xlu0 %1604
        %1607 = vrot.lane.b32.xlu0 %v1322, 16
        %v1608 = vpop.permute.xlu0 %1607
        %1610 = vrot.lane.b32.xlu0 %v1323, 20
        %v1611 = vpop.permute.xlu0 %1610
        %1613 = vrot.lane.b32.xlu0 %v1324, 24
        %v1614 = vpop.permute.xlu0 %1613
        %1616 = vrot.lane.b32.xlu0 %v1325, 28
        %v1617 = vpop.permute.xlu0 %1616
        %1619 = vrot.lane.b32.xlu0 %v1326, 32
        %v1620 = vpop.permute.xlu0 %1619
        %1622 = vrot.lane.b32.xlu0 %v1327, 36
        %v1623 = vpop.permute.xlu0 %1622
        %1625 = vrot.lane.b32.xlu0 %v1328, 40
        %v1626 = vpop.permute.xlu0 %1625
        %1628 = vrot.lane.b32.xlu0 %v1329, 44
        %v1629 = vpop.permute.xlu0 %1628
        %v1631 = vsel %vm323, %v1587, %v1590
        %v1632 = vsel %vm325, %v1631, %v1593
        %v1633 = vsel %vm327, %v1632, %v1596
        %v1634 = vsel %vm329, %v1633, %v1318
        %v1635 = vsel %vm331, %v1634, %v1599
        %v1636 = vsel %vm333, %v1635, %v1602
        %v1637 = vsel %vm335, %v1636, %v1605
        %v1638 = vsel %vm337, %v1637, %v1608
        %v1639 = vsel %vm339, %v1638, %v1611
        %v1640 = vsel %vm341, %v1639, %v1614
        %v1641 = vsel %vm343, %v1640, %v1617
        %v1642 = vsel %vm345, %v1641, %v1620
        %v1643 = vsel %vm347, %v1642, %v1623
        %v1644 = vsel %vm349, %v1643, %v1626
        %v1645 = vsel %vm351, %v1644, %v1629
        %v1647 = vrot.slane %v1465, 7
        %v1650 = vrot.slane %v1525, 6
        %v1653 = vrot.slane %v1585, 5
        %v1656 = vrot.slane %v1645, 4
        %v1658 = vsel %vm606, %v1404, %v1647
        %v1659 = vsel %vm608, %v1658, %v1650
        %v1660 = vsel %vm610, %v1659, %v1653
        %v1661 = vsel %vm612, %v1660, %v1656
        %1662 = vst.msk [vmem:[%s164 + $0xf] sm:$0x1f] %vm614, %v1661
        %v1663 = vld [vmem:[#allocation2 + $0x10] sm:$0x1]
        %v1664 = vld [vmem:[#allocation2 + $0x11] sm:$0x1]
        %v1665 = vld [vmem:[#allocation2 + $0x12] sm:$0x1]
        %v1666 = vld [vmem:[#allocation2 + $0x13] sm:$0x1]
        %v1667 = vld [vmem:[%s216 + $0x10] sm:$0x1]
        %v1668 = vld [vmem:[%s216 + $0x11] sm:$0x1]
        %v1669 = vld [vmem:[%s216 + $0x12] sm:$0x1]
        %v1670 = vld [vmem:[%s216 + $0x13] sm:$0x1]
        %v1671 = vld [vmem:[%s230 + $0x10] sm:$0x1]
        %v1672 = vld [vmem:[%s230 + $0x11] sm:$0x1]
        %v1673 = vld [vmem:[%s230 + $0x12] sm:$0x1]
        %v1674 = vld [vmem:[%s230 + $0x13] sm:$0x1]
        %v1675 = vld [vmem:[%s244 + $0x10] sm:$0x1]
        %v1676 = vld [vmem:[%s244 + $0x11] sm:$0x1]
        %v1677 = vld [vmem:[%s244 + $0x12] sm:$0x1]
        %v1678 = vld [vmem:[%s244 + $0x13] sm:$0x1]
        %1680 = vrot.lane.b32.xlu0 %v1664, 4
        %v1681 = vpop.permute.xlu0 %1680
        %1684 = vrot.lane.b32.xlu0 %v1665, 8
        %v1685 = vpop.permute.xlu0 %1684
        %1688 = vrot.lane.b32.xlu0 %v1666, 12
        %v1689 = vpop.permute.xlu0 %1688
        %1692 = vrot.lane.b32.xlu0 %v1667, 16
        %v1693 = vpop.permute.xlu0 %1692
        %1696 = vrot.lane.b32.xlu0 %v1668, 20
        %v1697 = vpop.permute.xlu0 %1696
        %1700 = vrot.lane.b32.xlu0 %v1669, 24
        %v1701 = vpop.permute.xlu0 %1700
        %1704 = vrot.lane.b32.xlu0 %v1670, 28
        %v1705 = vpop.permute.xlu0 %1704
        %1708 = vrot.lane.b32.xlu0 %v1671, 32
        %v1709 = vpop.permute.xlu0 %1708
        %1712 = vrot.lane.b32.xlu0 %v1672, 36
        %v1713 = vpop.permute.xlu0 %1712
        %1716 = vrot.lane.b32.xlu0 %v1673, 40
        %v1717 = vpop.permute.xlu0 %1716
        %1720 = vrot.lane.b32.xlu0 %v1674, 44
        %v1721 = vpop.permute.xlu0 %1720
        %1724 = vrot.lane.b32.xlu0 %v1675, 48
        %v1725 = vpop.permute.xlu0 %1724
        %1728 = vrot.lane.b32.xlu0 %v1676, 52
        %v1729 = vpop.permute.xlu0 %1728
        %1732 = vrot.lane.b32.xlu0 %v1677, 56
        %v1733 = vpop.permute.xlu0 %1732
        %1736 = vrot.lane.b32.xlu0 %v1678, 60
        %v1737 = vpop.permute.xlu0 %1736
        %v1739 = vsel %vm323, %v1663, %v1681
        %v1740 = vsel %vm325, %v1739, %v1685
        %v1741 = vsel %vm327, %v1740, %v1689
        %v1742 = vsel %vm329, %v1741, %v1693
        %v1743 = vsel %vm331, %v1742, %v1697
        %v1744 = vsel %vm333, %v1743, %v1701
        %v1745 = vsel %vm335, %v1744, %v1705
        %v1746 = vsel %vm337, %v1745, %v1709
        %v1747 = vsel %vm339, %v1746, %v1713
        %v1748 = vsel %vm341, %v1747, %v1717
        %v1749 = vsel %vm343, %v1748, %v1721
        %v1750 = vsel %vm345, %v1749, %v1725
        %v1751 = vsel %vm347, %v1750, %v1729
        %v1752 = vsel %vm349, %v1751, %v1733
        %v1753 = vsel %vm351, %v1752, %v1737
        %1755 = vrot.lane.b32.xlu0 %v1663, 124
        %v1756 = vpop.permute.xlu0 %1755
        %1758 = vrot.lane.b32.xlu0 %v1665, 4
        %v1759 = vpop.permute.xlu0 %1758
        %1761 = vrot.lane.b32.xlu0 %v1666, 8
        %v1762 = vpop.permute.xlu0 %1761
        %1764 = vrot.lane.b32.xlu0 %v1667, 12
        %v1765 = vpop.permute.xlu0 %1764
        %1767 = vrot.lane.b32.xlu0 %v1668, 16
        %v1768 = vpop.permute.xlu0 %1767
        %1770 = vrot.lane.b32.xlu0 %v1669, 20
        %v1771 = vpop.permute.xlu0 %1770
        %1773 = vrot.lane.b32.xlu0 %v1670, 24
        %v1774 = vpop.permute.xlu0 %1773
        %1776 = vrot.lane.b32.xlu0 %v1671, 28
        %v1777 = vpop.permute.xlu0 %1776
        %1779 = vrot.lane.b32.xlu0 %v1672, 32
        %v1780 = vpop.permute.xlu0 %1779
        %1782 = vrot.lane.b32.xlu0 %v1673, 36
        %v1783 = vpop.permute.xlu0 %1782
        %1785 = vrot.lane.b32.xlu0 %v1674, 40
        %v1786 = vpop.permute.xlu0 %1785
        %1788 = vrot.lane.b32.xlu0 %v1675, 44
        %v1789 = vpop.permute.xlu0 %1788
        %1791 = vrot.lane.b32.xlu0 %v1676, 48
        %v1792 = vpop.permute.xlu0 %1791
        %1794 = vrot.lane.b32.xlu0 %v1677, 52
        %v1795 = vpop.permute.xlu0 %1794
        %1797 = vrot.lane.b32.xlu0 %v1678, 56
        %v1798 = vpop.permute.xlu0 %1797
        %v1800 = vsel %vm323, %v1756, %v1664
        %v1801 = vsel %vm325, %v1800, %v1759
        %v1802 = vsel %vm327, %v1801, %v1762
        %v1803 = vsel %vm329, %v1802, %v1765
        %v1804 = vsel %vm331, %v1803, %v1768
        %v1805 = vsel %vm333, %v1804, %v1771
        %v1806 = vsel %vm335, %v1805, %v1774
        %v1807 = vsel %vm337, %v1806, %v1777
        %v1808 = vsel %vm339, %v1807, %v1780
        %v1809 = vsel %vm341, %v1808, %v1783
        %v1810 = vsel %vm343, %v1809, %v1786
        %v1811 = vsel %vm345, %v1810, %v1789
        %v1812 = vsel %vm347, %v1811, %v1792
        %v1813 = vsel %vm349, %v1812, %v1795
        %v1814 = vsel %vm351, %v1813, %v1798
        %1815 = vrot.lane.b32.xlu0 %v1663, 120
        %v1816 = vpop.permute.xlu0 %1815
        %1818 = vrot.lane.b32.xlu0 %v1664, 124
        %v1819 = vpop.permute.xlu0 %1818
        %1821 = vrot.lane.b32.xlu0 %v1666, 4
        %v1822 = vpop.permute.xlu0 %1821
        %1824 = vrot.lane.b32.xlu0 %v1667, 8
        %v1825 = vpop.permute.xlu0 %1824
        %1827 = vrot.lane.b32.xlu0 %v1668, 12
        %v1828 = vpop.permute.xlu0 %1827
        %1830 = vrot.lane.b32.xlu0 %v1669, 16
        %v1831 = vpop.permute.xlu0 %1830
        %1833 = vrot.lane.b32.xlu0 %v1670, 20
        %v1834 = vpop.permute.xlu0 %1833
        %1836 = vrot.lane.b32.xlu0 %v1671, 24
        %v1837 = vpop.permute.xlu0 %1836
        %1839 = vrot.lane.b32.xlu0 %v1672, 28
        %v1840 = vpop.permute.xlu0 %1839
        %1842 = vrot.lane.b32.xlu0 %v1673, 32
        %v1843 = vpop.permute.xlu0 %1842
        %1845 = vrot.lane.b32.xlu0 %v1674, 36
        %v1846 = vpop.permute.xlu0 %1845
        %1848 = vrot.lane.b32.xlu0 %v1675, 40
        %v1849 = vpop.permute.xlu0 %1848
        %1851 = vrot.lane.b32.xlu0 %v1676, 44
        %v1852 = vpop.permute.xlu0 %1851
        %1854 = vrot.lane.b32.xlu0 %v1677, 48
        %v1855 = vpop.permute.xlu0 %1854
        %1857 = vrot.lane.b32.xlu0 %v1678, 52
        %v1858 = vpop.permute.xlu0 %1857
        %v1860 = vsel %vm323, %v1816, %v1819
        %v1861 = vsel %vm325, %v1860, %v1665
        %v1862 = vsel %vm327, %v1861, %v1822
        %v1863 = vsel %vm329, %v1862, %v1825
        %v1864 = vsel %vm331, %v1863, %v1828
        %v1865 = vsel %vm333, %v1864, %v1831
        %v1866 = vsel %vm335, %v1865, %v1834
        %v1867 = vsel %vm337, %v1866, %v1837
        %v1868 = vsel %vm339, %v1867, %v1840
        %v1869 = vsel %vm341, %v1868, %v1843
        %v1870 = vsel %vm343, %v1869, %v1846
        %v1871 = vsel %vm345, %v1870, %v1849
        %v1872 = vsel %vm347, %v1871, %v1852
        %v1873 = vsel %vm349, %v1872, %v1855
        %v1874 = vsel %vm351, %v1873, %v1858
        %1875 = vrot.lane.b32.xlu0 %v1663, 116
        %v1876 = vpop.permute.xlu0 %1875
        %1878 = vrot.lane.b32.xlu0 %v1664, 120
        %v1879 = vpop.permute.xlu0 %1878
        %1881 = vrot.lane.b32.xlu0 %v1665, 124
        %v1882 = vpop.permute.xlu0 %1881
        %1884 = vrot.lane.b32.xlu0 %v1667, 4
        %v1885 = vpop.permute.xlu0 %1884
        %1887 = vrot.lane.b32.xlu0 %v1668, 8
        %v1888 = vpop.permute.xlu0 %1887
        %1890 = vrot.lane.b32.xlu0 %v1669, 12
        %v1891 = vpop.permute.xlu0 %1890
        %1893 = vrot.lane.b32.xlu0 %v1670, 16
        %v1894 = vpop.permute.xlu0 %1893
        %1896 = vrot.lane.b32.xlu0 %v1671, 20
        %v1897 = vpop.permute.xlu0 %1896
        %1899 = vrot.lane.b32.xlu0 %v1672, 24
        %v1900 = vpop.permute.xlu0 %1899
        %1902 = vrot.lane.b32.xlu0 %v1673, 28
        %v1903 = vpop.permute.xlu0 %1902
        %1905 = vrot.lane.b32.xlu0 %v1674, 32
        %v1906 = vpop.permute.xlu0 %1905
        %1908 = vrot.lane.b32.xlu0 %v1675, 36
        %v1909 = vpop.permute.xlu0 %1908
        %1911 = vrot.lane.b32.xlu0 %v1676, 40
        %v1912 = vpop.permute.xlu0 %1911
        %1914 = vrot.lane.b32.xlu0 %v1677, 44
        %v1915 = vpop.permute.xlu0 %1914
        %1917 = vrot.lane.b32.xlu0 %v1678, 48
        %v1918 = vpop.permute.xlu0 %1917
        %v1920 = vsel %vm323, %v1876, %v1879
        %v1921 = vsel %vm325, %v1920, %v1882
        %v1922 = vsel %vm327, %v1921, %v1666
        %v1923 = vsel %vm329, %v1922, %v1885
        %v1924 = vsel %vm331, %v1923, %v1888
        %v1925 = vsel %vm333, %v1924, %v1891
        %v1926 = vsel %vm335, %v1925, %v1894
        %v1927 = vsel %vm337, %v1926, %v1897
        %v1928 = vsel %vm339, %v1927, %v1900
        %v1929 = vsel %vm341, %v1928, %v1903
        %v1930 = vsel %vm343, %v1929, %v1906
        %v1931 = vsel %vm345, %v1930, %v1909
        %v1932 = vsel %vm347, %v1931, %v1912
        %v1933 = vsel %vm349, %v1932, %v1915
        %v1934 = vsel %vm351, %v1933, %v1918
        %1935 = vrot.lane.b32.xlu0 %v1663, 112
        %v1936 = vpop.permute.xlu0 %1935
        %1938 = vrot.lane.b32.xlu0 %v1664, 116
        %v1939 = vpop.permute.xlu0 %1938
        %1941 = vrot.lane.b32.xlu0 %v1665, 120
        %v1942 = vpop.permute.xlu0 %1941
        %1944 = vrot.lane.b32.xlu0 %v1666, 124
        %v1945 = vpop.permute.xlu0 %1944
        %1947 = vrot.lane.b32.xlu0 %v1668, 4
        %v1948 = vpop.permute.xlu0 %1947
        %1950 = vrot.lane.b32.xlu0 %v1669, 8
        %v1951 = vpop.permute.xlu0 %1950
        %1953 = vrot.lane.b32.xlu0 %v1670, 12
        %v1954 = vpop.permute.xlu0 %1953
        %1956 = vrot.lane.b32.xlu0 %v1671, 16
        %v1957 = vpop.permute.xlu0 %1956
        %1959 = vrot.lane.b32.xlu0 %v1672, 20
        %v1960 = vpop.permute.xlu0 %1959
        %1962 = vrot.lane.b32.xlu0 %v1673, 24
        %v1963 = vpop.permute.xlu0 %1962
        %1965 = vrot.lane.b32.xlu0 %v1674, 28
        %v1966 = vpop.permute.xlu0 %1965
        %1968 = vrot.lane.b32.xlu0 %v1675, 32
        %v1969 = vpop.permute.xlu0 %1968
        %1971 = vrot.lane.b32.xlu0 %v1676, 36
        %v1972 = vpop.permute.xlu0 %1971
        %1974 = vrot.lane.b32.xlu0 %v1677, 40
        %v1975 = vpop.permute.xlu0 %1974
        %1977 = vrot.lane.b32.xlu0 %v1678, 44
        %v1978 = vpop.permute.xlu0 %1977
        %v1980 = vsel %vm323, %v1936, %v1939
        %v1981 = vsel %vm325, %v1980, %v1942
        %v1982 = vsel %vm327, %v1981, %v1945
        %v1983 = vsel %vm329, %v1982, %v1667
        %v1984 = vsel %vm331, %v1983, %v1948
        %v1985 = vsel %vm333, %v1984, %v1951
        %v1986 = vsel %vm335, %v1985, %v1954
        %v1987 = vsel %vm337, %v1986, %v1957
        %v1988 = vsel %vm339, %v1987, %v1960
        %v1989 = vsel %vm341, %v1988, %v1963
        %v1990 = vsel %vm343, %v1989, %v1966
        %v1991 = vsel %vm345, %v1990, %v1969
        %v1992 = vsel %vm347, %v1991, %v1972
        %v1993 = vsel %vm349, %v1992, %v1975
        %v1994 = vsel %vm351, %v1993, %v1978
        %v1996 = vrot.slane %v1814, 7
        %v1999 = vrot.slane %v1874, 6
        %v2002 = vrot.slane %v1934, 5
        %v2005 = vrot.slane %v1994, 4
        %v2007 = vsel %vm606, %v1753, %v1996
        %v2008 = vsel %vm608, %v2007, %v1999
        %v2009 = vsel %vm610, %v2008, %v2002
        %v2010 = vsel %vm612, %v2009, %v2005
        %2011 = vst.msk [vmem:[%s164 + $0x14] sm:$0x1f] %vm614, %v2010
        %p2012 = scmp.lt.s32.totalorder %s19, 1
        %s2013 = scalar_select %p2012, %s19, 1
        %p2014 = scmp.lt.s32.totalorder %s20, 0
        %s2015 = scalar_select %p2014, %s20, 0
        %s2016 = smul.addr %s2013, 4
        %s2017 = sadd.s32 %s2015, %s2016
        %s2018 = smul.addr %s2017, 8
        %s2019 = scalar_lea.vmem %s1, %s2018
        // Predicated region
        $region29: #{tpu_custom_call.1} parent=23 // pred_check
          %p2020 = pneg %p75
        $region30: #{tpu_custom_call.1} parent=23 // pred_check_branch
          %2022 = sbr.rel (%p2020) target = $region32
        $region31: #{tpu_custom_call.1} parent=23 // pred_region
          _
        $region32: #{tpu_custom_call.1} parent=23 // pred_fallthru
          _
      $region24: #{tpu_custom_call.1} parent=5 // pred_fallthru
        _
      %p2023 = scmp.le.s32.totalorder 2, %s10
      // Predicated region
      $region33: #{tpu_custom_call.1} parent=5 // pred_check
        %p2024 = pneg %p2023
      $region34: #{tpu_custom_call.1} parent=5 // pred_check_branch
        %2026 = sbr.rel (%p2024) target = $region36
      $region35: #{tpu_custom_call.1} parent=5 // pred_region
        %s2027 = ssub.s32 %s10, 2
        // Predicated region
        $region37: #{tpu_custom_call.1} parent=35 // pred_check
          %p2028 = pneg %p81
        $region38: #{tpu_custom_call.1} parent=35 // pred_check_branch
          %2030 = sbr.rel (%p2028) target = $region40
        $region39: #{tpu_custom_call.1} parent=35 // pred_region
          %p2031 = scmp.lt.s32.totalorder %s21, 1
          %s2032 = scalar_select %p2031, %s21, 1
          %p2033 = scmp.lt.s32.totalorder %s22, 0
          %s2034 = scalar_select %p2033, %s22, 0
          %s2035 = smul.addr %s2032, 4
          %s2036 = sadd.s32 %s2034, %s2035
          %s2037 = smul.addr %s2036, 8
          %s2038 = scalar_lea.vmem %s1, %s2037
        $region40: #{tpu_custom_call.1} parent=35 // pred_fallthru
          _
      $region36: #{tpu_custom_call.1} parent=5 // pred_fallthru
        _
    $region6: #{tpu_custom_call.1} parent=1 // loop_footer
      %s14 = sadd.s32 1, %s10
    $region7: #{tpu_custom_call.1} parent=1 // loop_footer_branch
      %9 = sbr.rel target = $region3
    $region8: #{tpu_custom_call.1} parent=1 // loop_exit
      _
    %2039 = vsyncpa [#allocation4], 1
    %s2040 = scalar_lea.sflag [#allocation4], 1
    %2041 = vsyncpa %s2040, 1

</llo_original>
